<compile_context>
chip_gen: v6e
topology: v6e:2x2x1
jax: 0.10.0
libtpu: 0.0.40
codegen_flags: <defaults>
</compile_context>

<pallas_src>
import functools

import numpy as np
import jax
import jax.numpy as jnp
from jax.experimental import pallas as pl
from jax.experimental.pallas import tpu as pltpu

POOL_SIZES = (1, 3, 5, 7)
N_BINS = sum(s * s for s in POOL_SIZES)          # 84
N_BINS_PAD = 96                                  # sublane-friendly padding
ATT_HIDDEN = 8
_BN_EPS = 1e-5


# --------------------------------------------------------------------------
# host-side constant operators (pure index structure, all tiny)
# --------------------------------------------------------------------------
def _bilinear_matrix(out_size, in_size):
    """1-D bilinear interpolation matrix, align_corners=True (PyTorch Upsample)."""
    m = np.zeros((out_size, in_size), np.float32)
    if in_size == 1 or out_size == 1:
        m[:, 0] = 1.0
        return m
    scale = (in_size - 1) / (out_size - 1)
    for i in range(out_size):
        src = i * scale
        i0 = min(int(np.floor(src)), in_size - 1)
        i1 = min(i0 + 1, in_size - 1)
        f = src - i0
        m[i, i0] += 1.0 - f
        m[i, i1] += f
    return m


def _bilinear_taps(out_size, in_size):
    """Sparse taps of the 1-D bilinear matrix: per output row ((in_row, weight), ...)."""
    m = _bilinear_matrix(out_size, in_size)
    taps = []
    for i in range(out_size):
        taps.append(tuple((int(j), float(m[i, j]))
                          for j in range(in_size) if m[i, j] != 0.0))
    return tuple(taps)


def _pool_matrix_t(H, W, sizes):
    """(H*W, N_BINS_PAD): column b = adaptive-avg-pool bin b (PyTorch binning)."""
    rows = []
    for k in sizes:
        for i in range(k):
            hs, he = (i * H) // k, -((-((i + 1) * H)) // k)
            for j in range(k):
                ws, we = (j * W) // k, -((-((j + 1) * W)) // k)
                r = np.zeros((H * W,), np.float32)
                inv = 1.0 / ((he - hs) * (we - ws))
                for h in range(hs, he):
                    r[h * W + ws:h * W + we] = inv
                rows.append(r)
    pm = np.stack(rows).astype(np.float32)                            # (84, H*W)
    pm = np.concatenate(
        [pm, np.zeros((N_BINS_PAD - pm.shape[0], H * W), np.float32)], axis=0)
    return pm.T                                                       # (H*W, 96)


# --------------------------------------------------------------------------
# the fused Pallas kernel
# --------------------------------------------------------------------------
def _pool_catt_up_kernel(x1w_ref, x2_ref, upw_ref, poolt_ref, coord_ref,
                         aw1_ref, attv_ref, w1_ref, w2_ref, pc1_ref, pc2_ref,
                         out_ref, y_ref,
                         *, n_batch, img_h, img_w, h1_size, c_in, h_taps):
    f32 = jnp.float32
    bf16 = jnp.bfloat16
    p_img = img_h * img_w
    q = n_batch * p_img                       # flattened lane axis (N*H2*W2)
    inv_q = 1.0 / q

    def mm(a, b):
        return jnp.dot(a, b, preferred_element_type=f32)

    # ---- 1. bilinear 2x upsample (align_corners=True), separable ----------
    # W-pass: one row-stacked matmul over all (n, h1, c) rows.
    a_all = mm(x1w_ref[...], upw_ref[...])                     # (N*H1*C, W2)
    # H-pass: 1-2 sparse taps per output row (weights baked at trace time),
    # written straight into the (C, Q) lane-flat scratch -> no dense H
    # operator, no kron, no concatenate.
    for n in range(n_batch):
        base = n * h1_size * c_in
        lane0 = n * p_img
        for h2, taps in enumerate(h_taps):
            h1a, wa = taps[0]
            val = wa * a_all[base + h1a * c_in:base + (h1a + 1) * c_in, :]
            for h1b, wb in taps[1:]:
                val = val + wb * a_all[base + h1b * c_in:base + (h1b + 1) * c_in, :]
            y_ref[:, lane0 + h2 * img_w:lane0 + (h2 + 1) * img_w] = val

    # ---- 2. PoolCALayer gate + skip add (per image, in place) -------------
    poolt = poolt_ref[...]                    # (P2, 96)
    aw1 = aw1_ref[...]                        # (96, HID)
    ab1 = attv_ref[0:1, :]                    # (1, HID)
    aw2 = attv_ref[1:2, :]                    # (1, HID)
    ab2 = attv_ref[2:3, 0:1]                  # (1, 1)
    for n in range(n_batch):
        lo, hi = n * p_img, (n + 1) * p_img
        x1u = y_ref[:, lo:hi]                                   # (C, P2)
        desc = mm(x1u, poolt)                                   # (C, 96)
        hmid = jnp.maximum(mm(desc, aw1) + ab1, 0.0)            # (C, HID)
        logit = jnp.sum(hmid * aw2, axis=1, keepdims=True) + ab2
        gate = jax.nn.sigmoid(logit)                            # (C, 1)
        y_ref[:, lo:hi] = x1u + gate * x2_ref[:, lo:hi]

    # ---- 3. tap validity masks from in-VMEM coordinate rows (VPU only) ----
    hh = coord_ref[0:1, :]                    # (1, Q) int32, h within image
    ww = coord_ref[1:2, :]                    # (1, Q) int32, w within image
    masks = []
    for t in range(9):
        dy, dx = t // 3 - 1, t % 3 - 1
        conds = []
        if dy < 0:
            conds.append(hh >= -dy)
        if dy > 0:
            conds.append(hh < img_h - dy)
        if dx < 0:
            conds.append(ww >= -dx)
        if dx > 0:
            conds.append(ww < img_w - dx)
        if not conds:
            masks.append(None)                # center tap, no mask needed
        else:
            m = conds[0]
            for cc in conds[1:]:
                m = m & cc
            masks.append(m.astype(f32))

    # ---- BatchNorm (training-mode batch stats, two-pass variance) ---------
    def batchnorm(v, g, b):
        mean = jnp.sum(v, axis=1, keepdims=True) * inv_q        # XLU lane reduce
        cen = v - mean
        var = jnp.sum(cen * cen, axis=1, keepdims=True) * inv_q
        return cen * jax.lax.rsqrt(var + _BN_EPS) * g + b

    # ---- 3x3 conv (pad=1): 9 accumulating MXU matmuls, no im2col scratch --
    def conv3x3(v, w_flat, bias):
        cin = v.shape[0]
        acc = None
        for t in range(9):
            dy, dx = t // 3 - 1, t % 3 - 1
            d = dy * img_w + dx
            if d == 0:
                tap = v
            else:
                # shifted[p] = v[p + d]; boundary/image wraps are zeroed by mask
                tap = pltpu.roll(v, shift=(-d) % q, axis=1) * masks[t]
            part = mm(w_flat[:, t * cin:(t + 1) * cin], tap.astype(bf16))
            acc = part if acc is None else acc + part
        return acc + bias

    w1 = w1_ref[...]                          # (Cmid, 9*C)  bf16
    w2 = w2_ref[...]                          # (Cout, 9*Cmid) bf16
    g0, b0 = pc1_ref[:, 0:1], pc1_ref[:, 1:2]
    cb1, g1, b1 = pc1_ref[:, 2:3], pc1_ref[:, 3:4], pc1_ref[:, 4:5]
    cb2, g2, b2 = pc2_ref[:, 0:1], pc2_ref[:, 1:2], pc2_ref[:, 2:3]

    # ---- add_norm: ReLU -> BatchNorm;  DoubleConv: (conv -> BN -> ReLU) x 2
    y = y_ref[...]                                              # (C, Q)
    o1 = batchnorm(jnp.maximum(y, 0.0), g0, b0)
    c1 = jnp.maximum(batchnorm(conv3x3(o1, w1, cb1), g1, b1), 0.0)
    c2 = jnp.maximum(batchnorm(conv3x3(c1, w2, cb2), g2, b2), 0.0)
    out_ref[...] = c2                                           # lane-dense store


# --------------------------------------------------------------------------
# wrapper
# --------------------------------------------------------------------------
def pool_catt_up(x1_nchw, x2_nchw, params):
    N, C, H1, W1 = x1_nchw.shape
    N2, C2, H2, W2 = x2_nchw.shape
    assert N2 == N and C2 == C and H2 == 2 * H1 and W2 == 2 * W1
    P2, Q = H2 * W2, N * H2 * W2
    assert Q % 128 == 0, "flattened N*H2*W2 must be lane aligned"
    cmid = params["conv1_w"].shape[0]
    cout = params["conv2_w"].shape[0]
    assert cmid == C and params["conv1_w"].shape[1] == C
    assert params["conv2_w"].shape[1] == cmid

    # x1 rows ordered (n, h1, c) so the sparse H-pass slices contiguous channel
    # blocks; x2 / output are channel-major lane-flat (C, N*H2*W2).
    x1w = jnp.transpose(x1_nchw, (0, 2, 1, 3)).reshape(N * H1 * C, W1)
    x2f = jnp.transpose(x2_nchw, (1, 0, 2, 3)).reshape(C, Q)

    upw_t = jnp.asarray(_bilinear_matrix(W2, W1).T)            # (W1, W2)
    h_taps = _bilinear_taps(H2, H1)                            # static sparse op
    pool_t = jnp.asarray(_pool_matrix_t(H2, W2, POOL_SIZES))   # (P2, 96)

    hrow = np.repeat(np.arange(H2, dtype=np.int32), W2)
    wrow = np.tile(np.arange(W2, dtype=np.int32), H2)
    coords = jnp.asarray(np.stack([np.tile(hrow, N), np.tile(wrow, N)]))  # (2, Q)

    def flat_w(w):  # (co, ci, 3, 3) -> (co, 9*ci) bf16, col = (ky*3+kx)*ci + c
        co, ci = w.shape[0], w.shape[1]
        return jnp.transpose(w, (0, 2, 3, 1)).reshape(co, 9 * ci).astype(jnp.bfloat16)

    att_misc = jnp.zeros((3, ATT_HIDDEN), jnp.float32)
    att_misc = att_misc.at[0, :].set(params["att_b1"])
    att_misc = att_misc.at[1, :].set(params["att_w2"].reshape(-1))
    att_misc = att_misc.at[2, 0].set(params["att_b2"].reshape(()))

    pc1 = jnp.stack([params["bn0_g"], params["bn0_b"], params["conv1_b"],
                     params["bn1_g"], params["bn1_b"]], axis=1)           # (C, 5)
    pc2 = jnp.stack([params["conv2_b"], params["bn2_g"], params["bn2_b"]],
                    axis=1)                                               # (Cout, 3)

    args = (x1w, x2f, upw_t, pool_t, coords,
            jnp.transpose(params["att_w1"]),                  # (96, HID)
            att_misc,
            flat_w(params["conv1_w"]), flat_w(params["conv2_w"]),
            pc1, pc2)

    flops = int(
        2 * N * H1 * C * W1 * W2                      # separable W-pass matmul
        + 4 * C * Q                                   # separable H-pass interp
        + 2 * N * C * P2 * N_BINS_PAD                 # adaptive-pool descriptors
        + 2 * N * C * N_BINS_PAD * ATT_HIDDEN         # attention MLP
        + 2 * 9 * C * cmid * Q + 2 * 9 * cmid * cout * Q   # 3x3 convs
        + 40 * C * Q + 15 * cout * Q)                 # BN / ReLU / gating
    transcend = int(N * C + 2 * C + cout)
    bytes_accessed = int(sum(int(np.prod(a.shape)) * a.dtype.itemsize for a in args)
                         + cout * Q * 4)

    kernel = functools.partial(
        _pool_catt_up_kernel, n_batch=N, img_h=H2, img_w=W2,
        h1_size=H1, c_in=C, h_taps=h_taps)
    vspec = pl.BlockSpec(memory_space=pltpu.MemorySpace.VMEM)
    out_cq = pl.pallas_call(
        kernel,
        out_shape=jax.ShapeDtypeStruct((cout, Q), jnp.float32),
        in_specs=[vspec] * len(args),
        out_specs=vspec,
        scratch_shapes=[pltpu.VMEM((C, Q), jnp.float32)],     # fused y buffer
        cost_estimate=pl.CostEstimate(flops=flops, transcendentals=transcend,
                                      bytes_accessed=bytes_accessed),
    )(*args)

    # (Cout, N*H2*W2) -> NCHW
    return jnp.transpose(out_cq.reshape(cout, N, H2, W2), (1, 0, 2, 3))


def init_params(key, in_channels, out_channels):
    c = in_channels // 2
    ks = jax.random.split(key, 14)

    def nrm(k, shape, s=0.1):
        return s * jax.random.normal(k, shape, jnp.float32)

    return dict(
        att_w1=nrm(ks[0], (ATT_HIDDEN, N_BINS_PAD), 0.2),
        att_b1=nrm(ks[1], (ATT_HIDDEN,)),
        att_w2=nrm(ks[2], (1, ATT_HIDDEN), 0.2),
        att_b2=nrm(ks[3], (1,)),
        bn0_g=1.0 + nrm(ks[4], (c,)),
        bn0_b=nrm(ks[5], (c,)),
        conv1_w=nrm(ks[6], (c, c, 3, 3), 0.2),       # PyTorch (Cout, Cin, kh, kw)
        conv1_b=nrm(ks[7], (c,)),
        bn1_g=1.0 + nrm(ks[8], (c,)),
        bn1_b=nrm(ks[9], (c,)),
        conv2_w=nrm(ks[10], (out_channels, c, 3, 3), 0.2),
        conv2_b=nrm(ks[11], (out_channels,)),
        bn2_g=1.0 + nrm(ks[12], (out_channels,)),
        bn2_b=nrm(ks[13], (out_channels,)),
    )


if __name__ == "__main__":
    key = jax.random.PRNGKey(0)
    k1, k2, kp = jax.random.split(key, 3)

    in_channels, out_channels = 8, 6
    N, H1, W1 = 2, 8, 8
    c = in_channels // 2                   # channels of x1 / x2 in bilinear branch

    # x1: decoder features before upsampling (NCHW); x2: skip features at 2x res.
    x1 = jax.random.normal(k1, (N, c, H1, W1), jnp.float32)
    x2 = jax.random.normal(k2, (N, c, 2 * H1, 2 * W1), jnp.float32)

    params = init_params(kp, in_channels, out_channels)

    out = jax.block_until_ready(pool_catt_up(x1, x2, params))

    assert out.shape == (N, out_channels, 2 * H1, 2 * W1), out.shape
    assert bool(jnp.all(jnp.isfinite(out)))
    print("KERNEL_OK")
</pallas_src>

<mosaic_0001>
module attributes {stable_mosaic.version = 11 : i64} {
  func.func @_pool_catt_up_kernel(%arg0: memref<64x8xf32, #tpu.memory_space<vmem>>, %arg1: memref<4x512xf32, #tpu.memory_space<vmem>>, %arg2: memref<8x16xf32, #tpu.memory_space<vmem>>, %arg3: memref<256x96xf32, #tpu.memory_space<vmem>>, %arg4: memref<2x512xi32, #tpu.memory_space<vmem>>, %arg5: memref<96x8xf32, #tpu.memory_space<vmem>>, %arg6: memref<3x8xf32, #tpu.memory_space<vmem>>, %arg7: memref<4x36xbf16, #tpu.memory_space<vmem>>, %arg8: memref<6x36xbf16, #tpu.memory_space<vmem>>, %arg9: memref<4x5xf32, #tpu.memory_space<vmem>>, %arg10: memref<6x3xf32, #tpu.memory_space<vmem>>, %arg11: memref<6x512xf32, #tpu.memory_space<vmem>>, %arg12: memref<4x512xf32, #tpu.memory_space<vmem>>) attributes {dimension_semantics = [], scalar_prefetch = 0 : i64, scratch_operands = 1 : i64, tpu.core_type = #tpu.core_type<tc>} {
    %c0 = arith.constant 0 : index
    %c0_0 = arith.constant 0 : index
    %0 = vector.load %arg0[%c0, %c0_0] : memref<64x8xf32, #tpu.memory_space<vmem>>, vector<64x8xf32>
    %c0_1 = arith.constant 0 : index
    %c0_2 = arith.constant 0 : index
    %1 = vector.load %arg2[%c0_1, %c0_2] : memref<8x16xf32, #tpu.memory_space<vmem>>, vector<8x16xf32>
    %cst = arith.constant dense<0.000000e+00> : vector<64x16xf32>
    %2 = tpu.matmul %0, %1, %cst {dimension_numbers = #tpu.dot_dimension_numbers<[1], [0], [0], [1], [0, 0, 1, 1], [], []>} : vector<64x8xf32>, vector<8x16xf32>, vector<64x16xf32> -> vector<64x16xf32>
    %3 = vector.extract_strided_slice %2 {offsets = [0, 0], sizes = [4, 16], strides = [1, 1]} : vector<64x16xf32> to vector<4x16xf32>
    %cst_3 = arith.constant 1.000000e+00 : f32
    %4 = vector.broadcast %cst_3 : f32 to vector<4x16xf32>
    %5 = arith.mulf %4, %3 : vector<4x16xf32>
    %c0_4 = arith.constant 0 : index
    %c0_5 = arith.constant 0 : index
    %6 = vector.load %arg12[%c0_4, %c0_5] : memref<4x512xf32, #tpu.memory_space<vmem>>, vector<4x16xf32>
    tpu.vector_store %arg12[%c0_4, %c0_5], %5 {strides = array<i32>} : memref<4x512xf32, #tpu.memory_space<vmem>>, vector<4x16xf32>,
    %7 = vector.extract_strided_slice %2 {offsets = [0, 0], sizes = [4, 16], strides = [1, 1]} : vector<64x16xf32> to vector<4x16xf32>
    %cst_6 = arith.constant 0.533333361 : f32
    %8 = vector.broadcast %cst_6 : f32 to vector<4x16xf32>
    %9 = arith.mulf %8, %7 : vector<4x16xf32>
    %10 = vector.extract_strided_slice %2 {offsets = [4, 0], sizes = [4, 16], strides = [1, 1]} : vector<64x16xf32> to vector<4x16xf32>
    %cst_7 = arith.constant 0.466666669 : f32
    %11 = vector.broadcast %cst_7 : f32 to vector<4x16xf32>
    %12 = arith.mulf %11, %10 : vector<4x16xf32>
    %13 = arith.addf %9, %12 : vector<4x16xf32>
    %c0_8 = arith.constant 0 : index
    %c16 = arith.constant 16 : index
    %14 = vector.load %arg12[%c0_8, %c16] : memref<4x512xf32, #tpu.memory_space<vmem>>, vector<4x16xf32>
    tpu.vector_store %arg12[%c0_8, %c16], %13 {strides = array<i32>} : memref<4x512xf32, #tpu.memory_space<vmem>>, vector<4x16xf32>,
    %15 = vector.extract_strided_slice %2 {offsets = [0, 0], sizes = [4, 16], strides = [1, 1]} : vector<64x16xf32> to vector<4x16xf32>
    %cst_9 = arith.constant 0.0666666701 : f32
    %16 = vector.broadcast %cst_9 : f32 to vector<4x16xf32>
    %17 = arith.mulf %16, %15 : vector<4x16xf32>
    %18 = vector.extract_strided_slice %2 {offsets = [4, 0], sizes = [4, 16], strides = [1, 1]} : vector<64x16xf32> to vector<4x16xf32>
    %cst_10 = arith.constant 0.933333337 : f32
    %19 = vector.broadcast %cst_10 : f32 to vector<4x16xf32>
    %20 = arith.mulf %19, %18 : vector<4x16xf32>
    %21 = arith.addf %17, %20 : vector<4x16xf32>
    %c0_11 = arith.constant 0 : index
    %c32 = arith.constant 32 : index
    %22 = vector.load %arg12[%c0_11, %c32] : memref<4x512xf32, #tpu.memory_space<vmem>>, vector<4x16xf32>
    tpu.vector_store %arg12[%c0_11, %c32], %21 {strides = array<i32>} : memref<4x512xf32, #tpu.memory_space<vmem>>, vector<4x16xf32>,
    %23 = vector.extract_strided_slice %2 {offsets = [4, 0], sizes = [4, 16], strides = [1, 1]} : vector<64x16xf32> to vector<4x16xf32>
    %cst_12 = arith.constant 6.000000e-01 : f32
    %24 = vector.broadcast %cst_12 : f32 to vector<4x16xf32>
    %25 = arith.mulf %24, %23 : vector<4x16xf32>
    %26 = vector.extract_strided_slice %2 {offsets = [8, 0], sizes = [4, 16], strides = [1, 1]} : vector<64x16xf32> to vector<4x16xf32>
    %cst_13 = arith.constant 4.000000e-01 : f32
    %27 = vector.broadcast %cst_13 : f32 to vector<4x16xf32>
    %28 = arith.mulf %27, %26 : vector<4x16xf32>
    %29 = arith.addf %25, %28 : vector<4x16xf32>
    %c0_14 = arith.constant 0 : index
    %c48 = arith.constant 48 : index
    %30 = vector.load %arg12[%c0_14, %c48] : memref<4x512xf32, #tpu.memory_space<vmem>>, vector<4x16xf32>
    tpu.vector_store %arg12[%c0_14, %c48], %29 {strides = array<i32>} : memref<4x512xf32, #tpu.memory_space<vmem>>, vector<4x16xf32>,
    %31 = vector.extract_strided_slice %2 {offsets = [4, 0], sizes = [4, 16], strides = [1, 1]} : vector<64x16xf32> to vector<4x16xf32>
    %cst_15 = arith.constant 0.13333334 : f32
    %32 = vector.broadcast %cst_15 : f32 to vector<4x16xf32>
    %33 = arith.mulf %32, %31 : vector<4x16xf32>
    %34 = vector.extract_strided_slice %2 {offsets = [8, 0], sizes = [4, 16], strides = [1, 1]} : vector<64x16xf32> to vector<4x16xf32>
    %cst_16 = arith.constant 0.866666674 : f32
    %35 = vector.broadcast %cst_16 : f32 to vector<4x16xf32>
    %36 = arith.mulf %35, %34 : vector<4x16xf32>
    %37 = arith.addf %33, %36 : vector<4x16xf32>
    %c0_17 = arith.constant 0 : index
    %c64 = arith.constant 64 : index
    %38 = vector.load %arg12[%c0_17, %c64] : memref<4x512xf32, #tpu.memory_space<vmem>>, vector<4x16xf32>
    tpu.vector_store %arg12[%c0_17, %c64], %37 {strides = array<i32>} : memref<4x512xf32, #tpu.memory_space<vmem>>, vector<4x16xf32>,
    %39 = vector.extract_strided_slice %2 {offsets = [8, 0], sizes = [4, 16], strides = [1, 1]} : vector<64x16xf32> to vector<4x16xf32>
    %cst_18 = arith.constant 0.666666686 : f32
    %40 = vector.broadcast %cst_18 : f32 to vector<4x16xf32>
    %41 = arith.mulf %40, %39 : vector<4x16xf32>
    %42 = vector.extract_strided_slice %2 {offsets = [12, 0], sizes = [4, 16], strides = [1, 1]} : vector<64x16xf32> to vector<4x16xf32>
    %cst_19 = arith.constant 0.333333343 : f32
    %43 = vector.broadcast %cst_19 : f32 to vector<4x16xf32>
    %44 = arith.mulf %43, %42 : vector<4x16xf32>
    %45 = arith.addf %41, %44 : vector<4x16xf32>
    %c0_20 = arith.constant 0 : index
    %c80 = arith.constant 80 : index
    %46 = vector.load %arg12[%c0_20, %c80] : memref<4x512xf32, #tpu.memory_space<vmem>>, vector<4x16xf32>
    tpu.vector_store %arg12[%c0_20, %c80], %45 {strides = array<i32>} : memref<4x512xf32, #tpu.memory_space<vmem>>, vector<4x16xf32>,
    %47 = vector.extract_strided_slice %2 {offsets = [8, 0], sizes = [4, 16], strides = [1, 1]} : vector<64x16xf32> to vector<4x16xf32>
    %cst_21 = arith.constant 2.000000e-01 : f32
    %48 = vector.broadcast %cst_21 : f32 to vector<4x16xf32>
    %49 = arith.mulf %48, %47 : vector<4x16xf32>
    %50 = vector.extract_strided_slice %2 {offsets = [12, 0], sizes = [4, 16], strides = [1, 1]} : vector<64x16xf32> to vector<4x16xf32>
    %cst_22 = arith.constant 8.000000e-01 : f32
    %51 = vector.broadcast %cst_22 : f32 to vector<4x16xf32>
    %52 = arith.mulf %51, %50 : vector<4x16xf32>
    %53 = arith.addf %49, %52 : vector<4x16xf32>
    %c0_23 = arith.constant 0 : index
    %c96 = arith.constant 96 : index
    %54 = vector.load %arg12[%c0_23, %c96] : memref<4x512xf32, #tpu.memory_space<vmem>>, vector<4x16xf32>
    tpu.vector_store %arg12[%c0_23, %c96], %53 {strides = array<i32>} : memref<4x512xf32, #tpu.memory_space<vmem>>, vector<4x16xf32>,
    %55 = vector.extract_strided_slice %2 {offsets = [12, 0], sizes = [4, 16], strides = [1, 1]} : vector<64x16xf32> to vector<4x16xf32>
    %cst_24 = arith.constant 0.733333349 : f32
    %56 = vector.broadcast %cst_24 : f32 to vector<4x16xf32>
    %57 = arith.mulf %56, %55 : vector<4x16xf32>
    %58 = vector.extract_strided_slice %2 {offsets = [16, 0], sizes = [4, 16], strides = [1, 1]} : vector<64x16xf32> to vector<4x16xf32>
    %cst_25 = arith.constant 0.266666681 : f32
    %59 = vector.broadcast %cst_25 : f32 to vector<4x16xf32>
    %60 = arith.mulf %59, %58 : vector<4x16xf32>
    %61 = arith.addf %57, %60 : vector<4x16xf32>
    %c0_26 = arith.constant 0 : index
    %c112 = arith.constant 112 : index
    %62 = vector.load %arg12[%c0_26, %c112] : memref<4x512xf32, #tpu.memory_space<vmem>>, vector<4x16xf32>
    tpu.vector_store %arg12[%c0_26, %c112], %61 {strides = array<i32>} : memref<4x512xf32, #tpu.memory_space<vmem>>, vector<4x16xf32>,
    %63 = vector.extract_strided_slice %2 {offsets = [12, 0], sizes = [4, 16], strides = [1, 1]} : vector<64x16xf32> to vector<4x16xf32>
    %cst_27 = arith.constant 0.266666681 : f32
    %64 = vector.broadcast %cst_27 : f32 to vector<4x16xf32>
    %65 = arith.mulf %64, %63 : vector<4x16xf32>
    %66 = vector.extract_strided_slice %2 {offsets = [16, 0], sizes = [4, 16], strides = [1, 1]} : vector<64x16xf32> to vector<4x16xf32>
    %cst_28 = arith.constant 0.733333349 : f32
    %67 = vector.broadcast %cst_28 : f32 to vector<4x16xf32>
    %68 = arith.mulf %67, %66 : vector<4x16xf32>
    %69 = arith.addf %65, %68 : vector<4x16xf32>
    %c0_29 = arith.constant 0 : index
    %c128 = arith.constant 128 : index
    %70 = vector.load %arg12[%c0_29, %c128] : memref<4x512xf32, #tpu.memory_space<vmem>>, vector<4x16xf32>
    tpu.vector_store %arg12[%c0_29, %c128], %69 {strides = array<i32>} : memref<4x512xf32, #tpu.memory_space<vmem>>, vector<4x16xf32>,
    %71 = vector.extract_strided_slice %2 {offsets = [16, 0], sizes = [4, 16], strides = [1, 1]} : vector<64x16xf32> to vector<4x16xf32>
    %cst_30 = arith.constant 8.000000e-01 : f32
    %72 = vector.broadcast %cst_30 : f32 to vector<4x16xf32>
    %73 = arith.mulf %72, %71 : vector<4x16xf32>
    %74 = vector.extract_strided_slice %2 {offsets = [20, 0], sizes = [4, 16], strides = [1, 1]} : vector<64x16xf32> to vector<4x16xf32>
    %cst_31 = arith.constant 2.000000e-01 : f32
    %75 = vector.broadcast %cst_31 : f32 to vector<4x16xf32>
    %76 = arith.mulf %75, %74 : vector<4x16xf32>
    %77 = arith.addf %73, %76 : vector<4x16xf32>
    %c0_32 = arith.constant 0 : index
    %c144 = arith.constant 144 : index
    %78 = vector.load %arg12[%c0_32, %c144] : memref<4x512xf32, #tpu.memory_space<vmem>>, vector<4x16xf32>
    tpu.vector_store %arg12[%c0_32, %c144], %77 {strides = array<i32>} : memref<4x512xf32, #tpu.memory_space<vmem>>, vector<4x16xf32>,
    %79 = vector.extract_strided_slice %2 {offsets = [16, 0], sizes = [4, 16], strides = [1, 1]} : vector<64x16xf32> to vector<4x16xf32>
    %cst_33 = arith.constant 0.333333343 : f32
    %80 = vector.broadcast %cst_33 : f32 to vector<4x16xf32>
    %81 = arith.mulf %80, %79 : vector<4x16xf32>
    %82 = vector.extract_strided_slice %2 {offsets = [20, 0], sizes = [4, 16], strides = [1, 1]} : vector<64x16xf32> to vector<4x16xf32>
    %cst_34 = arith.constant 0.666666686 : f32
    %83 = vector.broadcast %cst_34 : f32 to vector<4x16xf32>
    %84 = arith.mulf %83, %82 : vector<4x16xf32>
    %85 = arith.addf %81, %84 : vector<4x16xf32>
    %c0_35 = arith.constant 0 : index
    %c160 = arith.constant 160 : index
    %86 = vector.load %arg12[%c0_35, %c160] : memref<4x512xf32, #tpu.memory_space<vmem>>, vector<4x16xf32>
    tpu.vector_store %arg12[%c0_35, %c160], %85 {strides = array<i32>} : memref<4x512xf32, #tpu.memory_space<vmem>>, vector<4x16xf32>,
    %87 = vector.extract_strided_slice %2 {offsets = [20, 0], sizes = [4, 16], strides = [1, 1]} : vector<64x16xf32> to vector<4x16xf32>
    %cst_36 = arith.constant 0.866666674 : f32
    %88 = vector.broadcast %cst_36 : f32 to vector<4x16xf32>
    %89 = arith.mulf %88, %87 : vector<4x16xf32>
    %90 = vector.extract_strided_slice %2 {offsets = [24, 0], sizes = [4, 16], strides = [1, 1]} : vector<64x16xf32> to vector<4x16xf32>
    %cst_37 = arith.constant 0.13333334 : f32
    %91 = vector.broadcast %cst_37 : f32 to vector<4x16xf32>
    %92 = arith.mulf %91, %90 : vector<4x16xf32>
    %93 = arith.addf %89, %92 : vector<4x16xf32>
    %c0_38 = arith.constant 0 : index
    %c176 = arith.constant 176 : index
    %94 = vector.load %arg12[%c0_38, %c176] : memref<4x512xf32, #tpu.memory_space<vmem>>, vector<4x16xf32>
    tpu.vector_store %arg12[%c0_38, %c176], %93 {strides = array<i32>} : memref<4x512xf32, #tpu.memory_space<vmem>>, vector<4x16xf32>,
    %95 = vector.extract_strided_slice %2 {offsets = [20, 0], sizes = [4, 16], strides = [1, 1]} : vector<64x16xf32> to vector<4x16xf32>
    %cst_39 = arith.constant 4.000000e-01 : f32
    %96 = vector.broadcast %cst_39 : f32 to vector<4x16xf32>
    %97 = arith.mulf %96, %95 : vector<4x16xf32>
    %98 = vector.extract_strided_slice %2 {offsets = [24, 0], sizes = [4, 16], strides = [1, 1]} : vector<64x16xf32> to vector<4x16xf32>
    %cst_40 = arith.constant 6.000000e-01 : f32
    %99 = vector.broadcast %cst_40 : f32 to vector<4x16xf32>
    %100 = arith.mulf %99, %98 : vector<4x16xf32>
    %101 = arith.addf %97, %100 : vector<4x16xf32>
    %c0_41 = arith.constant 0 : index
    %c192 = arith.constant 192 : index
    %102 = vector.load %arg12[%c0_41, %c192] : memref<4x512xf32, #tpu.memory_space<vmem>>, vector<4x16xf32>
    tpu.vector_store %arg12[%c0_41, %c192], %101 {strides = array<i32>} : memref<4x512xf32, #tpu.memory_space<vmem>>, vector<4x16xf32>,
    %103 = vector.extract_strided_slice %2 {offsets = [24, 0], sizes = [4, 16], strides = [1, 1]} : vector<64x16xf32> to vector<4x16xf32>
    %cst_42 = arith.constant 0.933333337 : f32
    %104 = vector.broadcast %cst_42 : f32 to vector<4x16xf32>
    %105 = arith.mulf %104, %103 : vector<4x16xf32>
    %106 = vector.extract_strided_slice %2 {offsets = [28, 0], sizes = [4, 16], strides = [1, 1]} : vector<64x16xf32> to vector<4x16xf32>
    %cst_43 = arith.constant 0.0666666701 : f32
    %107 = vector.broadcast %cst_43 : f32 to vector<4x16xf32>
    %108 = arith.mulf %107, %106 : vector<4x16xf32>
    %109 = arith.addf %105, %108 : vector<4x16xf32>
    %c0_44 = arith.constant 0 : index
    %c208 = arith.constant 208 : index
    %110 = vector.load %arg12[%c0_44, %c208] : memref<4x512xf32, #tpu.memory_space<vmem>>, vector<4x16xf32>
    tpu.vector_store %arg12[%c0_44, %c208], %109 {strides = array<i32>} : memref<4x512xf32, #tpu.memory_space<vmem>>, vector<4x16xf32>,
    %111 = vector.extract_strided_slice %2 {offsets = [24, 0], sizes = [4, 16], strides = [1, 1]} : vector<64x16xf32> to vector<4x16xf32>
    %cst_45 = arith.constant 0.466666669 : f32
    %112 = vector.broadcast %cst_45 : f32 to vector<4x16xf32>
    %113 = arith.mulf %112, %111 : vector<4x16xf32>
    %114 = vector.extract_strided_slice %2 {offsets = [28, 0], sizes = [4, 16], strides = [1, 1]} : vector<64x16xf32> to vector<4x16xf32>
    %cst_46 = arith.constant 0.533333361 : f32
    %115 = vector.broadcast %cst_46 : f32 to vector<4x16xf32>
    %116 = arith.mulf %115, %114 : vector<4x16xf32>
    %117 = arith.addf %113, %116 : vector<4x16xf32>
    %c0_47 = arith.constant 0 : index
    %c224 = arith.constant 224 : index
    %118 = vector.load %arg12[%c0_47, %c224] : memref<4x512xf32, #tpu.memory_space<vmem>>, vector<4x16xf32>
    tpu.vector_store %arg12[%c0_47, %c224], %117 {strides = array<i32>} : memref<4x512xf32, #tpu.memory_space<vmem>>, vector<4x16xf32>,
    %119 = vector.extract_strided_slice %2 {offsets = [28, 0], sizes = [4, 16], strides = [1, 1]} : vector<64x16xf32> to vector<4x16xf32>
    %cst_48 = arith.constant 1.000000e+00 : f32
    %120 = vector.broadcast %cst_48 : f32 to vector<4x16xf32>
    %121 = arith.mulf %120, %119 : vector<4x16xf32>
    %c0_49 = arith.constant 0 : index
    %c240 = arith.constant 240 : index
    %122 = vector.load %arg12[%c0_49, %c240] : memref<4x512xf32, #tpu.memory_space<vmem>>, vector<4x16xf32>
    tpu.vector_store %arg12[%c0_49, %c240], %121 {strides = array<i32>} : memref<4x512xf32, #tpu.memory_space<vmem>>, vector<4x16xf32>,
    %123 = vector.extract_strided_slice %2 {offsets = [32, 0], sizes = [4, 16], strides = [1, 1]} : vector<64x16xf32> to vector<4x16xf32>
    %cst_50 = arith.constant 1.000000e+00 : f32
    %124 = vector.broadcast %cst_50 : f32 to vector<4x16xf32>
    %125 = arith.mulf %124, %123 : vector<4x16xf32>
    %c0_51 = arith.constant 0 : index
    %c256 = arith.constant 256 : index
    %126 = vector.load %arg12[%c0_51, %c256] : memref<4x512xf32, #tpu.memory_space<vmem>>, vector<4x16xf32>
    tpu.vector_store %arg12[%c0_51, %c256], %125 {strides = array<i32>} : memref<4x512xf32, #tpu.memory_space<vmem>>, vector<4x16xf32>,
    %127 = vector.extract_strided_slice %2 {offsets = [32, 0], sizes = [4, 16], strides = [1, 1]} : vector<64x16xf32> to vector<4x16xf32>
    %cst_52 = arith.constant 0.533333361 : f32
    %128 = vector.broadcast %cst_52 : f32 to vector<4x16xf32>
    %129 = arith.mulf %128, %127 : vector<4x16xf32>
    %130 = vector.extract_strided_slice %2 {offsets = [36, 0], sizes = [4, 16], strides = [1, 1]} : vector<64x16xf32> to vector<4x16xf32>
    %cst_53 = arith.constant 0.466666669 : f32
    %131 = vector.broadcast %cst_53 : f32 to vector<4x16xf32>
    %132 = arith.mulf %131, %130 : vector<4x16xf32>
    %133 = arith.addf %129, %132 : vector<4x16xf32>
    %c0_54 = arith.constant 0 : index
    %c272 = arith.constant 272 : index
    %134 = vector.load %arg12[%c0_54, %c272] : memref<4x512xf32, #tpu.memory_space<vmem>>, vector<4x16xf32>
    tpu.vector_store %arg12[%c0_54, %c272], %133 {strides = array<i32>} : memref<4x512xf32, #tpu.memory_space<vmem>>, vector<4x16xf32>,
    %135 = vector.extract_strided_slice %2 {offsets = [32, 0], sizes = [4, 16], strides = [1, 1]} : vector<64x16xf32> to vector<4x16xf32>
    %cst_55 = arith.constant 0.0666666701 : f32
    %136 = vector.broadcast %cst_55 : f32 to vector<4x16xf32>
    %137 = arith.mulf %136, %135 : vector<4x16xf32>
    %138 = vector.extract_strided_slice %2 {offsets = [36, 0], sizes = [4, 16], strides = [1, 1]} : vector<64x16xf32> to vector<4x16xf32>
    %cst_56 = arith.constant 0.933333337 : f32
    %139 = vector.broadcast %cst_56 : f32 to vector<4x16xf32>
    %140 = arith.mulf %139, %138 : vector<4x16xf32>
    %141 = arith.addf %137, %140 : vector<4x16xf32>
    %c0_57 = arith.constant 0 : index
    %c288 = arith.constant 288 : index
    %142 = vector.load %arg12[%c0_57, %c288] : memref<4x512xf32, #tpu.memory_space<vmem>>, vector<4x16xf32>
    tpu.vector_store %arg12[%c0_57, %c288], %141 {strides = array<i32>} : memref<4x512xf32, #tpu.memory_space<vmem>>, vector<4x16xf32>,
    %143 = vector.extract_strided_slice %2 {offsets = [36, 0], sizes = [4, 16], strides = [1, 1]} : vector<64x16xf32> to vector<4x16xf32>
    %cst_58 = arith.constant 6.000000e-01 : f32
    %144 = vector.broadcast %cst_58 : f32 to vector<4x16xf32>
    %145 = arith.mulf %144, %143 : vector<4x16xf32>
    %146 = vector.extract_strided_slice %2 {offsets = [40, 0], sizes = [4, 16], strides = [1, 1]} : vector<64x16xf32> to vector<4x16xf32>
    %cst_59 = arith.constant 4.000000e-01 : f32
    %147 = vector.broadcast %cst_59 : f32 to vector<4x16xf32>
    %148 = arith.mulf %147, %146 : vector<4x16xf32>
    %149 = arith.addf %145, %148 : vector<4x16xf32>
    %c0_60 = arith.constant 0 : index
    %c304 = arith.constant 304 : index
    %150 = vector.load %arg12[%c0_60, %c304] : memref<4x512xf32, #tpu.memory_space<vmem>>, vector<4x16xf32>
    tpu.vector_store %arg12[%c0_60, %c304], %149 {strides = array<i32>} : memref<4x512xf32, #tpu.memory_space<vmem>>, vector<4x16xf32>,
    %151 = vector.extract_strided_slice %2 {offsets = [36, 0], sizes = [4, 16], strides = [1, 1]} : vector<64x16xf32> to vector<4x16xf32>
    %cst_61 = arith.constant 0.13333334 : f32
    %152 = vector.broadcast %cst_61 : f32 to vector<4x16xf32>
    %153 = arith.mulf %152, %151 : vector<4x16xf32>
    %154 = vector.extract_strided_slice %2 {offsets = [40, 0], sizes = [4, 16], strides = [1, 1]} : vector<64x16xf32> to vector<4x16xf32>
    %cst_62 = arith.constant 0.866666674 : f32
    %155 = vector.broadcast %cst_62 : f32 to vector<4x16xf32>
    %156 = arith.mulf %155, %154 : vector<4x16xf32>
    %157 = arith.addf %153, %156 : vector<4x16xf32>
    %c0_63 = arith.constant 0 : index
    %c320 = arith.constant 320 : index
    %158 = vector.load %arg12[%c0_63, %c320] : memref<4x512xf32, #tpu.memory_space<vmem>>, vector<4x16xf32>
    tpu.vector_store %arg12[%c0_63, %c320], %157 {strides = array<i32>} : memref<4x512xf32, #tpu.memory_space<vmem>>, vector<4x16xf32>,
    %159 = vector.extract_strided_slice %2 {offsets = [40, 0], sizes = [4, 16], strides = [1, 1]} : vector<64x16xf32> to vector<4x16xf32>
    %cst_64 = arith.constant 0.666666686 : f32
    %160 = vector.broadcast %cst_64 : f32 to vector<4x16xf32>
    %161 = arith.mulf %160, %159 : vector<4x16xf32>
    %162 = vector.extract_strided_slice %2 {offsets = [44, 0], sizes = [4, 16], strides = [1, 1]} : vector<64x16xf32> to vector<4x16xf32>
    %cst_65 = arith.constant 0.333333343 : f32
    %163 = vector.broadcast %cst_65 : f32 to vector<4x16xf32>
    %164 = arith.mulf %163, %162 : vector<4x16xf32>
    %165 = arith.addf %161, %164 : vector<4x16xf32>
    %c0_66 = arith.constant 0 : index
    %c336 = arith.constant 336 : index
    %166 = vector.load %arg12[%c0_66, %c336] : memref<4x512xf32, #tpu.memory_space<vmem>>, vector<4x16xf32>
    tpu.vector_store %arg12[%c0_66, %c336], %165 {strides = array<i32>} : memref<4x512xf32, #tpu.memory_space<vmem>>, vector<4x16xf32>,
    %167 = vector.extract_strided_slice %2 {offsets = [40, 0], sizes = [4, 16], strides = [1, 1]} : vector<64x16xf32> to vector<4x16xf32>
    %cst_67 = arith.constant 2.000000e-01 : f32
    %168 = vector.broadcast %cst_67 : f32 to vector<4x16xf32>
    %169 = arith.mulf %168, %167 : vector<4x16xf32>
    %170 = vector.extract_strided_slice %2 {offsets = [44, 0], sizes = [4, 16], strides = [1, 1]} : vector<64x16xf32> to vector<4x16xf32>
    %cst_68 = arith.constant 8.000000e-01 : f32
    %171 = vector.broadcast %cst_68 : f32 to vector<4x16xf32>
    %172 = arith.mulf %171, %170 : vector<4x16xf32>
    %173 = arith.addf %169, %172 : vector<4x16xf32>
    %c0_69 = arith.constant 0 : index
    %c352 = arith.constant 352 : index
    %174 = vector.load %arg12[%c0_69, %c352] : memref<4x512xf32, #tpu.memory_space<vmem>>, vector<4x16xf32>
    tpu.vector_store %arg12[%c0_69, %c352], %173 {strides = array<i32>} : memref<4x512xf32, #tpu.memory_space<vmem>>, vector<4x16xf32>,
    %175 = vector.extract_strided_slice %2 {offsets = [44, 0], sizes = [4, 16], strides = [1, 1]} : vector<64x16xf32> to vector<4x16xf32>
    %cst_70 = arith.constant 0.733333349 : f32
    %176 = vector.broadcast %cst_70 : f32 to vector<4x16xf32>
    %177 = arith.mulf %176, %175 : vector<4x16xf32>
    %178 = vector.extract_strided_slice %2 {offsets = [48, 0], sizes = [4, 16], strides = [1, 1]} : vector<64x16xf32> to vector<4x16xf32>
    %cst_71 = arith.constant 0.266666681 : f32
    %179 = vector.broadcast %cst_71 : f32 to vector<4x16xf32>
    %180 = arith.mulf %179, %178 : vector<4x16xf32>
    %181 = arith.addf %177, %180 : vector<4x16xf32>
    %c0_72 = arith.constant 0 : index
    %c368 = arith.constant 368 : index
    %182 = vector.load %arg12[%c0_72, %c368] : memref<4x512xf32, #tpu.memory_space<vmem>>, vector<4x16xf32>
    tpu.vector_store %arg12[%c0_72, %c368], %181 {strides = array<i32>} : memref<4x512xf32, #tpu.memory_space<vmem>>, vector<4x16xf32>,
    %183 = vector.extract_strided_slice %2 {offsets = [44, 0], sizes = [4, 16], strides = [1, 1]} : vector<64x16xf32> to vector<4x16xf32>
    %cst_73 = arith.constant 0.266666681 : f32
    %184 = vector.broadcast %cst_73 : f32 to vector<4x16xf32>
    %185 = arith.mulf %184, %183 : vector<4x16xf32>
    %186 = vector.extract_strided_slice %2 {offsets = [48, 0], sizes = [4, 16], strides = [1, 1]} : vector<64x16xf32> to vector<4x16xf32>
    %cst_74 = arith.constant 0.733333349 : f32
    %187 = vector.broadcast %cst_74 : f32 to vector<4x16xf32>
    %188 = arith.mulf %187, %186 : vector<4x16xf32>
    %189 = arith.addf %185, %188 : vector<4x16xf32>
    %c0_75 = arith.constant 0 : index
    %c384 = arith.constant 384 : index
    %190 = vector.load %arg12[%c0_75, %c384] : memref<4x512xf32, #tpu.memory_space<vmem>>, vector<4x16xf32>
    tpu.vector_store %arg12[%c0_75, %c384], %189 {strides = array<i32>} : memref<4x512xf32, #tpu.memory_space<vmem>>, vector<4x16xf32>,
    %191 = vector.extract_strided_slice %2 {offsets = [48, 0], sizes = [4, 16], strides = [1, 1]} : vector<64x16xf32> to vector<4x16xf32>
    %cst_76 = arith.constant 8.000000e-01 : f32
    %192 = vector.broadcast %cst_76 : f32 to vector<4x16xf32>
    %193 = arith.mulf %192, %191 : vector<4x16xf32>
    %194 = vector.extract_strided_slice %2 {offsets = [52, 0], sizes = [4, 16], strides = [1, 1]} : vector<64x16xf32> to vector<4x16xf32>
    %cst_77 = arith.constant 2.000000e-01 : f32
    %195 = vector.broadcast %cst_77 : f32 to vector<4x16xf32>
    %196 = arith.mulf %195, %194 : vector<4x16xf32>
    %197 = arith.addf %193, %196 : vector<4x16xf32>
    %c0_78 = arith.constant 0 : index
    %c400 = arith.constant 400 : index
    %198 = vector.load %arg12[%c0_78, %c400] : memref<4x512xf32, #tpu.memory_space<vmem>>, vector<4x16xf32>
    tpu.vector_store %arg12[%c0_78, %c400], %197 {strides = array<i32>} : memref<4x512xf32, #tpu.memory_space<vmem>>, vector<4x16xf32>,
    %199 = vector.extract_strided_slice %2 {offsets = [48, 0], sizes = [4, 16], strides = [1, 1]} : vector<64x16xf32> to vector<4x16xf32>
    %cst_79 = arith.constant 0.333333343 : f32
    %200 = vector.broadcast %cst_79 : f32 to vector<4x16xf32>
    %201 = arith.mulf %200, %199 : vector<4x16xf32>
    %202 = vector.extract_strided_slice %2 {offsets = [52, 0], sizes = [4, 16], strides = [1, 1]} : vector<64x16xf32> to vector<4x16xf32>
    %cst_80 = arith.constant 0.666666686 : f32
    %203 = vector.broadcast %cst_80 : f32 to vector<4x16xf32>
    %204 = arith.mulf %203, %202 : vector<4x16xf32>
    %205 = arith.addf %201, %204 : vector<4x16xf32>
    %c0_81 = arith.constant 0 : index
    %c416 = arith.constant 416 : index
    %206 = vector.load %arg12[%c0_81, %c416] : memref<4x512xf32, #tpu.memory_space<vmem>>, vector<4x16xf32>
    tpu.vector_store %arg12[%c0_81, %c416], %205 {strides = array<i32>} : memref<4x512xf32, #tpu.memory_space<vmem>>, vector<4x16xf32>,
    %207 = vector.extract_strided_slice %2 {offsets = [52, 0], sizes = [4, 16], strides = [1, 1]} : vector<64x16xf32> to vector<4x16xf32>
    %cst_82 = arith.constant 0.866666674 : f32
    %208 = vector.broadcast %cst_82 : f32 to vector<4x16xf32>
    %209 = arith.mulf %208, %207 : vector<4x16xf32>
    %210 = vector.extract_strided_slice %2 {offsets = [56, 0], sizes = [4, 16], strides = [1, 1]} : vector<64x16xf32> to vector<4x16xf32>
    %cst_83 = arith.constant 0.13333334 : f32
    %211 = vector.broadcast %cst_83 : f32 to vector<4x16xf32>
    %212 = arith.mulf %211, %210 : vector<4x16xf32>
    %213 = arith.addf %209, %212 : vector<4x16xf32>
    %c0_84 = arith.constant 0 : index
    %c432 = arith.constant 432 : index
    %214 = vector.load %arg12[%c0_84, %c432] : memref<4x512xf32, #tpu.memory_space<vmem>>, vector<4x16xf32>
    tpu.vector_store %arg12[%c0_84, %c432], %213 {strides = array<i32>} : memref<4x512xf32, #tpu.memory_space<vmem>>, vector<4x16xf32>,
    %215 = vector.extract_strided_slice %2 {offsets = [52, 0], sizes = [4, 16], strides = [1, 1]} : vector<64x16xf32> to vector<4x16xf32>
    %cst_85 = arith.constant 4.000000e-01 : f32
    %216 = vector.broadcast %cst_85 : f32 to vector<4x16xf32>
    %217 = arith.mulf %216, %215 : vector<4x16xf32>
    %218 = vector.extract_strided_slice %2 {offsets = [56, 0], sizes = [4, 16], strides = [1, 1]} : vector<64x16xf32> to vector<4x16xf32>
    %cst_86 = arith.constant 6.000000e-01 : f32
    %219 = vector.broadcast %cst_86 : f32 to vector<4x16xf32>
    %220 = arith.mulf %219, %218 : vector<4x16xf32>
    %221 = arith.addf %217, %220 : vector<4x16xf32>
    %c0_87 = arith.constant 0 : index
    %c448 = arith.constant 448 : index
    %222 = vector.load %arg12[%c0_87, %c448] : memref<4x512xf32, #tpu.memory_space<vmem>>, vector<4x16xf32>
    tpu.vector_store %arg12[%c0_87, %c448], %221 {strides = array<i32>} : memref<4x512xf32, #tpu.memory_space<vmem>>, vector<4x16xf32>,
    %223 = vector.extract_strided_slice %2 {offsets = [56, 0], sizes = [4, 16], strides = [1, 1]} : vector<64x16xf32> to vector<4x16xf32>
    %cst_88 = arith.constant 0.933333337 : f32
    %224 = vector.broadcast %cst_88 : f32 to vector<4x16xf32>
    %225 = arith.mulf %224, %223 : vector<4x16xf32>
    %226 = vector.extract_strided_slice %2 {offsets = [60, 0], sizes = [4, 16], strides = [1, 1]} : vector<64x16xf32> to vector<4x16xf32>
    %cst_89 = arith.constant 0.0666666701 : f32
    %227 = vector.broadcast %cst_89 : f32 to vector<4x16xf32>
    %228 = arith.mulf %227, %226 : vector<4x16xf32>
    %229 = arith.addf %225, %228 : vector<4x16xf32>
    %c0_90 = arith.constant 0 : index
    %c464 = arith.constant 464 : index
    %230 = vector.load %arg12[%c0_90, %c464] : memref<4x512xf32, #tpu.memory_space<vmem>>, vector<4x16xf32>
    tpu.vector_store %arg12[%c0_90, %c464], %229 {strides = array<i32>} : memref<4x512xf32, #tpu.memory_space<vmem>>, vector<4x16xf32>,
    %231 = vector.extract_strided_slice %2 {offsets = [56, 0], sizes = [4, 16], strides = [1, 1]} : vector<64x16xf32> to vector<4x16xf32>
    %cst_91 = arith.constant 0.466666669 : f32
    %232 = vector.broadcast %cst_91 : f32 to vector<4x16xf32>
    %233 = arith.mulf %232, %231 : vector<4x16xf32>
    %234 = vector.extract_strided_slice %2 {offsets = [60, 0], sizes = [4, 16], strides = [1, 1]} : vector<64x16xf32> to vector<4x16xf32>
    %cst_92 = arith.constant 0.533333361 : f32
    %235 = vector.broadcast %cst_92 : f32 to vector<4x16xf32>
    %236 = arith.mulf %235, %234 : vector<4x16xf32>
    %237 = arith.addf %233, %236 : vector<4x16xf32>
    %c0_93 = arith.constant 0 : index
    %c480 = arith.constant 480 : index
    %238 = vector.load %arg12[%c0_93, %c480] : memref<4x512xf32, #tpu.memory_space<vmem>>, vector<4x16xf32>
    tpu.vector_store %arg12[%c0_93, %c480], %237 {strides = array<i32>} : memref<4x512xf32, #tpu.memory_space<vmem>>, vector<4x16xf32>,
    %239 = vector.extract_strided_slice %2 {offsets = [60, 0], sizes = [4, 16], strides = [1, 1]} : vector<64x16xf32> to vector<4x16xf32>
    %cst_94 = arith.constant 1.000000e+00 : f32
    %240 = vector.broadcast %cst_94 : f32 to vector<4x16xf32>
    %241 = arith.mulf %240, %239 : vector<4x16xf32>
    %c0_95 = arith.constant 0 : index
    %c496 = arith.constant 496 : index
    %242 = vector.load %arg12[%c0_95, %c496] : memref<4x512xf32, #tpu.memory_space<vmem>>, vector<4x16xf32>
    tpu.vector_store %arg12[%c0_95, %c496], %241 {strides = array<i32>} : memref<4x512xf32, #tpu.memory_space<vmem>>, vector<4x16xf32>,
    %c0_96 = arith.constant 0 : index
    %c0_97 = arith.constant 0 : index
    %243 = vector.load %arg3[%c0_96, %c0_97] : memref<256x96xf32, #tpu.memory_space<vmem>>, vector<256x96xf32>
    %c0_98 = arith.constant 0 : index
    %c0_99 = arith.constant 0 : index
    %244 = vector.load %arg5[%c0_98, %c0_99] : memref<96x8xf32, #tpu.memory_space<vmem>>, vector<96x8xf32>
    %c0_100 = arith.constant 0 : index
    %c0_101 = arith.constant 0 : index
    %245 = vector.load %arg6[%c0_100, %c0_101] : memref<3x8xf32, #tpu.memory_space<vmem>>, vector<1x8xf32>
    %c1 = arith.constant 1 : index
    %c0_102 = arith.constant 0 : index
    %246 = vector.load %arg6[%c1, %c0_102] : memref<3x8xf32, #tpu.memory_space<vmem>>, vector<1x8xf32>
    %c2 = arith.constant 2 : index
    %c0_103 = arith.constant 0 : index
    %247 = vector.load %arg6[%c2, %c0_103] : memref<3x8xf32, #tpu.memory_space<vmem>>, vector<1x1xf32>
    %c0_104 = arith.constant 0 : index
    %c0_105 = arith.constant 0 : index
    %248 = vector.load %arg12[%c0_104, %c0_105] : memref<4x512xf32, #tpu.memory_space<vmem>>, vector<4x256xf32>
    %cst_106 = arith.constant dense<0.000000e+00> : vector<4x96xf32>
    %249 = tpu.matmul %248, %243, %cst_106 {dimension_numbers = #tpu.dot_dimension_numbers<[1], [0], [0], [1], [0, 0, 1, 1], [], []>} : vector<4x256xf32>, vector<256x96xf32>, vector<4x96xf32> -> vector<4x96xf32>
    %cst_107 = arith.constant dense<0.000000e+00> : vector<4x8xf32>
    %250 = tpu.matmul %249, %244, %cst_107 {dimension_numbers = #tpu.dot_dimension_numbers<[1], [0], [0], [1], [0, 0, 1, 1], [], []>} : vector<4x96xf32>, vector<96x8xf32>, vector<4x8xf32> -> vector<4x8xf32>
    %251 = vector.broadcast %245 : vector<1x8xf32> to vector<4x8xf32>
    %252 = arith.addf %250, %251 : vector<4x8xf32>
    %cst_108 = arith.constant 0.000000e+00 : f32
    %253 = vector.broadcast %cst_108 : f32 to vector<4x8xf32>
    %254 = arith.maximumf %252, %253 : vector<4x8xf32>
    %255 = vector.broadcast %246 : vector<1x8xf32> to vector<4x8xf32>
    %256 = arith.mulf %254, %255 : vector<4x8xf32>
    %cst_109 = arith.constant dense<0.000000e+00> : vector<4xf32>
    %257 = vector.multi_reduction <add>, %256, %cst_109 [1] : vector<4x8xf32> to vector<4xf32>
    %258 = vector.shape_cast %257 : vector<4xf32> to vector<4x1xf32>
    %259 = vector.broadcast %247 : vector<1x1xf32> to vector<4x1xf32>
    %260 = arith.addf %258, %259 : vector<4x1xf32>
    %261 = arith.negf %260 : vector<4x1xf32>
    %262 = math.exp %261 : vector<4x1xf32>
    %cst_110 = arith.constant 1.000000e+00 : f32
    %263 = vector.broadcast %cst_110 : f32 to vector<4x1xf32>
    %264 = arith.addf %263, %262 : vector<4x1xf32>
    %265 = arith.divf %263, %264 : vector<4x1xf32>
    %c0_111 = arith.constant 0 : index
    %c0_112 = arith.constant 0 : index
    %266 = vector.load %arg1[%c0_111, %c0_112] : memref<4x512xf32, #tpu.memory_space<vmem>>, vector<4x256xf32>
    %267 = vector.broadcast %265 : vector<4x1xf32> to vector<4x256xf32>
    %268 = arith.mulf %267, %266 : vector<4x256xf32>
    %269 = arith.addf %248, %268 : vector<4x256xf32>
    %c0_113 = arith.constant 0 : index
    %c0_114 = arith.constant 0 : index
    %270 = vector.load %arg12[%c0_113, %c0_114] : memref<4x512xf32, #tpu.memory_space<vmem>>, vector<4x256xf32>
    tpu.vector_store %arg12[%c0_113, %c0_114], %269 {strides = array<i32>} : memref<4x512xf32, #tpu.memory_space<vmem>>, vector<4x256xf32>,
    %c0_115 = arith.constant 0 : index
    %c256_116 = arith.constant 256 : index
    %271 = vector.load %arg12[%c0_115, %c256_116] : memref<4x512xf32, #tpu.memory_space<vmem>>, vector<4x256xf32>
    %cst_117 = arith.constant dense<0.000000e+00> : vector<4x96xf32>
    %272 = tpu.matmul %271, %243, %cst_117 {dimension_numbers = #tpu.dot_dimension_numbers<[1], [0], [0], [1], [0, 0, 1, 1], [], []>} : vector<4x256xf32>, vector<256x96xf32>, vector<4x96xf32> -> vector<4x96xf32>
    %cst_118 = arith.constant dense<0.000000e+00> : vector<4x8xf32>
    %273 = tpu.matmul %272, %244, %cst_118 {dimension_numbers = #tpu.dot_dimension_numbers<[1], [0], [0], [1], [0, 0, 1, 1], [], []>} : vector<4x96xf32>, vector<96x8xf32>, vector<4x8xf32> -> vector<4x8xf32>
    %274 = vector.broadcast %245 : vector<1x8xf32> to vector<4x8xf32>
    %275 = arith.addf %273, %274 : vector<4x8xf32>
    %cst_119 = arith.constant 0.000000e+00 : f32
    %276 = vector.broadcast %cst_119 : f32 to vector<4x8xf32>
    %277 = arith.maximumf %275, %276 : vector<4x8xf32>
    %278 = vector.broadcast %246 : vector<1x8xf32> to vector<4x8xf32>
    %279 = arith.mulf %277, %278 : vector<4x8xf32>
    %cst_120 = arith.constant dense<0.000000e+00> : vector<4xf32>
    %280 = vector.multi_reduction <add>, %279, %cst_120 [1] : vector<4x8xf32> to vector<4xf32>
    %281 = vector.shape_cast %280 : vector<4xf32> to vector<4x1xf32>
    %282 = vector.broadcast %247 : vector<1x1xf32> to vector<4x1xf32>
    %283 = arith.addf %281, %282 : vector<4x1xf32>
    %284 = arith.negf %283 : vector<4x1xf32>
    %285 = math.exp %284 : vector<4x1xf32>
    %cst_121 = arith.constant 1.000000e+00 : f32
    %286 = vector.broadcast %cst_121 : f32 to vector<4x1xf32>
    %287 = arith.addf %286, %285 : vector<4x1xf32>
    %288 = arith.divf %286, %287 : vector<4x1xf32>
    %c0_122 = arith.constant 0 : index
    %c256_123 = arith.constant 256 : index
    %289 = vector.load %arg1[%c0_122, %c256_123] : memref<4x512xf32, #tpu.memory_space<vmem>>, vector<4x256xf32>
    %290 = vector.broadcast %288 : vector<4x1xf32> to vector<4x256xf32>
    %291 = arith.mulf %290, %289 : vector<4x256xf32>
    %292 = arith.addf %271, %291 : vector<4x256xf32>
    %c0_124 = arith.constant 0 : index
    %c256_125 = arith.constant 256 : index
    %293 = vector.load %arg12[%c0_124, %c256_125] : memref<4x512xf32, #tpu.memory_space<vmem>>, vector<4x256xf32>
    tpu.vector_store %arg12[%c0_124, %c256_125], %292 {strides = array<i32>} : memref<4x512xf32, #tpu.memory_space<vmem>>, vector<4x256xf32>,
    %c0_126 = arith.constant 0 : index
    %c0_127 = arith.constant 0 : index
    %294 = vector.load %arg4[%c0_126, %c0_127] : memref<2x512xi32, #tpu.memory_space<vmem>>, vector<1x512xi32>
    %c1_128 = arith.constant 1 : index
    %c0_129 = arith.constant 0 : index
    %295 = vector.load %arg4[%c1_128, %c0_129] : memref<2x512xi32, #tpu.memory_space<vmem>>, vector<1x512xi32>
    %c1_i32 = arith.constant 1 : i32
    %296 = vector.broadcast %c1_i32 : i32 to vector<1x512xi32>
    %297 = arith.cmpi sge, %294, %296 : vector<1x512xi32>
    %c1_i32_130 = arith.constant 1 : i32
    %298 = vector.broadcast %c1_i32_130 : i32 to vector<1x512xi32>
    %299 = arith.cmpi sge, %295, %298 : vector<1x512xi32>
    %300 = arith.andi %297, %299 : vector<1x512xi1>
    %301 = arith.extui %300 : vector<1x512xi1> to vector<1x512xi32>
    %302 = arith.sitofp %301 : vector<1x512xi32> to vector<1x512xf32>
    %c1_i32_131 = arith.constant 1 : i32
    %303 = vector.broadcast %c1_i32_131 : i32 to vector<1x512xi32>
    %304 = arith.cmpi sge, %294, %303 : vector<1x512xi32>
    %305 = arith.extui %304 : vector<1x512xi1> to vector<1x512xi32>
    %306 = arith.sitofp %305 : vector<1x512xi32> to vector<1x512xf32>
    %c1_i32_132 = arith.constant 1 : i32
    %307 = vector.broadcast %c1_i32_132 : i32 to vector<1x512xi32>
    %308 = arith.cmpi sge, %294, %307 : vector<1x512xi32>
    %c15_i32 = arith.constant 15 : i32
    %309 = vector.broadcast %c15_i32 : i32 to vector<1x512xi32>
    %310 = arith.cmpi slt, %295, %309 : vector<1x512xi32>
    %311 = arith.andi %308, %310 : vector<1x512xi1>
    %312 = arith.extui %311 : vector<1x512xi1> to vector<1x512xi32>
    %313 = arith.sitofp %312 : vector<1x512xi32> to vector<1x512xf32>
    %c1_i32_133 = arith.constant 1 : i32
    %314 = vector.broadcast %c1_i32_133 : i32 to vector<1x512xi32>
    %315 = arith.cmpi sge, %295, %314 : vector<1x512xi32>
    %316 = arith.extui %315 : vector<1x512xi1> to vector<1x512xi32>
    %317 = arith.sitofp %316 : vector<1x512xi32> to vector<1x512xf32>
    %c15_i32_134 = arith.constant 15 : i32
    %318 = vector.broadcast %c15_i32_134 : i32 to vector<1x512xi32>
    %319 = arith.cmpi slt, %295, %318 : vector<1x512xi32>
    %320 = arith.extui %319 : vector<1x512xi1> to vector<1x512xi32>
    %321 = arith.sitofp %320 : vector<1x512xi32> to vector<1x512xf32>
    %c15_i32_135 = arith.constant 15 : i32
    %322 = vector.broadcast %c15_i32_135 : i32 to vector<1x512xi32>
    %323 = arith.cmpi slt, %294, %322 : vector<1x512xi32>
    %c1_i32_136 = arith.constant 1 : i32
    %324 = vector.broadcast %c1_i32_136 : i32 to vector<1x512xi32>
    %325 = arith.cmpi sge, %295, %324 : vector<1x512xi32>
    %326 = arith.andi %323, %325 : vector<1x512xi1>
    %327 = arith.extui %326 : vector<1x512xi1> to vector<1x512xi32>
    %328 = arith.sitofp %327 : vector<1x512xi32> to vector<1x512xf32>
    %c15_i32_137 = arith.constant 15 : i32
    %329 = vector.broadcast %c15_i32_137 : i32 to vector<1x512xi32>
    %330 = arith.cmpi slt, %294, %329 : vector<1x512xi32>
    %331 = arith.extui %330 : vector<1x512xi1> to vector<1x512xi32>
    %332 = arith.sitofp %331 : vector<1x512xi32> to vector<1x512xf32>
    %c15_i32_138 = arith.constant 15 : i32
    %333 = vector.broadcast %c15_i32_138 : i32 to vector<1x512xi32>
    %334 = arith.cmpi slt, %294, %333 : vector<1x512xi32>
    %c15_i32_139 = arith.constant 15 : i32
    %335 = vector.broadcast %c15_i32_139 : i32 to vector<1x512xi32>
    %336 = arith.cmpi slt, %295, %335 : vector<1x512xi32>
    %337 = arith.andi %334, %336 : vector<1x512xi1>
    %338 = arith.extui %337 : vector<1x512xi1> to vector<1x512xi32>
    %339 = arith.sitofp %338 : vector<1x512xi32> to vector<1x512xf32>
    %c0_140 = arith.constant 0 : index
    %c0_141 = arith.constant 0 : index
    %340 = vector.load %arg7[%c0_140, %c0_141] : memref<4x36xbf16, #tpu.memory_space<vmem>>, vector<4x36xbf16>
    %c0_142 = arith.constant 0 : index
    %c0_143 = arith.constant 0 : index
    %341 = vector.load %arg8[%c0_142, %c0_143] : memref<6x36xbf16, #tpu.memory_space<vmem>>, vector<6x36xbf16>
    %c0_144 = arith.constant 0 : index
    %c0_145 = arith.constant 0 : index
    %342 = vector.load %arg9[%c0_144, %c0_145] : memref<4x5xf32, #tpu.memory_space<vmem>>, vector<4x1xf32>
    %c0_146 = arith.constant 0 : index
    %c1_147 = arith.constant 1 : index
    %343 = vector.load %arg9[%c0_146, %c1_147] : memref<4x5xf32, #tpu.memory_space<vmem>>, vector<4x1xf32>
    %c0_148 = arith.constant 0 : index
    %c2_149 = arith.constant 2 : index
    %344 = vector.load %arg9[%c0_148, %c2_149] : memref<4x5xf32, #tpu.memory_space<vmem>>, vector<4x1xf32>
    %c0_150 = arith.constant 0 : index
    %c3 = arith.constant 3 : index
    %345 = vector.load %arg9[%c0_150, %c3] : memref<4x5xf32, #tpu.memory_space<vmem>>, vector<4x1xf32>
    %c0_151 = arith.constant 0 : index
    %c4 = arith.constant 4 : index
    %346 = vector.load %arg9[%c0_151, %c4] : memref<4x5xf32, #tpu.memory_space<vmem>>, vector<4x1xf32>
    %c0_152 = arith.constant 0 : index
    %c0_153 = arith.constant 0 : index
    %347 = vector.load %arg10[%c0_152, %c0_153] : memref<6x3xf32, #tpu.memory_space<vmem>>, vector<6x1xf32>
    %c0_154 = arith.constant 0 : index
    %c1_155 = arith.constant 1 : index
    %348 = vector.load %arg10[%c0_154, %c1_155] : memref<6x3xf32, #tpu.memory_space<vmem>>, vector<6x1xf32>
    %c0_156 = arith.constant 0 : index
    %c2_157 = arith.constant 2 : index
    %349 = vector.load %arg10[%c0_156, %c2_157] : memref<6x3xf32, #tpu.memory_space<vmem>>, vector<6x1xf32>
    %c0_158 = arith.constant 0 : index
    %c0_159 = arith.constant 0 : index
    %350 = vector.load %arg12[%c0_158, %c0_159] : memref<4x512xf32, #tpu.memory_space<vmem>>, vector<4x512xf32>
    %cst_160 = arith.constant 0.000000e+00 : f32
    %351 = vector.broadcast %cst_160 : f32 to vector<4x512xf32>
    %352 = arith.maximumf %350, %351 : vector<4x512xf32>
    %cst_161 = arith.constant dense<0.000000e+00> : vector<4xf32>
    %353 = vector.multi_reduction <add>, %352, %cst_161 [1] : vector<4x512xf32> to vector<4xf32>
    %354 = vector.shape_cast %353 : vector<4xf32> to vector<4x1xf32>
    %cst_162 = arith.constant 0.001953125 : f32
    %355 = vector.broadcast %cst_162 : f32 to vector<4x1xf32>
    %356 = arith.mulf %354, %355 : vector<4x1xf32>
    %357 = vector.broadcast %356 : vector<4x1xf32> to vector<4x512xf32>
    %358 = arith.subf %352, %357 : vector<4x512xf32>
    %359 = arith.mulf %358, %358 : vector<4x512xf32>
    %cst_163 = arith.constant dense<0.000000e+00> : vector<4xf32>
    %360 = vector.multi_reduction <add>, %359, %cst_163 [1] : vector<4x512xf32> to vector<4xf32>
    %361 = vector.shape_cast %360 : vector<4xf32> to vector<4x1xf32>
    %cst_164 = arith.constant 0.001953125 : f32
    %362 = vector.broadcast %cst_164 : f32 to vector<4x1xf32>
    %363 = arith.mulf %361, %362 : vector<4x1xf32>
    %cst_165 = arith.constant 9.99999974E-6 : f32
    %364 = vector.broadcast %cst_165 : f32 to vector<4x1xf32>
    %365 = arith.addf %363, %364 : vector<4x1xf32>
    %366 = math.rsqrt %365 : vector<4x1xf32>
    %367 = vector.broadcast %366 : vector<4x1xf32> to vector<4x512xf32>
    %368 = arith.mulf %358, %367 : vector<4x512xf32>
    %369 = vector.broadcast %342 : vector<4x1xf32> to vector<4x512xf32>
    %370 = arith.mulf %368, %369 : vector<4x512xf32>
    %371 = vector.broadcast %343 : vector<4x1xf32> to vector<4x512xf32>
    %372 = arith.addf %370, %371 : vector<4x512xf32>
    %c17_i32 = arith.constant 17 : i32
    %373 = tpu.dynamic_rotate %372 by %c17_i32 dim 1 : vector<4x512xf32>, i32 -> vector<4x512xf32>
    %374 = vector.broadcast %302 : vector<1x512xf32> to vector<4x512xf32>
    %375 = arith.mulf %373, %374 : vector<4x512xf32>
    %376 = vector.extract_strided_slice %340 {offsets = [0, 0], sizes = [4, 4], strides = [1, 1]} : vector<4x36xbf16> to vector<4x4xbf16>
    %377 = arith.truncf %375 : vector<4x512xf32> to vector<4x512xbf16>
    %cst_166 = arith.constant dense<0.000000e+00> : vector<4x512xf32>
    %378 = tpu.matmul %376, %377, %cst_166 {dimension_numbers = #tpu.dot_dimension_numbers<[1], [0], [0], [1], [0, 0, 1, 1], [], []>} : vector<4x4xbf16>, vector<4x512xbf16>, vector<4x512xf32> -> vector<4x512xf32>
    %c16_i32 = arith.constant 16 : i32
    %379 = tpu.dynamic_rotate %372 by %c16_i32 dim 1 : vector<4x512xf32>, i32 -> vector<4x512xf32>
    %380 = vector.broadcast %306 : vector<1x512xf32> to vector<4x512xf32>
    %381 = arith.mulf %379, %380 : vector<4x512xf32>
    %382 = vector.extract_strided_slice %340 {offsets = [0, 4], sizes = [4, 4], strides = [1, 1]} : vector<4x36xbf16> to vector<4x4xbf16>
    %383 = arith.truncf %381 : vector<4x512xf32> to vector<4x512xbf16>
    %cst_167 = arith.constant dense<0.000000e+00> : vector<4x512xf32>
    %384 = tpu.matmul %382, %383, %cst_167 {dimension_numbers = #tpu.dot_dimension_numbers<[1], [0], [0], [1], [0, 0, 1, 1], [], []>} : vector<4x4xbf16>, vector<4x512xbf16>, vector<4x512xf32> -> vector<4x512xf32>
    %385 = arith.addf %378, %384 : vector<4x512xf32>
    %c15_i32_168 = arith.constant 15 : i32
    %386 = tpu.dynamic_rotate %372 by %c15_i32_168 dim 1 : vector<4x512xf32>, i32 -> vector<4x512xf32>
    %387 = vector.broadcast %313 : vector<1x512xf32> to vector<4x512xf32>
    %388 = arith.mulf %386, %387 : vector<4x512xf32>
    %389 = vector.extract_strided_slice %340 {offsets = [0, 8], sizes = [4, 4], strides = [1, 1]} : vector<4x36xbf16> to vector<4x4xbf16>
    %390 = arith.truncf %388 : vector<4x512xf32> to vector<4x512xbf16>
    %cst_169 = arith.constant dense<0.000000e+00> : vector<4x512xf32>
    %391 = tpu.matmul %389, %390, %cst_169 {dimension_numbers = #tpu.dot_dimension_numbers<[1], [0], [0], [1], [0, 0, 1, 1], [], []>} : vector<4x4xbf16>, vector<4x512xbf16>, vector<4x512xf32> -> vector<4x512xf32>
    %392 = arith.addf %385, %391 : vector<4x512xf32>
    %c1_i32_170 = arith.constant 1 : i32
    %393 = tpu.dynamic_rotate %372 by %c1_i32_170 dim 1 : vector<4x512xf32>, i32 -> vector<4x512xf32>
    %394 = vector.broadcast %317 : vector<1x512xf32> to vector<4x512xf32>
    %395 = arith.mulf %393, %394 : vector<4x512xf32>
    %396 = vector.extract_strided_slice %340 {offsets = [0, 12], sizes = [4, 4], strides = [1, 1]} : vector<4x36xbf16> to vector<4x4xbf16>
    %397 = arith.truncf %395 : vector<4x512xf32> to vector<4x512xbf16>
    %cst_171 = arith.constant dense<0.000000e+00> : vector<4x512xf32>
    %398 = tpu.matmul %396, %397, %cst_171 {dimension_numbers = #tpu.dot_dimension_numbers<[1], [0], [0], [1], [0, 0, 1, 1], [], []>} : vector<4x4xbf16>, vector<4x512xbf16>, vector<4x512xf32> -> vector<4x512xf32>
    %399 = arith.addf %392, %398 : vector<4x512xf32>
    %400 = vector.extract_strided_slice %340 {offsets = [0, 16], sizes = [4, 4], strides = [1, 1]} : vector<4x36xbf16> to vector<4x4xbf16>
    %401 = arith.truncf %372 : vector<4x512xf32> to vector<4x512xbf16>
    %cst_172 = arith.constant dense<0.000000e+00> : vector<4x512xf32>
    %402 = tpu.matmul %400, %401, %cst_172 {dimension_numbers = #tpu.dot_dimension_numbers<[1], [0], [0], [1], [0, 0, 1, 1], [], []>} : vector<4x4xbf16>, vector<4x512xbf16>, vector<4x512xf32> -> vector<4x512xf32>
    %403 = arith.addf %399, %402 : vector<4x512xf32>
    %c511_i32 = arith.constant 511 : i32
    %404 = tpu.dynamic_rotate %372 by %c511_i32 dim 1 : vector<4x512xf32>, i32 -> vector<4x512xf32>
    %405 = vector.broadcast %321 : vector<1x512xf32> to vector<4x512xf32>
    %406 = arith.mulf %404, %405 : vector<4x512xf32>
    %407 = vector.extract_strided_slice %340 {offsets = [0, 20], sizes = [4, 4], strides = [1, 1]} : vector<4x36xbf16> to vector<4x4xbf16>
    %408 = arith.truncf %406 : vector<4x512xf32> to vector<4x512xbf16>
    %cst_173 = arith.constant dense<0.000000e+00> : vector<4x512xf32>
    %409 = tpu.matmul %407, %408, %cst_173 {dimension_numbers = #tpu.dot_dimension_numbers<[1], [0], [0], [1], [0, 0, 1, 1], [], []>} : vector<4x4xbf16>, vector<4x512xbf16>, vector<4x512xf32> -> vector<4x512xf32>
    %410 = arith.addf %403, %409 : vector<4x512xf32>
    %c497_i32 = arith.constant 497 : i32
    %411 = tpu.dynamic_rotate %372 by %c497_i32 dim 1 : vector<4x512xf32>, i32 -> vector<4x512xf32>
    %412 = vector.broadcast %328 : vector<1x512xf32> to vector<4x512xf32>
    %413 = arith.mulf %411, %412 : vector<4x512xf32>
    %414 = vector.extract_strided_slice %340 {offsets = [0, 24], sizes = [4, 4], strides = [1, 1]} : vector<4x36xbf16> to vector<4x4xbf16>
    %415 = arith.truncf %413 : vector<4x512xf32> to vector<4x512xbf16>
    %cst_174 = arith.constant dense<0.000000e+00> : vector<4x512xf32>
    %416 = tpu.matmul %414, %415, %cst_174 {dimension_numbers = #tpu.dot_dimension_numbers<[1], [0], [0], [1], [0, 0, 1, 1], [], []>} : vector<4x4xbf16>, vector<4x512xbf16>, vector<4x512xf32> -> vector<4x512xf32>
    %417 = arith.addf %410, %416 : vector<4x512xf32>
    %c496_i32 = arith.constant 496 : i32
    %418 = tpu.dynamic_rotate %372 by %c496_i32 dim 1 : vector<4x512xf32>, i32 -> vector<4x512xf32>
    %419 = vector.broadcast %332 : vector<1x512xf32> to vector<4x512xf32>
    %420 = arith.mulf %418, %419 : vector<4x512xf32>
    %421 = vector.extract_strided_slice %340 {offsets = [0, 28], sizes = [4, 4], strides = [1, 1]} : vector<4x36xbf16> to vector<4x4xbf16>
    %422 = arith.truncf %420 : vector<4x512xf32> to vector<4x512xbf16>
    %cst_175 = arith.constant dense<0.000000e+00> : vector<4x512xf32>
    %423 = tpu.matmul %421, %422, %cst_175 {dimension_numbers = #tpu.dot_dimension_numbers<[1], [0], [0], [1], [0, 0, 1, 1], [], []>} : vector<4x4xbf16>, vector<4x512xbf16>, vector<4x512xf32> -> vector<4x512xf32>
    %424 = arith.addf %417, %423 : vector<4x512xf32>
    %c495_i32 = arith.constant 495 : i32
    %425 = tpu.dynamic_rotate %372 by %c495_i32 dim 1 : vector<4x512xf32>, i32 -> vector<4x512xf32>
    %426 = vector.broadcast %339 : vector<1x512xf32> to vector<4x512xf32>
    %427 = arith.mulf %425, %426 : vector<4x512xf32>
    %428 = vector.extract_strided_slice %340 {offsets = [0, 32], sizes = [4, 4], strides = [1, 1]} : vector<4x36xbf16> to vector<4x4xbf16>
    %429 = arith.truncf %427 : vector<4x512xf32> to vector<4x512xbf16>
    %cst_176 = arith.constant dense<0.000000e+00> : vector<4x512xf32>
    %430 = tpu.matmul %428, %429, %cst_176 {dimension_numbers = #tpu.dot_dimension_numbers<[1], [0], [0], [1], [0, 0, 1, 1], [], []>} : vector<4x4xbf16>, vector<4x512xbf16>, vector<4x512xf32> -> vector<4x512xf32>
    %431 = arith.addf %424, %430 : vector<4x512xf32>
    %432 = vector.broadcast %344 : vector<4x1xf32> to vector<4x512xf32>
    %433 = arith.addf %431, %432 : vector<4x512xf32>
    %cst_177 = arith.constant dense<0.000000e+00> : vector<4xf32>
    %434 = vector.multi_reduction <add>, %433, %cst_177 [1] : vector<4x512xf32> to vector<4xf32>
    %435 = vector.shape_cast %434 : vector<4xf32> to vector<4x1xf32>
    %cst_178 = arith.constant 0.001953125 : f32
    %436 = vector.broadcast %cst_178 : f32 to vector<4x1xf32>
    %437 = arith.mulf %435, %436 : vector<4x1xf32>
    %438 = vector.broadcast %437 : vector<4x1xf32> to vector<4x512xf32>
    %439 = arith.subf %433, %438 : vector<4x512xf32>
    %440 = arith.mulf %439, %439 : vector<4x512xf32>
    %cst_179 = arith.constant dense<0.000000e+00> : vector<4xf32>
    %441 = vector.multi_reduction <add>, %440, %cst_179 [1] : vector<4x512xf32> to vector<4xf32>
    %442 = vector.shape_cast %441 : vector<4xf32> to vector<4x1xf32>
    %cst_180 = arith.constant 0.001953125 : f32
    %443 = vector.broadcast %cst_180 : f32 to vector<4x1xf32>
    %444 = arith.mulf %442, %443 : vector<4x1xf32>
    %cst_181 = arith.constant 9.99999974E-6 : f32
    %445 = vector.broadcast %cst_181 : f32 to vector<4x1xf32>
    %446 = arith.addf %444, %445 : vector<4x1xf32>
    %447 = math.rsqrt %446 : vector<4x1xf32>
    %448 = vector.broadcast %447 : vector<4x1xf32> to vector<4x512xf32>
    %449 = arith.mulf %439, %448 : vector<4x512xf32>
    %450 = vector.broadcast %345 : vector<4x1xf32> to vector<4x512xf32>
    %451 = arith.mulf %449, %450 : vector<4x512xf32>
    %452 = vector.broadcast %346 : vector<4x1xf32> to vector<4x512xf32>
    %453 = arith.addf %451, %452 : vector<4x512xf32>
    %cst_182 = arith.constant 0.000000e+00 : f32
    %454 = vector.broadcast %cst_182 : f32 to vector<4x512xf32>
    %455 = arith.maximumf %453, %454 : vector<4x512xf32>
    %c17_i32_183 = arith.constant 17 : i32
    %456 = tpu.dynamic_rotate %455 by %c17_i32_183 dim 1 : vector<4x512xf32>, i32 -> vector<4x512xf32>
    %457 = vector.broadcast %302 : vector<1x512xf32> to vector<4x512xf32>
    %458 = arith.mulf %456, %457 : vector<4x512xf32>
    %459 = vector.extract_strided_slice %341 {offsets = [0, 0], sizes = [6, 4], strides = [1, 1]} : vector<6x36xbf16> to vector<6x4xbf16>
    %460 = arith.truncf %458 : vector<4x512xf32> to vector<4x512xbf16>
    %cst_184 = arith.constant dense<0.000000e+00> : vector<6x512xf32>
    %461 = tpu.matmul %459, %460, %cst_184 {dimension_numbers = #tpu.dot_dimension_numbers<[1], [0], [0], [1], [0, 0, 1, 1], [], []>} : vector<6x4xbf16>, vector<4x512xbf16>, vector<6x512xf32> -> vector<6x512xf32>
    %c16_i32_185 = arith.constant 16 : i32
    %462 = tpu.dynamic_rotate %455 by %c16_i32_185 dim 1 : vector<4x512xf32>, i32 -> vector<4x512xf32>
    %463 = vector.broadcast %306 : vector<1x512xf32> to vector<4x512xf32>
    %464 = arith.mulf %462, %463 : vector<4x512xf32>
    %465 = vector.extract_strided_slice %341 {offsets = [0, 4], sizes = [6, 4], strides = [1, 1]} : vector<6x36xbf16> to vector<6x4xbf16>
    %466 = arith.truncf %464 : vector<4x512xf32> to vector<4x512xbf16>
    %cst_186 = arith.constant dense<0.000000e+00> : vector<6x512xf32>
    %467 = tpu.matmul %465, %466, %cst_186 {dimension_numbers = #tpu.dot_dimension_numbers<[1], [0], [0], [1], [0, 0, 1, 1], [], []>} : vector<6x4xbf16>, vector<4x512xbf16>, vector<6x512xf32> -> vector<6x512xf32>
    %468 = arith.addf %461, %467 : vector<6x512xf32>
    %c15_i32_187 = arith.constant 15 : i32
    %469 = tpu.dynamic_rotate %455 by %c15_i32_187 dim 1 : vector<4x512xf32>, i32 -> vector<4x512xf32>
    %470 = vector.broadcast %313 : vector<1x512xf32> to vector<4x512xf32>
    %471 = arith.mulf %469, %470 : vector<4x512xf32>
    %472 = vector.extract_strided_slice %341 {offsets = [0, 8], sizes = [6, 4], strides = [1, 1]} : vector<6x36xbf16> to vector<6x4xbf16>
    %473 = arith.truncf %471 : vector<4x512xf32> to vector<4x512xbf16>
    %cst_188 = arith.constant dense<0.000000e+00> : vector<6x512xf32>
    %474 = tpu.matmul %472, %473, %cst_188 {dimension_numbers = #tpu.dot_dimension_numbers<[1], [0], [0], [1], [0, 0, 1, 1], [], []>} : vector<6x4xbf16>, vector<4x512xbf16>, vector<6x512xf32> -> vector<6x512xf32>
    %475 = arith.addf %468, %474 : vector<6x512xf32>
    %c1_i32_189 = arith.constant 1 : i32
    %476 = tpu.dynamic_rotate %455 by %c1_i32_189 dim 1 : vector<4x512xf32>, i32 -> vector<4x512xf32>
    %477 = vector.broadcast %317 : vector<1x512xf32> to vector<4x512xf32>
    %478 = arith.mulf %476, %477 : vector<4x512xf32>
    %479 = vector.extract_strided_slice %341 {offsets = [0, 12], sizes = [6, 4], strides = [1, 1]} : vector<6x36xbf16> to vector<6x4xbf16>
    %480 = arith.truncf %478 : vector<4x512xf32> to vector<4x512xbf16>
    %cst_190 = arith.constant dense<0.000000e+00> : vector<6x512xf32>
    %481 = tpu.matmul %479, %480, %cst_190 {dimension_numbers = #tpu.dot_dimension_numbers<[1], [0], [0], [1], [0, 0, 1, 1], [], []>} : vector<6x4xbf16>, vector<4x512xbf16>, vector<6x512xf32> -> vector<6x512xf32>
    %482 = arith.addf %475, %481 : vector<6x512xf32>
    %483 = vector.extract_strided_slice %341 {offsets = [0, 16], sizes = [6, 4], strides = [1, 1]} : vector<6x36xbf16> to vector<6x4xbf16>
    %484 = arith.truncf %455 : vector<4x512xf32> to vector<4x512xbf16>
    %cst_191 = arith.constant dense<0.000000e+00> : vector<6x512xf32>
    %485 = tpu.matmul %483, %484, %cst_191 {dimension_numbers = #tpu.dot_dimension_numbers<[1], [0], [0], [1], [0, 0, 1, 1], [], []>} : vector<6x4xbf16>, vector<4x512xbf16>, vector<6x512xf32> -> vector<6x512xf32>
    %486 = arith.addf %482, %485 : vector<6x512xf32>
    %c511_i32_192 = arith.constant 511 : i32
    %487 = tpu.dynamic_rotate %455 by %c511_i32_192 dim 1 : vector<4x512xf32>, i32 -> vector<4x512xf32>
    %488 = vector.broadcast %321 : vector<1x512xf32> to vector<4x512xf32>
    %489 = arith.mulf %487, %488 : vector<4x512xf32>
    %490 = vector.extract_strided_slice %341 {offsets = [0, 20], sizes = [6, 4], strides = [1, 1]} : vector<6x36xbf16> to vector<6x4xbf16>
    %491 = arith.truncf %489 : vector<4x512xf32> to vector<4x512xbf16>
    %cst_193 = arith.constant dense<0.000000e+00> : vector<6x512xf32>
    %492 = tpu.matmul %490, %491, %cst_193 {dimension_numbers = #tpu.dot_dimension_numbers<[1], [0], [0], [1], [0, 0, 1, 1], [], []>} : vector<6x4xbf16>, vector<4x512xbf16>, vector<6x512xf32> -> vector<6x512xf32>
    %493 = arith.addf %486, %492 : vector<6x512xf32>
    %c497_i32_194 = arith.constant 497 : i32
    %494 = tpu.dynamic_rotate %455 by %c497_i32_194 dim 1 : vector<4x512xf32>, i32 -> vector<4x512xf32>
    %495 = vector.broadcast %328 : vector<1x512xf32> to vector<4x512xf32>
    %496 = arith.mulf %494, %495 : vector<4x512xf32>
    %497 = vector.extract_strided_slice %341 {offsets = [0, 24], sizes = [6, 4], strides = [1, 1]} : vector<6x36xbf16> to vector<6x4xbf16>
    %498 = arith.truncf %496 : vector<4x512xf32> to vector<4x512xbf16>
    %cst_195 = arith.constant dense<0.000000e+00> : vector<6x512xf32>
    %499 = tpu.matmul %497, %498, %cst_195 {dimension_numbers = #tpu.dot_dimension_numbers<[1], [0], [0], [1], [0, 0, 1, 1], [], []>} : vector<6x4xbf16>, vector<4x512xbf16>, vector<6x512xf32> -> vector<6x512xf32>
    %500 = arith.addf %493, %499 : vector<6x512xf32>
    %c496_i32_196 = arith.constant 496 : i32
    %501 = tpu.dynamic_rotate %455 by %c496_i32_196 dim 1 : vector<4x512xf32>, i32 -> vector<4x512xf32>
    %502 = vector.broadcast %332 : vector<1x512xf32> to vector<4x512xf32>
    %503 = arith.mulf %501, %502 : vector<4x512xf32>
    %504 = vector.extract_strided_slice %341 {offsets = [0, 28], sizes = [6, 4], strides = [1, 1]} : vector<6x36xbf16> to vector<6x4xbf16>
    %505 = arith.truncf %503 : vector<4x512xf32> to vector<4x512xbf16>
    %cst_197 = arith.constant dense<0.000000e+00> : vector<6x512xf32>
    %506 = tpu.matmul %504, %505, %cst_197 {dimension_numbers = #tpu.dot_dimension_numbers<[1], [0], [0], [1], [0, 0, 1, 1], [], []>} : vector<6x4xbf16>, vector<4x512xbf16>, vector<6x512xf32> -> vector<6x512xf32>
    %507 = arith.addf %500, %506 : vector<6x512xf32>
    %c495_i32_198 = arith.constant 495 : i32
    %508 = tpu.dynamic_rotate %455 by %c495_i32_198 dim 1 : vector<4x512xf32>, i32 -> vector<4x512xf32>
    %509 = vector.broadcast %339 : vector<1x512xf32> to vector<4x512xf32>
    %510 = arith.mulf %508, %509 : vector<4x512xf32>
    %511 = vector.extract_strided_slice %341 {offsets = [0, 32], sizes = [6, 4], strides = [1, 1]} : vector<6x36xbf16> to vector<6x4xbf16>
    %512 = arith.truncf %510 : vector<4x512xf32> to vector<4x512xbf16>
    %cst_199 = arith.constant dense<0.000000e+00> : vector<6x512xf32>
    %513 = tpu.matmul %511, %512, %cst_199 {dimension_numbers = #tpu.dot_dimension_numbers<[1], [0], [0], [1], [0, 0, 1, 1], [], []>} : vector<6x4xbf16>, vector<4x512xbf16>, vector<6x512xf32> -> vector<6x512xf32>
    %514 = arith.addf %507, %513 : vector<6x512xf32>
    %515 = vector.broadcast %347 : vector<6x1xf32> to vector<6x512xf32>
    %516 = arith.addf %514, %515 : vector<6x512xf32>
    %cst_200 = arith.constant dense<0.000000e+00> : vector<6xf32>
    %517 = vector.multi_reduction <add>, %516, %cst_200 [1] : vector<6x512xf32> to vector<6xf32>
    %518 = vector.shape_cast %517 : vector<6xf32> to vector<6x1xf32>
    %cst_201 = arith.constant 0.001953125 : f32
    %519 = vector.broadcast %cst_201 : f32 to vector<6x1xf32>
    %520 = arith.mulf %518, %519 : vector<6x1xf32>
    %521 = vector.broadcast %520 : vector<6x1xf32> to vector<6x512xf32>
    %522 = arith.subf %516, %521 : vector<6x512xf32>
    %523 = arith.mulf %522, %522 : vector<6x512xf32>
    %cst_202 = arith.constant dense<0.000000e+00> : vector<6xf32>
    %524 = vector.multi_reduction <add>, %523, %cst_202 [1] : vector<6x512xf32> to vector<6xf32>
    %525 = vector.shape_cast %524 : vector<6xf32> to vector<6x1xf32>
    %cst_203 = arith.constant 0.001953125 : f32
    %526 = vector.broadcast %cst_203 : f32 to vector<6x1xf32>
    %527 = arith.mulf %525, %526 : vector<6x1xf32>
    %cst_204 = arith.constant 9.99999974E-6 : f32
    %528 = vector.broadcast %cst_204 : f32 to vector<6x1xf32>
    %529 = arith.addf %527, %528 : vector<6x1xf32>
    %530 = math.rsqrt %529 : vector<6x1xf32>
    %531 = vector.broadcast %530 : vector<6x1xf32> to vector<6x512xf32>
    %532 = arith.mulf %522, %531 : vector<6x512xf32>
    %533 = vector.broadcast %348 : vector<6x1xf32> to vector<6x512xf32>
    %534 = arith.mulf %532, %533 : vector<6x512xf32>
    %535 = vector.broadcast %349 : vector<6x1xf32> to vector<6x512xf32>
    %536 = arith.addf %534, %535 : vector<6x512xf32>
    %cst_205 = arith.constant 0.000000e+00 : f32
    %537 = vector.broadcast %cst_205 : f32 to vector<6x512xf32>
    %538 = arith.maximumf %536, %537 : vector<6x512xf32>
    %c0_206 = arith.constant 0 : index
    %c0_207 = arith.constant 0 : index
    %539 = vector.load %arg11[%c0_206, %c0_207] : memref<6x512xf32, #tpu.memory_space<vmem>>, vector<6x512xf32>
    tpu.vector_store %arg11[%c0_206, %c0_207], %538 {strides = array<i32>} : memref<6x512xf32, #tpu.memory_space<vmem>>, vector<6x512xf32>,
    return
  }
}

</mosaic_0001>

<llo_original>
// kernel: tpu_custom_call.1
$region0: #{tpu_custom_call.1}
  #allocation0 [shape = 'u32[]', space=smem, size = 0x4, offset = 0x4, fixed_abs, tag = 'smem constant byte address 0x4 - core index']
  #allocation1 [shape = 'u32[144,128]{1,0:T(1,128)}', space=vmem, size = 0x12000, scoped, tag = 'internal scratch']
  #allocation2 [shape = 'f32[4,512]{1,0:T(4,128)}', space=vmem, size = 0x2000, scoped, tag = 'scratch operand']
  %s0 = inlined_call_operand.vmem [shape: f32[64,8], index: 0, kind: input, shape index: {}]
  %s1 = inlined_call_operand.vmem [shape: f32[4,512], index: 1, kind: input, shape index: {}]
  %s2 = inlined_call_operand.vmem [shape: f32[8,16], index: 2, kind: input, shape index: {}]
  %s3 = inlined_call_operand.vmem [shape: f32[256,96], index: 3, kind: input, shape index: {}]
  %s4 = inlined_call_operand.vmem [shape: s32[2,512], index: 4, kind: input, shape index: {}]
  %s5 = inlined_call_operand.vmem [shape: f32[96,8], index: 5, kind: input, shape index: {}]
  %s6 = inlined_call_operand.vmem [shape: f32[3,8], index: 6, kind: input, shape index: {}]
  %s7 = inlined_call_operand.vmem [shape: bf16[4,36], index: 7, kind: input, shape index: {}]
  %s8 = inlined_call_operand.vmem [shape: bf16[6,36], index: 8, kind: input, shape index: {}]
  %s9 = inlined_call_operand.vmem [shape: f32[4,5], index: 9, kind: input, shape index: {}]
  %s10 = inlined_call_operand.vmem [shape: f32[6,3], index: 10, kind: input, shape index: {}]
  %s11 = inlined_call_operand.hbm [shape: f32[6,512], index: 11, kind: output, shape index: {}]
  %s12 = sld [smem:[#allocation0]]
  $region54: #{tpu_custom_call.1} parent=0
    _
  %s14 = ssub.s32 1, %s12
  %s15 = scalar_select 0, %s14, %s12
  $region1: #{tpu_custom_call.1} parent=0
    #allocation3 [shape = 'u8[16384]{0}', space=vmem, size = 0x4000, scoped, tag = 'output window, operand 0, single buffered']
    #allocation4 [shape = 's32[1]{0}', space=sflag, size = 0x4, scoped, tag = 'scoped memory for tpu_custom_call.1']
    %16 = vsyncpa [#allocation4], 0
    // Predicated region
    $region2: #{tpu_custom_call.1} parent=1 // pred_check
      _
    $region3: #{tpu_custom_call.1} parent=1 // pred_check_branch
      %18 = sbr.rel (0) target = $region5
    $region4: #{tpu_custom_call.1} parent=1 // pred_region
      _
    $region5: #{tpu_custom_call.1} parent=1 // pred_fallthru
      _
    // Predicated region
    $region6: #{tpu_custom_call.1} parent=1 // pred_check
      _
    $region7: #{tpu_custom_call.1} parent=1 // pred_check_branch
      %20 = sbr.rel (0) target = $region9
    $region8: #{tpu_custom_call.1} parent=1 // pred_region
      _
    $region9: #{tpu_custom_call.1} parent=1 // pred_fallthru
      _
    // Predicated region
    $region10: #{tpu_custom_call.1} parent=1 // pred_check
      _
    $region11: #{tpu_custom_call.1} parent=1 // pred_check_branch
      %22 = sbr.rel (0) target = $region13
    $region12: #{tpu_custom_call.1} parent=1 // pred_region
      _
    $region13: #{tpu_custom_call.1} parent=1 // pred_fallthru
      _
    // Predicated region
    $region14: #{tpu_custom_call.1} parent=1 // pred_check
      _
    $region15: #{tpu_custom_call.1} parent=1 // pred_check_branch
      %24 = sbr.rel (0) target = $region17
    $region16: #{tpu_custom_call.1} parent=1 // pred_region
      _
    $region17: #{tpu_custom_call.1} parent=1 // pred_fallthru
      _
    // Predicated region
    $region18: #{tpu_custom_call.1} parent=1 // pred_check
      _
    $region19: #{tpu_custom_call.1} parent=1 // pred_check_branch
      %26 = sbr.rel (0) target = $region21
    $region20: #{tpu_custom_call.1} parent=1 // pred_region
      _
    $region21: #{tpu_custom_call.1} parent=1 // pred_fallthru
      _
    // Predicated region
    $region22: #{tpu_custom_call.1} parent=1 // pred_check
      _
    $region23: #{tpu_custom_call.1} parent=1 // pred_check_branch
      %28 = sbr.rel (0) target = $region25
    $region24: #{tpu_custom_call.1} parent=1 // pred_region
      _
    $region25: #{tpu_custom_call.1} parent=1 // pred_fallthru
      _
    // Predicated region
    $region26: #{tpu_custom_call.1} parent=1 // pred_check
      _
    $region27: #{tpu_custom_call.1} parent=1 // pred_check_branch
      %30 = sbr.rel (0) target = $region29
    $region28: #{tpu_custom_call.1} parent=1 // pred_region
      _
    $region29: #{tpu_custom_call.1} parent=1 // pred_fallthru
      _
    // Predicated region
    $region30: #{tpu_custom_call.1} parent=1 // pred_check
      _
    $region31: #{tpu_custom_call.1} parent=1 // pred_check_branch
      %32 = sbr.rel (0) target = $region33
    $region32: #{tpu_custom_call.1} parent=1 // pred_region
      _
    $region33: #{tpu_custom_call.1} parent=1 // pred_fallthru
      _
    // Predicated region
    $region34: #{tpu_custom_call.1} parent=1 // pred_check
      _
    $region35: #{tpu_custom_call.1} parent=1 // pred_check_branch
      %34 = sbr.rel (0) target = $region37
    $region36: #{tpu_custom_call.1} parent=1 // pred_region
      _
    $region37: #{tpu_custom_call.1} parent=1 // pred_fallthru
      _
    // Predicated region
    $region38: #{tpu_custom_call.1} parent=1 // pred_check
      _
    $region39: #{tpu_custom_call.1} parent=1 // pred_check_branch
      %36 = sbr.rel (0) target = $region41
    $region40: #{tpu_custom_call.1} parent=1 // pred_region
      _
    $region41: #{tpu_custom_call.1} parent=1 // pred_fallthru
      _
    // Predicated region
    $region42: #{tpu_custom_call.1} parent=1 // pred_check
      _
    $region43: #{tpu_custom_call.1} parent=1 // pred_check_branch
      %38 = sbr.rel (0) target = $region45
    $region44: #{tpu_custom_call.1} parent=1 // pred_region
      _
    $region45: #{tpu_custom_call.1} parent=1 // pred_fallthru
      _
    %v40 = vld [vmem:[%s0] sm:$0xff]
    %v41 = vld [vmem:[%s0 + $0x8] sm:$0xff]
    %v42 = vld [vmem:[%s0 + $0x10] sm:$0xff]
    %v43 = vld [vmem:[%s0 + $0x18] sm:$0xff]
    %v44 = vld [vmem:[%s0 + $0x20] sm:$0xff]
    %v45 = vld [vmem:[%s0 + $0x28] sm:$0xff]
    %v46 = vld [vmem:[%s0 + $0x30] sm:$0xff]
    %v47 = vld [vmem:[%s0 + $0x38] sm:$0xff]
    %v48 = vld [vmem:[%s2] sm:$0xff]
    %vm49 = vcmask 64512
    %v51 = vsel %vm49, %v40, 0
    %v54 = vsel %vm49, %v41, 0
    %v57 = vsel %vm49, %v42, 0
    %v60 = vsel %vm49, %v43, 0
    %v63 = vsel %vm49, %v44, 0
    %v66 = vsel %vm49, %v45, 0
    %v69 = vsel %vm49, %v46, 0
    %v72 = vsel %vm49, %v47, 0
    %74 = vmatprep.subr.mxu0 0.0
    %75 = vmatpush1.msra.mxu0 0.0
    %76 = vmatprep.subr.mxu0 0.0
    %77 = vmatpush1.msra.mxu0 0.0
    %78 = vmatprep.subr.mxu0 0.0
    %79 = vmatpush1.msra.mxu0 0.0
    %80 = vmatprep.subr.mxu0 0.0
    %81 = vmatpush1.msra.mxu0 0.0
    %82 = vmatprep.subr.mxu0 0.0
    %83 = vmatpush1.msra.mxu0 0.0
    %84 = vmatprep.subr.mxu0 0.0
    %85 = vmatpush1.msra.mxu0 0.0
    %86 = vmatprep.subr.mxu0 0.0
    %87 = vmatpush1.msra.mxu0 0.0
    %88 = vmatprep.subr.mxu0 0.0
    %89 = vmatpush1.msra.mxu0 0.0
    %90 = vmatprep.subr.mxu0 0.0
    %91 = vmatpush1.msra.mxu0 0.0
    %92 = vmatprep.subr.mxu0 0.0
    %93 = vmatpush1.msra.mxu0 0.0
    %94 = vmatprep.subr.mxu0 0.0
    %95 = vmatpush1.msra.mxu0 0.0
    %96 = vmatprep.subr.mxu0 0.0
    %97 = vmatpush1.msra.mxu0 0.0
    %98 = vmatprep.subr.mxu0 0.0
    %99 = vmatpush1.msra.mxu0 0.0
    %100 = vmatprep.subr.mxu0 0.0
    %101 = vmatpush1.msra.mxu0 0.0
    %102 = vmatprep.subr.mxu0 0.0
    %103 = vmatpush1.msra.mxu0 0.0
    %104 = vmatprep.subr.mxu0 0.0
    %105 = vmatpush1.msra.mxu0 %v48
    %106 = vmatprep.subr.mxu0 0.0
    %107 = vmatpush2.msra.mxu0 0.0
    %108 = vmatprep.subr.mxu0 0.0
    %109 = vmatpush2.msra.mxu0 0.0
    %110 = vmatprep.subr.mxu0 0.0
    %111 = vmatpush2.msra.mxu0 0.0
    %112 = vmatprep.subr.mxu0 0.0
    %113 = vmatpush2.msra.mxu0 0.0
    %114 = vmatprep.subr.mxu0 0.0
    %115 = vmatpush2.msra.mxu0 0.0
    %116 = vmatprep.subr.mxu0 0.0
    %117 = vmatpush2.msra.mxu0 0.0
    %118 = vmatprep.subr.mxu0 0.0
    %119 = vmatpush2.msra.mxu0 0.0
    %120 = vmatprep.subr.mxu0 0.0
    %121 = vmatpush2.msra.mxu0 0.0
    %122 = vmatprep.subr.mxu0 0.0
    %123 = vmatpush2.msra.mxu0 0.0
    %124 = vmatprep.subr.mxu0 0.0
    %125 = vmatpush2.msra.mxu0 0.0
    %126 = vmatprep.subr.mxu0 0.0
    %127 = vmatpush2.msra.mxu0 0.0
    %128 = vmatprep.subr.mxu0 0.0
    %129 = vmatpush2.msra.mxu0 0.0
    %130 = vmatprep.subr.mxu0 0.0
    %131 = vmatpush2.msra.mxu0 0.0
    %132 = vmatprep.subr.mxu0 0.0
    %133 = vmatpush2.msra.mxu0 0.0
    %134 = vmatprep.subr.mxu0 0.0
    %135 = vmatpush2.msra.mxu0 0.0
    %136 = vmatprep.subr.mxu0 0.0
    %137 = vmatpush2.msra.mxu0 0.0
    %138 = vmatprep.mubr.f32.mxu0 0.0
    %139 = vmatmul.mubr.f32.gmra.mxu0 %v51
    %v140 = vpop.f32.mrf.mxu0
    %v141 = vadd.f32 0.0, %v140
    %v142 = vpop.f32.mrf.mxu0
    %143 = vmatprep.mubr.f32.mxu0 0.0
    %144 = vmatmul.mubr.f32.gmra.mxu0 %v54
    %v145 = vpop.f32.mrf.mxu0
    %v146 = vadd.f32 0.0, %v145
    %v147 = vpop.f32.mrf.mxu0
    %148 = vmatprep.mubr.f32.mxu0 0.0
    %149 = vmatmul.mubr.f32.gmra.mxu0 %v57
    %v150 = vpop.f32.mrf.mxu0
    %v151 = vadd.f32 0.0, %v150
    %v152 = vpop.f32.mrf.mxu0
    %153 = vmatprep.mubr.f32.mxu0 0.0
    %154 = vmatmul.mubr.f32.gmra.mxu0 %v60
    %v155 = vpop.f32.mrf.mxu0
    %v156 = vadd.f32 0.0, %v155
    %v157 = vpop.f32.mrf.mxu0
    %158 = vmatprep.mubr.f32.mxu0 0.0
    %159 = vmatmul.mubr.f32.gmra.mxu0 %v63
    %v160 = vpop.f32.mrf.mxu0
    %v161 = vadd.f32 0.0, %v160
    %v162 = vpop.f32.mrf.mxu0
    %163 = vmatprep.mubr.f32.mxu0 0.0
    %164 = vmatmul.mubr.f32.gmra.mxu0 %v66
    %v165 = vpop.f32.mrf.mxu0
    %v166 = vadd.f32 0.0, %v165
    %v167 = vpop.f32.mrf.mxu0
    %168 = vmatprep.mubr.f32.mxu0 0.0
    %169 = vmatmul.mubr.f32.gmra.mxu0 %v69
    %v170 = vpop.f32.mrf.mxu0
    %v171 = vadd.f32 0.0, %v170
    %v172 = vpop.f32.mrf.mxu0
    %173 = vmatprep.mubr.f32.mxu0 0.0
    %174 = vmatmul.mubr.f32.gmra.mxu0 %v72
    %v175 = vpop.f32.mrf.mxu0
    %v176 = vadd.f32 0.0, %v175
    %v177 = vpop.f32.mrf.mxu0
    %178 = vdwg.mxu0
    %vm179 = vcmask 125952
    %180 = vst.msk [vmem:[#allocation2] sm:$0xf] %vm179, %v141
    %v181 = vmul.f32 %v141, 0.53333336
    %v182 = vmul.f32 %v141, 0.46666667
    %v184 = vrot.slane %v182, 4
    %v186 = vadd.f32 %v181, %v184
    %188 = vrot.lane.b32.xlu0 %v186, 16
    %v189 = vpop.permute.xlu0 %188
    %vm191 = vcmask 257152
    %192 = vst.msk [vmem:[#allocation2] sm:$0xf] %vm191, %v189
    %v193 = vmul.f32 %v141, 0.06666667
    %v194 = vmul.f32 %v141, 0.93333334
    %v196 = vrot.slane %v194, 4
    %v198 = vadd.f32 %v193, %v196
    %200 = vrot.lane.b32.xlu0 %v198, 32
    %v201 = vpop.permute.xlu0 %200
    %vm203 = vcmask 388352
    %204 = vst.msk [vmem:[#allocation2] sm:$0xf] %vm203, %v201
    %v205 = vmul.f32 %v141, 0.6
    %v206 = vmul.f32 %v146, 0.4
    %v208 = vrot.slane %v206, 4
    %v210 = vadd.f32 %v205, %v208
    %v212 = vcombine.high %v210, %v210
    %213 = vrot.lane.b32.xlu0 %v212, 48
    %v214 = vpop.permute.xlu0 %213
    %vm216 = vcmask 519552
    %217 = vst.msk [vmem:[#allocation2] sm:$0xf] %vm216, %v214
    %v218 = vmul.f32 %v141, 0.13333334
    %v219 = vmul.f32 %v146, 0.8666667
    %v221 = vrot.slane %v219, 4
    %v223 = vadd.f32 %v218, %v221
    %v225 = vcombine.high %v223, %v223
    %226 = vrot.lane.b32.xlu0 %v225, 64
    %v227 = vpop.permute.xlu0 %226
    %vm229 = vcmask 650752
    %230 = vst.msk [vmem:[#allocation2] sm:$0xf] %vm229, %v227
    %v231 = vmul.f32 %v146, 0.6666667
    %v232 = vmul.f32 %v146, 0.33333334
    %v234 = vrot.slane %v232, 4
    %v236 = vadd.f32 %v231, %v234
    %238 = vrot.lane.b32.xlu0 %v236, 80
    %v239 = vpop.permute.xlu0 %238
    %vm241 = vcmask 781952
    %242 = vst.msk [vmem:[#allocation2] sm:$0xf] %vm241, %v239
    %v243 = vmul.f32 %v146, 0.2
    %v244 = vmul.f32 %v146, 0.8
    %v246 = vrot.slane %v244, 4
    %v248 = vadd.f32 %v243, %v246
    %250 = vrot.lane.b32.xlu0 %v248, 96
    %v251 = vpop.permute.xlu0 %250
    %vm253 = vcmask 913152
    %254 = vst.msk [vmem:[#allocation2] sm:$0xf] %vm253, %v251
    %v255 = vmul.f32 %v146, 0.73333335
    %v256 = vmul.f32 %v151, 0.26666668
    %v258 = vrot.slane %v256, 4
    %v260 = vadd.f32 %v255, %v258
    %v262 = vcombine.high %v260, %v260
    %263 = vrot.lane.b32.xlu0 %v262, 112
    %v264 = vpop.permute.xlu0 %263
    %vm266 = vcmask 1044352
    %267 = vst.msk [vmem:[#allocation2] sm:$0xf] %vm266, %v264
    %v268 = vmul.f32 %v146, 0.26666668
    %v269 = vmul.f32 %v151, 0.73333335
    %v271 = vrot.slane %v269, 4
    %v273 = vadd.f32 %v268, %v271
    %v275 = vcombine.high %v273, %v273
    %277 = vst.msk [vmem:[#allocation2 + $0x4] sm:$0xf] %vm179, %v275
    %v278 = vmul.f32 %v151, 0.8
    %v279 = vmul.f32 %v151, 0.2
    %v281 = vrot.slane %v279, 4
    %v283 = vadd.f32 %v278, %v281
    %285 = vrot.lane.b32.xlu0 %v283, 16
    %v286 = vpop.permute.xlu0 %285
    %288 = vst.msk [vmem:[#allocation2 + $0x4] sm:$0xf] %vm191, %v286
    %v289 = vmul.f32 %v151, 0.33333334
    %v290 = vmul.f32 %v151, 0.6666667
    %v292 = vrot.slane %v290, 4
    %v294 = vadd.f32 %v289, %v292
    %296 = vrot.lane.b32.xlu0 %v294, 32
    %v297 = vpop.permute.xlu0 %296
    %299 = vst.msk [vmem:[#allocation2 + $0x4] sm:$0xf] %vm203, %v297
    %v300 = vmul.f32 %v151, 0.8666667
    %v301 = vmul.f32 %v156, 0.13333334
    %v303 = vrot.slane %v301, 4
    %v305 = vadd.f32 %v300, %v303
    %v307 = vcombine.high %v305, %v305
    %308 = vrot.lane.b32.xlu0 %v307, 48
    %v309 = vpop.permute.xlu0 %308
    %311 = vst.msk [vmem:[#allocation2 + $0x4] sm:$0xf] %vm216, %v309
    %v312 = vmul.f32 %v151, 0.4
    %v313 = vmul.f32 %v156, 0.6
    %v315 = vrot.slane %v313, 4
    %v317 = vadd.f32 %v312, %v315
    %v319 = vcombine.high %v317, %v317
    %320 = vrot.lane.b32.xlu0 %v319, 64
    %v321 = vpop.permute.xlu0 %320
    %323 = vst.msk [vmem:[#allocation2 + $0x4] sm:$0xf] %vm229, %v321
    %v324 = vmul.f32 %v156, 0.93333334
    %v325 = vmul.f32 %v156, 0.06666667
    %v327 = vrot.slane %v325, 4
    %v329 = vadd.f32 %v324, %v327
    %331 = vrot.lane.b32.xlu0 %v329, 80
    %v332 = vpop.permute.xlu0 %331
    %334 = vst.msk [vmem:[#allocation2 + $0x4] sm:$0xf] %vm241, %v332
    %v335 = vmul.f32 %v156, 0.46666667
    %v336 = vmul.f32 %v156, 0.53333336
    %v338 = vrot.slane %v336, 4
    %v340 = vadd.f32 %v335, %v338
    %342 = vrot.lane.b32.xlu0 %v340, 96
    %v343 = vpop.permute.xlu0 %342
    %345 = vst.msk [vmem:[#allocation2 + $0x4] sm:$0xf] %vm253, %v343
    %v347 = vcombine.high %v156, %v156
    %348 = vrot.lane.b32.xlu0 %v347, 112
    %v349 = vpop.permute.xlu0 %348
    %351 = vst.msk [vmem:[#allocation2 + $0x4] sm:$0xf] %vm266, %v349
    %352 = vst.msk [vmem:[#allocation2 + $0x8] sm:$0xf] %vm179, %v161
    %v353 = vmul.f32 %v161, 0.53333336
    %v354 = vmul.f32 %v161, 0.46666667
    %v356 = vrot.slane %v354, 4
    %v358 = vadd.f32 %v353, %v356
    %360 = vrot.lane.b32.xlu0 %v358, 16
    %v361 = vpop.permute.xlu0 %360
    %363 = vst.msk [vmem:[#allocation2 + $0x8] sm:$0xf] %vm191, %v361
    %v364 = vmul.f32 %v161, 0.06666667
    %v365 = vmul.f32 %v161, 0.93333334
    %v367 = vrot.slane %v365, 4
    %v369 = vadd.f32 %v364, %v367
    %371 = vrot.lane.b32.xlu0 %v369, 32
    %v372 = vpop.permute.xlu0 %371
    %374 = vst.msk [vmem:[#allocation2 + $0x8] sm:$0xf] %vm203, %v372
    %v375 = vmul.f32 %v161, 0.6
    %v376 = vmul.f32 %v166, 0.4
    %v378 = vrot.slane %v376, 4
    %v380 = vadd.f32 %v375, %v378
    %v382 = vcombine.high %v380, %v380
    %383 = vrot.lane.b32.xlu0 %v382, 48
    %v384 = vpop.permute.xlu0 %383
    %386 = vst.msk [vmem:[#allocation2 + $0x8] sm:$0xf] %vm216, %v384
    %v387 = vmul.f32 %v161, 0.13333334
    %v388 = vmul.f32 %v166, 0.8666667
    %v390 = vrot.slane %v388, 4
    %v392 = vadd.f32 %v387, %v390
    %v394 = vcombine.high %v392, %v392
    %395 = vrot.lane.b32.xlu0 %v394, 64
    %v396 = vpop.permute.xlu0 %395
    %398 = vst.msk [vmem:[#allocation2 + $0x8] sm:$0xf] %vm229, %v396
    %v399 = vmul.f32 %v166, 0.6666667
    %v400 = vmul.f32 %v166, 0.33333334
    %v402 = vrot.slane %v400, 4
    %v404 = vadd.f32 %v399, %v402
    %406 = vrot.lane.b32.xlu0 %v404, 80
    %v407 = vpop.permute.xlu0 %406
    %409 = vst.msk [vmem:[#allocation2 + $0x8] sm:$0xf] %vm241, %v407
    %v410 = vmul.f32 %v166, 0.2
    %v411 = vmul.f32 %v166, 0.8
    %v413 = vrot.slane %v411, 4
    %v415 = vadd.f32 %v410, %v413
    %417 = vrot.lane.b32.xlu0 %v415, 96
    %v418 = vpop.permute.xlu0 %417
    %420 = vst.msk [vmem:[#allocation2 + $0x8] sm:$0xf] %vm253, %v418
    %v421 = vmul.f32 %v166, 0.73333335
    %v422 = vmul.f32 %v171, 0.26666668
    %v424 = vrot.slane %v422, 4
    %v426 = vadd.f32 %v421, %v424
    %v428 = vcombine.high %v426, %v426
    %429 = vrot.lane.b32.xlu0 %v428, 112
    %v430 = vpop.permute.xlu0 %429
    %432 = vst.msk [vmem:[#allocation2 + $0x8] sm:$0xf] %vm266, %v430
    %v433 = vmul.f32 %v166, 0.26666668
    %v434 = vmul.f32 %v171, 0.73333335
    %v436 = vrot.slane %v434, 4
    %v438 = vadd.f32 %v433, %v436
    %v440 = vcombine.high %v438, %v438
    %442 = vst.msk [vmem:[#allocation2 + $0xc] sm:$0xf] %vm179, %v440
    %v443 = vmul.f32 %v171, 0.8
    %v444 = vmul.f32 %v171, 0.2
    %v446 = vrot.slane %v444, 4
    %v448 = vadd.f32 %v443, %v446
    %450 = vrot.lane.b32.xlu0 %v448, 16
    %v451 = vpop.permute.xlu0 %450
    %453 = vst.msk [vmem:[#allocation2 + $0xc] sm:$0xf] %vm191, %v451
    %v454 = vmul.f32 %v171, 0.33333334
    %v455 = vmul.f32 %v171, 0.6666667
    %v457 = vrot.slane %v455, 4
    %v459 = vadd.f32 %v454, %v457
    %461 = vrot.lane.b32.xlu0 %v459, 32
    %v462 = vpop.permute.xlu0 %461
    %464 = vst.msk [vmem:[#allocation2 + $0xc] sm:$0xf] %vm203, %v462
    %v465 = vmul.f32 %v171, 0.8666667
    %v466 = vmul.f32 %v176, 0.13333334
    %v468 = vrot.slane %v466, 4
    %v470 = vadd.f32 %v465, %v468
    %v472 = vcombine.high %v470, %v470
    %473 = vrot.lane.b32.xlu0 %v472, 48
    %v474 = vpop.permute.xlu0 %473
    %476 = vst.msk [vmem:[#allocation2 + $0xc] sm:$0xf] %vm216, %v474
    %v477 = vmul.f32 %v171, 0.4
    %v478 = vmul.f32 %v176, 0.6
    %v480 = vrot.slane %v478, 4
    %v482 = vadd.f32 %v477, %v480
    %v484 = vcombine.high %v482, %v482
    %485 = vrot.lane.b32.xlu0 %v484, 64
    %v486 = vpop.permute.xlu0 %485
    %488 = vst.msk [vmem:[#allocation2 + $0xc] sm:$0xf] %vm229, %v486
    %v489 = vmul.f32 %v176, 0.93333334
    %v490 = vmul.f32 %v176, 0.06666667
    %v492 = vrot.slane %v490, 4
    %v494 = vadd.f32 %v489, %v492
    %496 = vrot.lane.b32.xlu0 %v494, 80
    %v497 = vpop.permute.xlu0 %496
    %499 = vst.msk [vmem:[#allocation2 + $0xc] sm:$0xf] %vm241, %v497
    %v500 = vmul.f32 %v176, 0.46666667
    %v501 = vmul.f32 %v176, 0.53333336
    %v503 = vrot.slane %v501, 4
    %v505 = vadd.f32 %v500, %v503
    %507 = vrot.lane.b32.xlu0 %v505, 96
    %v508 = vpop.permute.xlu0 %507
    %510 = vst.msk [vmem:[#allocation2 + $0xc] sm:$0xf] %vm253, %v508
    %v512 = vcombine.high %v176, %v176
    %513 = vrot.lane.b32.xlu0 %v512, 112
    %v514 = vpop.permute.xlu0 %513
    %516 = vst.msk [vmem:[#allocation2 + $0xc] sm:$0xf] %vm266, %v514
    %v517 = vld [vmem:[%s3] sm:$0xff]
    %v518 = vld [vmem:[%s3 + $0x8] sm:$0xff]
    %v519 = vld [vmem:[%s3 + $0x10] sm:$0xff]
    %v520 = vld [vmem:[%s3 + $0x18] sm:$0xff]
    %v521 = vld [vmem:[%s3 + $0x20] sm:$0xff]
    %v522 = vld [vmem:[%s3 + $0x28] sm:$0xff]
    %v523 = vld [vmem:[%s3 + $0x30] sm:$0xff]
    %v524 = vld [vmem:[%s3 + $0x38] sm:$0xff]
    %v525 = vld [vmem:[%s3 + $0x40] sm:$0xff]
    %v526 = vld [vmem:[%s3 + $0x48] sm:$0xff]
    %v527 = vld [vmem:[%s3 + $0x50] sm:$0xff]
    %v528 = vld [vmem:[%s3 + $0x58] sm:$0xff]
    %v529 = vld [vmem:[%s3 + $0x60] sm:$0xff]
    %v530 = vld [vmem:[%s3 + $0x68] sm:$0xff]
    %v531 = vld [vmem:[%s3 + $0x70] sm:$0xff]
    %v532 = vld [vmem:[%s3 + $0x78] sm:$0xff]
    %v533 = vld [vmem:[%s3 + $0x80] sm:$0xff]
    %v534 = vld [vmem:[%s3 + $0x88] sm:$0xff]
    %v535 = vld [vmem:[%s3 + $0x90] sm:$0xff]
    %v536 = vld [vmem:[%s3 + $0x98] sm:$0xff]
    %v537 = vld [vmem:[%s3 + $0xa0] sm:$0xff]
    %v538 = vld [vmem:[%s3 + $0xa8] sm:$0xff]
    %v539 = vld [vmem:[%s3 + $0xb0] sm:$0xff]
    %v540 = vld [vmem:[%s3 + $0xb8] sm:$0xff]
    %v541 = vld [vmem:[%s3 + $0xc0] sm:$0xff]
    %v542 = vld [vmem:[%s3 + $0xc8] sm:$0xff]
    %v543 = vld [vmem:[%s3 + $0xd0] sm:$0xff]
    %v544 = vld [vmem:[%s3 + $0xd8] sm:$0xff]
    %v545 = vld [vmem:[%s3 + $0xe0] sm:$0xff]
    %v546 = vld [vmem:[%s3 + $0xe8] sm:$0xff]
    %v547 = vld [vmem:[%s3 + $0xf0] sm:$0xff]
    %v548 = vld [vmem:[%s3 + $0xf8] sm:$0xff]
    %v549 = vld [vmem:[%s5] sm:$0xff]
    %v550 = vld [vmem:[%s5 + $0x8] sm:$0xff]
    %v551 = vld [vmem:[%s5 + $0x10] sm:$0xff]
    %v552 = vld [vmem:[%s5 + $0x18] sm:$0xff]
    %v553 = vld [vmem:[%s5 + $0x20] sm:$0xff]
    %v554 = vld [vmem:[%s5 + $0x28] sm:$0xff]
    %v555 = vld [vmem:[%s5 + $0x30] sm:$0xff]
    %v556 = vld [vmem:[%s5 + $0x38] sm:$0xff]
    %v557 = vld [vmem:[%s5 + $0x40] sm:$0xff]
    %v558 = vld [vmem:[%s5 + $0x48] sm:$0xff]
    %v559 = vld [vmem:[%s5 + $0x50] sm:$0xff]
    %v560 = vld [vmem:[%s5 + $0x58] sm:$0xff]
    %v561 = vld [vmem:[%s6] sm:$0x1]
    %v562 = vld [vmem:[%s6 + $0x1] sm:$0x1]
    %v563 = vld [vmem:[%s6 + $0x2] sm:$0x1]
    %v564 = vld [vmem:[#allocation2] sm:$0xff]
    %v566 = vcombine.high %v564, %v564
    %568 = vmatprep.subr.mxu0 0.0
    %569 = vmatpush1.msra.mxu0 %v532
    %570 = vmatprep.subr.mxu0 0.0
    %571 = vmatpush1.msra.mxu0 %v531
    %572 = vmatprep.subr.mxu0 0.0
    %573 = vmatpush1.msra.mxu0 %v530
    %574 = vmatprep.subr.mxu0 0.0
    %575 = vmatpush1.msra.mxu0 %v529
    %576 = vmatprep.subr.mxu0 0.0
    %577 = vmatpush1.msra.mxu0 %v528
    %578 = vmatprep.subr.mxu0 0.0
    %579 = vmatpush1.msra.mxu0 %v527
    %580 = vmatprep.subr.mxu0 0.0
    %581 = vmatpush1.msra.mxu0 %v526
    %582 = vmatprep.subr.mxu0 0.0
    %583 = vmatpush1.msra.mxu0 %v525
    %584 = vmatprep.subr.mxu0 0.0
    %585 = vmatpush1.msra.mxu0 %v524
    %586 = vmatprep.subr.mxu0 0.0
    %587 = vmatpush1.msra.mxu0 %v523
    %588 = vmatprep.subr.mxu0 0.0
    %589 = vmatpush1.msra.mxu0 %v522
    %590 = vmatprep.subr.mxu0 0.0
    %591 = vmatpush1.msra.mxu0 %v521
    %592 = vmatprep.subr.mxu0 0.0
    %593 = vmatpush1.msra.mxu0 %v520
    %594 = vmatprep.subr.mxu0 0.0
    %595 = vmatpush1.msra.mxu0 %v519
    %596 = vmatprep.subr.mxu0 0.0
    %597 = vmatpush1.msra.mxu0 %v518
    %598 = vmatprep.subr.mxu0 0.0
    %599 = vmatpush1.msra.mxu0 %v517
    %600 = vmatprep.subr.mxu0 0.0
    %601 = vmatpush2.msra.mxu0 %v548
    %602 = vmatprep.subr.mxu0 0.0
    %603 = vmatpush2.msra.mxu0 %v547
    %604 = vmatprep.subr.mxu0 0.0
    %605 = vmatpush2.msra.mxu0 %v546
    %606 = vmatprep.subr.mxu0 0.0
    %607 = vmatpush2.msra.mxu0 %v545
    %608 = vmatprep.subr.mxu0 0.0
    %609 = vmatpush2.msra.mxu0 %v544
    %610 = vmatprep.subr.mxu0 0.0
    %611 = vmatpush2.msra.mxu0 %v543
    %612 = vmatprep.subr.mxu0 0.0
    %613 = vmatpush2.msra.mxu0 %v542
    %614 = vmatprep.subr.mxu0 0.0
    %615 = vmatpush2.msra.mxu0 %v541
    %616 = vmatprep.subr.mxu0 0.0
    %617 = vmatpush2.msra.mxu0 %v540
    %618 = vmatprep.subr.mxu0 0.0
    %619 = vmatpush2.msra.mxu0 %v539
    %620 = vmatprep.subr.mxu0 0.0
    %621 = vmatpush2.msra.mxu0 %v538
    %622 = vmatprep.subr.mxu0 0.0
    %623 = vmatpush2.msra.mxu0 %v537
    %624 = vmatprep.subr.mxu0 0.0
    %625 = vmatpush2.msra.mxu0 %v536
    %626 = vmatprep.subr.mxu0 0.0
    %627 = vmatpush2.msra.mxu0 %v535
    %628 = vmatprep.subr.mxu0 0.0
    %629 = vmatpush2.msra.mxu0 %v534
    %630 = vmatprep.subr.mxu0 0.0
    %631 = vmatpush2.msra.mxu0 %v533
    %632 = vmatprep.mubr.f32.mxu0 %v566
    %633 = vmatmul.mubr.f32.gmra.mxu0 %v564
    %v634 = vpop.f32.mrf.mxu0
    %v635 = vadd.f32 0.0, %v634
    %v636 = vpop.f32.mrf.mxu0
    %637 = vdwg.mxu0
    %v638 = vlaneseq
    %v639 = vshrl.u32 %v638, 7
    %v640 = vsub.s32 0, %v639
    %v641 = vrot.slane %v561, %v640
    %vm642 = vcmask 785408
    %v644 = vsel %vm642, %v635, 0
    %646 = vmatprep.subr.mxu0 0.0
    %647 = vmatpush1.msra.mxu0 0.0
    %648 = vmatprep.subr.mxu0 0.0
    %649 = vmatpush1.msra.mxu0 0.0
    %650 = vmatprep.subr.mxu0 0.0
    %651 = vmatpush1.msra.mxu0 0.0
    %652 = vmatprep.subr.mxu0 0.0
    %653 = vmatpush1.msra.mxu0 0.0
    %654 = vmatprep.subr.mxu0 0.0
    %655 = vmatpush1.msra.mxu0 %v560
    %656 = vmatprep.subr.mxu0 0.0
    %657 = vmatpush1.msra.mxu0 %v559
    %658 = vmatprep.subr.mxu0 0.0
    %659 = vmatpush1.msra.mxu0 %v558
    %660 = vmatprep.subr.mxu0 0.0
    %661 = vmatpush1.msra.mxu0 %v557
    %662 = vmatprep.subr.mxu0 0.0
    %663 = vmatpush1.msra.mxu0 %v556
    %664 = vmatprep.subr.mxu0 0.0
    %665 = vmatpush1.msra.mxu0 %v555
    %666 = vmatprep.subr.mxu0 0.0
    %667 = vmatpush1.msra.mxu0 %v554
    %668 = vmatprep.subr.mxu0 0.0
    %669 = vmatpush1.msra.mxu0 %v553
    %670 = vmatprep.subr.mxu0 0.0
    %671 = vmatpush1.msra.mxu0 %v552
    %672 = vmatprep.subr.mxu0 0.0
    %673 = vmatpush1.msra.mxu0 %v551
    %674 = vmatprep.subr.mxu0 0.0
    %675 = vmatpush1.msra.mxu0 %v550
    %676 = vmatprep.subr.mxu0 0.0
    %677 = vmatpush1.msra.mxu0 %v549
    %678 = vmatprep.subr.mxu0 0.0
    %679 = vmatpush2.msra.mxu0 0.0
    %680 = vmatprep.subr.mxu0 0.0
    %681 = vmatpush2.msra.mxu0 0.0
    %682 = vmatprep.subr.mxu0 0.0
    %683 = vmatpush2.msra.mxu0 0.0
    %684 = vmatprep.subr.mxu0 0.0
    %685 = vmatpush2.msra.mxu0 0.0
    %686 = vmatprep.subr.mxu0 0.0
    %687 = vmatpush2.msra.mxu0 0.0
    %688 = vmatprep.subr.mxu0 0.0
    %689 = vmatpush2.msra.mxu0 0.0
    %690 = vmatprep.subr.mxu0 0.0
    %691 = vmatpush2.msra.mxu0 0.0
    %692 = vmatprep.subr.mxu0 0.0
    %693 = vmatpush2.msra.mxu0 0.0
    %694 = vmatprep.subr.mxu0 0.0
    %695 = vmatpush2.msra.mxu0 0.0
    %696 = vmatprep.subr.mxu0 0.0
    %697 = vmatpush2.msra.mxu0 0.0
    %698 = vmatprep.subr.mxu0 0.0
    %699 = vmatpush2.msra.mxu0 0.0
    %700 = vmatprep.subr.mxu0 0.0
    %701 = vmatpush2.msra.mxu0 0.0
    %702 = vmatprep.subr.mxu0 0.0
    %703 = vmatpush2.msra.mxu0 0.0
    %704 = vmatprep.subr.mxu0 0.0
    %705 = vmatpush2.msra.mxu0 0.0
    %706 = vmatprep.subr.mxu0 0.0
    %707 = vmatpush2.msra.mxu0 0.0
    %708 = vmatprep.subr.mxu0 0.0
    %709 = vmatpush2.msra.mxu0 0.0
    %710 = vmatprep.mubr.f32.mxu0 0.0
    %711 = vmatmul.mubr.f32.gmra.mxu0 %v644
    %v712 = vpop.f32.mrf.mxu0
    %v713 = vadd.f32 %v641, %v712
    %v714 = vpop.f32.mrf.mxu0
    %715 = vdwg.mxu0
    %v716 = vmax.f32 %v713, 0.0
    %v717 = vlaneseq
    %v718 = vshrl.u32 %v717, 7
    %v719 = vsub.s32 0, %v718
    %v720 = vrot.slane %v562, %v719
    %v721 = vmul.f32 %v716, %v720
    %vm722 = vcmask 60416
    %v723 = vsel %vm722, %v721, 0.0
    %724 = vadd.xlane.f32.xlu0 %v723
    %v725 = vpop.xlane.xlu0 %724
    %v726 = vlaneseq
    %v727 = vshrl.u32 %v726, 7
    %v728 = vsub.s32 0, %v727
    %v729 = vrot.slane %v563, %v728
    %v730 = vadd.f32 %v725, %v729
    %v731 = vxor.u32 %v730, 2147483648
    %v732 = vmul.f32 %v731, 1.442695
    %v733 = vpow.pop %v732
    %v734 = vadd.f32 %v733, 1.0
    %v735 = vrcp.pop %v734
    %v736 = vmul.f32 1.0, %v735
    %v737 = vld [vmem:[%s1] sm:$0xff]
    %739 = vset.pattern.permute.xlu0 0
    %740 = vperm.xlu0 %739, %v736
    %v741 = vpop.permute.xlu0 %740
    %v744 = vcombine.high %v737, %v737
    %v746 = vmul.f32 %v741, %v737
    %v747 = vmul.f32 %v741, %v744
    %v750 = vcombine.low %v746, %v747
    %v752 = vadd.f32 %v564, %v750
    %753 = vst [vmem:[#allocation2] sm:$0xff] %v752
    %v754 = vld [vmem:[#allocation2 + $0x8] sm:$0xff]
    %v756 = vcombine.high %v754, %v754
    %758 = vmatprep.subr.mxu0 0.0
    %759 = vmatpush1.msra.mxu0 %v532
    %760 = vmatprep.subr.mxu0 0.0
    %761 = vmatpush1.msra.mxu0 %v531
    %762 = vmatprep.subr.mxu0 0.0
    %763 = vmatpush1.msra.mxu0 %v530
    %764 = vmatprep.subr.mxu0 0.0
    %765 = vmatpush1.msra.mxu0 %v529
    %766 = vmatprep.subr.mxu0 0.0
    %767 = vmatpush1.msra.mxu0 %v528
    %768 = vmatprep.subr.mxu0 0.0
    %769 = vmatpush1.msra.mxu0 %v527
    %770 = vmatprep.subr.mxu0 0.0
    %771 = vmatpush1.msra.mxu0 %v526
    %772 = vmatprep.subr.mxu0 0.0
    %773 = vmatpush1.msra.mxu0 %v525
    %774 = vmatprep.subr.mxu0 0.0
    %775 = vmatpush1.msra.mxu0 %v524
    %776 = vmatprep.subr.mxu0 0.0
    %777 = vmatpush1.msra.mxu0 %v523
    %778 = vmatprep.subr.mxu0 0.0
    %779 = vmatpush1.msra.mxu0 %v522
    %780 = vmatprep.subr.mxu0 0.0
    %781 = vmatpush1.msra.mxu0 %v521
    %782 = vmatprep.subr.mxu0 0.0
    %783 = vmatpush1.msra.mxu0 %v520
    %784 = vmatprep.subr.mxu0 0.0
    %785 = vmatpush1.msra.mxu0 %v519
    %786 = vmatprep.subr.mxu0 0.0
    %787 = vmatpush1.msra.mxu0 %v518
    %788 = vmatprep.subr.mxu0 0.0
    %789 = vmatpush1.msra.mxu0 %v517
    %790 = vmatprep.subr.mxu0 0.0
    %791 = vmatpush2.msra.mxu0 %v548
    %792 = vmatprep.subr.mxu0 0.0
    %793 = vmatpush2.msra.mxu0 %v547
    %794 = vmatprep.subr.mxu0 0.0
    %795 = vmatpush2.msra.mxu0 %v546
    %796 = vmatprep.subr.mxu0 0.0
    %797 = vmatpush2.msra.mxu0 %v545
    %798 = vmatprep.subr.mxu0 0.0
    %799 = vmatpush2.msra.mxu0 %v544
    %800 = vmatprep.subr.mxu0 0.0
    %801 = vmatpush2.msra.mxu0 %v543
    %802 = vmatprep.subr.mxu0 0.0
    %803 = vmatpush2.msra.mxu0 %v542
    %804 = vmatprep.subr.mxu0 0.0
    %805 = vmatpush2.msra.mxu0 %v541
    %806 = vmatprep.subr.mxu0 0.0
    %807 = vmatpush2.msra.mxu0 %v540
    %808 = vmatprep.subr.mxu0 0.0
    %809 = vmatpush2.msra.mxu0 %v539
    %810 = vmatprep.subr.mxu0 0.0
    %811 = vmatpush2.msra.mxu0 %v538
    %812 = vmatprep.subr.mxu0 0.0
    %813 = vmatpush2.msra.mxu0 %v537
    %814 = vmatprep.subr.mxu0 0.0
    %815 = vmatpush2.msra.mxu0 %v536
    %816 = vmatprep.subr.mxu0 0.0
    %817 = vmatpush2.msra.mxu0 %v535
    %818 = vmatprep.subr.mxu0 0.0
    %819 = vmatpush2.msra.mxu0 %v534
    %820 = vmatprep.subr.mxu0 0.0
    %821 = vmatpush2.msra.mxu0 %v533
    %822 = vmatprep.mubr.f32.mxu0 %v756
    %823 = vmatmul.mubr.f32.gmra.mxu0 %v754
    %v824 = vpop.f32.mrf.mxu0
    %v825 = vadd.f32 0.0, %v824
    %v826 = vpop.f32.mrf.mxu0
    %827 = vdwg.mxu0
    %v829 = vsel %vm642, %v825, 0
    %831 = vmatprep.subr.mxu0 0.0
    %832 = vmatpush1.msra.mxu0 0.0
    %833 = vmatprep.subr.mxu0 0.0
    %834 = vmatpush1.msra.mxu0 0.0
    %835 = vmatprep.subr.mxu0 0.0
    %836 = vmatpush1.msra.mxu0 0.0
    %837 = vmatprep.subr.mxu0 0.0
    %838 = vmatpush1.msra.mxu0 0.0
    %839 = vmatprep.subr.mxu0 0.0
    %840 = vmatpush1.msra.mxu0 %v560
    %841 = vmatprep.subr.mxu0 0.0
    %842 = vmatpush1.msra.mxu0 %v559
    %843 = vmatprep.subr.mxu0 0.0
    %844 = vmatpush1.msra.mxu0 %v558
    %845 = vmatprep.subr.mxu0 0.0
    %846 = vmatpush1.msra.mxu0 %v557
    %847 = vmatprep.subr.mxu0 0.0
    %848 = vmatpush1.msra.mxu0 %v556
    %849 = vmatprep.subr.mxu0 0.0
    %850 = vmatpush1.msra.mxu0 %v555
    %851 = vmatprep.subr.mxu0 0.0
    %852 = vmatpush1.msra.mxu0 %v554
    %853 = vmatprep.subr.mxu0 0.0
    %854 = vmatpush1.msra.mxu0 %v553
    %855 = vmatprep.subr.mxu0 0.0
    %856 = vmatpush1.msra.mxu0 %v552
    %857 = vmatprep.subr.mxu0 0.0
    %858 = vmatpush1.msra.mxu0 %v551
    %859 = vmatprep.subr.mxu0 0.0
    %860 = vmatpush1.msra.mxu0 %v550
    %861 = vmatprep.subr.mxu0 0.0
    %862 = vmatpush1.msra.mxu0 %v549
    %863 = vmatprep.subr.mxu0 0.0
    %864 = vmatpush2.msra.mxu0 0.0
    %865 = vmatprep.subr.mxu0 0.0
    %866 = vmatpush2.msra.mxu0 0.0
    %867 = vmatprep.subr.mxu0 0.0
    %868 = vmatpush2.msra.mxu0 0.0
    %869 = vmatprep.subr.mxu0 0.0
    %870 = vmatpush2.msra.mxu0 0.0
    %871 = vmatprep.subr.mxu0 0.0
    %872 = vmatpush2.msra.mxu0 0.0
    %873 = vmatprep.subr.mxu0 0.0
    %874 = vmatpush2.msra.mxu0 0.0
    %875 = vmatprep.subr.mxu0 0.0
    %876 = vmatpush2.msra.mxu0 0.0
    %877 = vmatprep.subr.mxu0 0.0
    %878 = vmatpush2.msra.mxu0 0.0
    %879 = vmatprep.subr.mxu0 0.0
    %880 = vmatpush2.msra.mxu0 0.0
    %881 = vmatprep.subr.mxu0 0.0
    %882 = vmatpush2.msra.mxu0 0.0
    %883 = vmatprep.subr.mxu0 0.0
    %884 = vmatpush2.msra.mxu0 0.0
    %885 = vmatprep.subr.mxu0 0.0
    %886 = vmatpush2.msra.mxu0 0.0
    %887 = vmatprep.subr.mxu0 0.0
    %888 = vmatpush2.msra.mxu0 0.0
    %889 = vmatprep.subr.mxu0 0.0
    %890 = vmatpush2.msra.mxu0 0.0
    %891 = vmatprep.subr.mxu0 0.0
    %892 = vmatpush2.msra.mxu0 0.0
    %893 = vmatprep.subr.mxu0 0.0
    %894 = vmatpush2.msra.mxu0 0.0
    %895 = vmatprep.mubr.f32.mxu0 0.0
    %896 = vmatmul.mubr.f32.gmra.mxu0 %v829
    %v897 = vpop.f32.mrf.mxu0
    %v898 = vadd.f32 %v641, %v897
    %v899 = vpop.f32.mrf.mxu0
    %900 = vdwg.mxu0
    %v901 = vmax.f32 %v898, 0.0
    %v902 = vmul.f32 %v901, %v720
    %v903 = vsel %vm722, %v902, 0.0
    %904 = vadd.xlane.f32.xlu0 %v903
    %v905 = vpop.xlane.xlu0 %904
    %v906 = vadd.f32 %v905, %v729
    %v907 = vxor.u32 %v906, 2147483648
    %v908 = vmul.f32 %v907, 1.442695
    %v909 = vpow.pop %v908
    %v910 = vadd.f32 %v909, 1.0
    %v911 = vrcp.pop %v910
    %v912 = vmul.f32 1.0, %v911
    %v913 = vld [vmem:[%s1 + $0x8] sm:$0xff]
    %915 = vset.pattern.permute.xlu0 0
    %916 = vperm.xlu0 %915, %v912
    %v917 = vpop.permute.xlu0 %916
    %v920 = vcombine.high %v913, %v913
    %v922 = vmul.f32 %v917, %v913
    %v923 = vmul.f32 %v917, %v920
    %v926 = vcombine.low %v922, %v923
    %v928 = vadd.f32 %v754, %v926
    %929 = vst [vmem:[#allocation2 + $0x8] sm:$0xff] %v928
    %v930 = vld [vmem:[%s4] ss:$2 sm:$0xf]
    %s931 = scalar_lea.vmem %s4, 1
    %v932 = vld [vmem:[%s931] ss:$2 sm:$0xf]
    %vm933 = vcmp.ge.s32.totalorder %v930, 1
    %vm934 = vcmp.ge.s32.totalorder %v932, 1
    %vm935 = vmand %vm933, %vm934
    %v936 = vsel %vm935, 1, 0
    %v937 = vcvt.s32.f32 %v936
    %v938 = vsel %vm933, 1, 0
    %v939 = vcvt.s32.f32 %v938
    %vm940 = vcmp.lt.s32.totalorder %v932, 15
    %vm941 = vmand %vm933, %vm940
    %v942 = vsel %vm941, 1, 0
    %v943 = vcvt.s32.f32 %v942
    %v944 = vsel %vm934, 1, 0
    %v945 = vcvt.s32.f32 %v944
    %v946 = vsel %vm940, 1, 0
    %v947 = vcvt.s32.f32 %v946
    %vm948 = vcmp.lt.s32.totalorder %v930, 15
    %vm949 = vmand %vm948, %vm934
    %v950 = vsel %vm949, 1, 0
    %v951 = vcvt.s32.f32 %v950
    %v952 = vsel %vm948, 1, 0
    %v953 = vcvt.s32.f32 %v952
    %vm954 = vmand %vm948, %vm940
    %v955 = vsel %vm954, 1, 0
    %v956 = vcvt.s32.f32 %v955
    %v957 = vld [vmem:[%s7] sm:$0x3]
    %v958 = vld [vmem:[%s8] sm:$0x7]
    %v959 = vld [vmem:[%s9] sm:$0xf]
    %v960 = vld [vmem:[%s10] sm:$0x3f]
    %v961 = vld [vmem:[#allocation2] sm:$0xff]
    %v962 = vld [vmem:[#allocation2 + $0x8] sm:$0xff]
    %v963 = vmax.f32 %v961, 0.0
    %v964 = vmax.f32 %v962, 0.0
    %v967 = vcombine.high %v963, %v963
    %v968 = vcombine.high %v964, %v964
    %vm971 = vcmask 1043456
    %v972 = vsel %vm971, %v963, 0.0
    %v973 = vsel %vm971, %v967, 0.0
    %v974 = vadd.f32 %v972, %v973
    %v975 = vsel %vm971, %v964, 0.0
    %v976 = vadd.f32 %v974, %v975
    %v977 = vsel %vm971, %v968, 0.0
    %v978 = vadd.f32 %v976, %v977
    %979 = vadd.xlane.f32.xlu0 %v978
    %v980 = vpop.xlane.xlu0 %979
    %v981 = vmul.f32 %v980, 0.001953125
    %v984 = vunpack.c.l.s4 839922192
    %v985 = vunpack.c.0.s8 %v984
    %v986 = vlaneseq
    %v987 = vshrl.u32 %v986, 7
    %v988 = vsub.s32 %v985, %v987
    %v989 = vrot.slane %v981, %v988
    %v991 = vsub.f32 %v963, %v989
    %v992 = vsub.f32 %v964, %v989
    %v993 = vmul.f32 %v991, %v991
    %v994 = vmul.f32 %v992, %v992
    %v997 = vcombine.high %v993, %v993
    %v998 = vcombine.high %v994, %v994
    %v1001 = vsel %vm971, %v993, 0.0
    %v1002 = vsel %vm971, %v997, 0.0
    %v1003 = vadd.f32 %v1001, %v1002
    %v1004 = vsel %vm971, %v994, 0.0
    %v1005 = vadd.f32 %v1003, %v1004
    %v1006 = vsel %vm971, %v998, 0.0
    %v1007 = vadd.f32 %v1005, %v1006
    %1008 = vadd.xlane.f32.xlu0 %v1007
    %v1009 = vpop.xlane.xlu0 %1008
    %v1010 = vmul.f32 %v1009, 0.001953125
    %v1011 = vadd.f32 %v1010, 1e-05
    %v1012 = vrsqrt.pop %v1011
    %v1015 = vunpack.c.l.s4 839922192
    %v1016 = vunpack.c.0.s8 %v1015
    %v1017 = vlaneseq
    %v1018 = vshrl.u32 %v1017, 7
    %v1019 = vsub.s32 %v1016, %v1018
    %v1020 = vrot.slane %v1012, %v1019
    %v1022 = vmul.f32 %v991, %v1020
    %v1023 = vmul.f32 %v992, %v1020
    %1025 = vset.pattern.permute.xlu0 0
    %1026 = vperm.xlu0 %1025, %v959
    %v1027 = vpop.permute.xlu0 %1026
    %v1029 = vunpack.c.l.s4 839922192
    %v1030 = vunpack.c.0.s8 %v1029
    %v1031 = vlaneseq
    %v1032 = vshrl.u32 %v1031, 7
    %v1033 = vsub.s32 %v1030, %v1032
    %v1034 = vrot.slane %v1027, %v1033
    %v1036 = vmul.f32 %v1022, %v1034
    %v1037 = vmul.f32 %v1023, %v1034
    %1038 = vset.pattern.permute.xlu0 1
    %1039 = vperm.xlu0 %1038, %v959
    %v1040 = vpop.permute.xlu0 %1039
    %v1042 = vunpack.c.l.s4 839922192
    %v1043 = vunpack.c.0.s8 %v1042
    %v1044 = vlaneseq
    %v1045 = vshrl.u32 %v1044, 7
    %v1046 = vsub.s32 %v1043, %v1045
    %v1047 = vrot.slane %v1040, %v1046
    %v1049 = vadd.f32 %v1036, %v1047
    %v1050 = vadd.f32 %v1037, %v1047
    %v1053 = vcombine.high %v1049, %v1049
    %v1054 = vcombine.high %v1050, %v1050
    %1057 = vrot.lane.b32.xlu0 %v1049, 17
    %v1058 = vpop.permute.xlu0 %1057
    %1059 = vrot.lane.b32.xlu0 %v1053, 17
    %v1060 = vpop.permute.xlu0 %1059
    %1061 = vrot.lane.b32.xlu0 %v1050, 17
    %v1062 = vpop.permute.xlu0 %1061
    %1063 = vrot.lane.b32.xlu0 %v1054, 17
    %v1064 = vpop.permute.xlu0 %1063
    %v1065 = vlaneseq
    %v1066 = vand.u32 %v1065, 127
    %vm1067 = vcmp.lt.s32.totalorder %v1066, 17
    %v1068 = vsel %vm1067, %v1062, %v1064
    %v1069 = vsel %vm1067, %v1060, %v1062
    %v1070 = vsel %vm1067, %v1058, %v1060
    %v1071 = vsel %vm1067, %v1064, %v1058
    %v1073 = vlaneseq
    %v1074 = vshrl.u32 %v1073, 7
    %v1075 = vsub.s32 0, %v1074
    %v1076 = vrot.slane %v937, %v1075
    %v1077 = vlaneseq
    %v1078 = vshrl.u32 %v1077, 7
    %v1079 = vsub.s32 1, %v1078
    %v1080 = vrot.slane %v937, %v1079
    %v1081 = vlaneseq
    %v1082 = vshrl.u32 %v1081, 7
    %v1083 = vsub.s32 2, %v1082
    %v1084 = vrot.slane %v937, %v1083
    %v1085 = vlaneseq
    %v1086 = vshrl.u32 %v1085, 7
    %v1087 = vsub.s32 3, %v1086
    %v1088 = vrot.slane %v937, %v1087
    %v1093 = vmul.f32 %v1071, %v1076
    %v1094 = vmul.f32 %v1070, %v1080
    %v1095 = vmul.f32 %v1069, %v1084
    %v1096 = vmul.f32 %v1068, %v1088
    %v1097 = vpack.c.bf16 %v1093, %v1093
    %v1098 = vpack.c.bf16 %v1094, %v1094
    %v1099 = vpack.c.bf16 %v1095, %v1095
    %v1100 = vpack.c.bf16 %v1096, %v1096
    %1101 = vrot.lane.b32.xlu0 %v1049, 16
    %v1102 = vpop.permute.xlu0 %1101
    %1103 = vrot.lane.b32.xlu0 %v1053, 16
    %v1104 = vpop.permute.xlu0 %1103
    %1105 = vrot.lane.b32.xlu0 %v1050, 16
    %v1106 = vpop.permute.xlu0 %1105
    %1107 = vrot.lane.b32.xlu0 %v1054, 16
    %v1108 = vpop.permute.xlu0 %1107
    %vm1109 = vcmp.lt.s32.totalorder %v1066, 16
    %v1110 = vsel %vm1109, %v1106, %v1108
    %v1111 = vsel %vm1109, %v1104, %v1106
    %v1112 = vsel %vm1109, %v1102, %v1104
    %v1113 = vsel %vm1109, %v1108, %v1102
    %v1115 = vlaneseq
    %v1116 = vshrl.u32 %v1115, 7
    %v1117 = vsub.s32 0, %v1116
    %v1118 = vrot.slane %v939, %v1117
    %v1119 = vlaneseq
    %v1120 = vshrl.u32 %v1119, 7
    %v1121 = vsub.s32 1, %v1120
    %v1122 = vrot.slane %v939, %v1121
    %v1123 = vlaneseq
    %v1124 = vshrl.u32 %v1123, 7
    %v1125 = vsub.s32 2, %v1124
    %v1126 = vrot.slane %v939, %v1125
    %v1127 = vlaneseq
    %v1128 = vshrl.u32 %v1127, 7
    %v1129 = vsub.s32 3, %v1128
    %v1130 = vrot.slane %v939, %v1129
    %v1135 = vmul.f32 %v1113, %v1118
    %v1136 = vmul.f32 %v1112, %v1122
    %v1137 = vmul.f32 %v1111, %v1126
    %v1138 = vmul.f32 %v1110, %v1130
    %v1139 = vpack.c.bf16 %v1135, %v1135
    %v1140 = vpack.c.bf16 %v1136, %v1136
    %v1141 = vpack.c.bf16 %v1137, %v1137
    %v1142 = vpack.c.bf16 %v1138, %v1138
    %v1145 = vunpack.c.l.s4 1983009808
    %v1146 = vunpack.c.0.s8 %v1145
    %v1147 = vlaneseq
    %v1148 = vshrl.u32 %v1147, 7
    %v1149 = vsub.s32 %v1146, %v1148
    %v1150 = vrot.slane %v957, %v1149
    %1151 = vrot.lane.b32.xlu0 %v1150, 124
    %v1152 = vpop.permute.xlu0 %1151
    %vm1153 = vcmask 31744
    %v1155 = vsel %vm1153, %v1152, 0
    %vm1157 = vcmask 1041408
    %v1159 = vsel %vm1157, %v1139, 0
    %v1162 = vsel %vm1157, %v1140, 0
    %v1165 = vsel %vm1157, %v1141, 0
    %v1168 = vsel %vm1157, %v1142, 0
    %1170 = vmatprep.subr.bf16.mxu0 0
    %1171 = vmatpush1.bf16.msra.mxu0 0
    %1172 = vmatprep.subr.bf16.mxu0 0
    %1173 = vmatpush1.bf16.msra.mxu0 0
    %1174 = vmatprep.subr.bf16.mxu0 0
    %1175 = vmatpush1.bf16.msra.mxu0 0
    %1176 = vmatprep.subr.bf16.mxu0 0
    %1177 = vmatpush1.bf16.msra.mxu0 0
    %1178 = vmatprep.subr.bf16.mxu0 0
    %1179 = vmatpush1.bf16.msra.mxu0 0
    %1180 = vmatprep.subr.bf16.mxu0 0
    %1181 = vmatpush1.bf16.msra.mxu0 0
    %1182 = vmatprep.subr.bf16.mxu0 0
    %1183 = vmatpush1.bf16.msra.mxu0 0
    %1184 = vmatprep.subr.bf16.mxu0 %v1162
    %1185 = vmatpush1.bf16.msra.mxu0 %v1159
    %1186 = vmatprep.subr.bf16.mxu0 0
    %1187 = vmatpush2.bf16.msra.mxu0 0
    %1188 = vmatprep.subr.bf16.mxu0 0
    %1189 = vmatpush2.bf16.msra.mxu0 0
    %1190 = vmatprep.subr.bf16.mxu0 0
    %1191 = vmatpush2.bf16.msra.mxu0 0
    %1192 = vmatprep.subr.bf16.mxu0 0
    %1193 = vmatpush2.bf16.msra.mxu0 0
    %1194 = vmatprep.subr.bf16.mxu0 0
    %1195 = vmatpush2.bf16.msra.mxu0 0
    %1196 = vmatprep.subr.bf16.mxu0 0
    %1197 = vmatpush2.bf16.msra.mxu0 0
    %1198 = vmatprep.subr.bf16.mxu0 0
    %1199 = vmatpush2.bf16.msra.mxu0 0
    %1200 = vmatprep.subr.bf16.mxu0 0
    %1201 = vmatpush2.bf16.msra.mxu0 0
    %1202 = vmatprep.mubr.bf16.mxu0 0
    %1203 = vmatmul.mubr.bf16.gmra.mxu0 %v1155
    %v1204 = vpop.f32.mrf.mxu0
    %v1205 = vadd.f32 0.0, %v1204
    %v1206 = vpop.f32.mrf.mxu0
    %v1207 = vadd.f32 0.0, %v1206
    %v1208 = vpop.f32.mrf.mxu0
    %v1209 = vpop.f32.mrf.mxu0
    %1210 = vdwg.mxu0
    %1211 = vmatprep.subr.bf16.mxu0 0
    %1212 = vmatpush1.bf16.msra.mxu0 0
    %1213 = vmatprep.subr.bf16.mxu0 0
    %1214 = vmatpush1.bf16.msra.mxu0 0
    %1215 = vmatprep.subr.bf16.mxu0 0
    %1216 = vmatpush1.bf16.msra.mxu0 0
    %1217 = vmatprep.subr.bf16.mxu0 0
    %1218 = vmatpush1.bf16.msra.mxu0 0
    %1219 = vmatprep.subr.bf16.mxu0 0
    %1220 = vmatpush1.bf16.msra.mxu0 0
    %1221 = vmatprep.subr.bf16.mxu0 0
    %1222 = vmatpush1.bf16.msra.mxu0 0
    %1223 = vmatprep.subr.bf16.mxu0 0
    %1224 = vmatpush1.bf16.msra.mxu0 0
    %1225 = vmatprep.subr.bf16.mxu0 %v1168
    %1226 = vmatpush1.bf16.msra.mxu0 %v1165
    %1227 = vmatprep.subr.bf16.mxu0 0
    %1228 = vmatpush2.bf16.msra.mxu0 0
    %1229 = vmatprep.subr.bf16.mxu0 0
    %1230 = vmatpush2.bf16.msra.mxu0 0
    %1231 = vmatprep.subr.bf16.mxu0 0
    %1232 = vmatpush2.bf16.msra.mxu0 0
    %1233 = vmatprep.subr.bf16.mxu0 0
    %1234 = vmatpush2.bf16.msra.mxu0 0
    %1235 = vmatprep.subr.bf16.mxu0 0
    %1236 = vmatpush2.bf16.msra.mxu0 0
    %1237 = vmatprep.subr.bf16.mxu0 0
    %1238 = vmatpush2.bf16.msra.mxu0 0
    %1239 = vmatprep.subr.bf16.mxu0 0
    %1240 = vmatpush2.bf16.msra.mxu0 0
    %1241 = vmatprep.subr.bf16.mxu0 0
    %1242 = vmatpush2.bf16.msra.mxu0 0
    %1243 = vmatprep.mubr.bf16.mxu0 0
    %1244 = vmatmul.mubr.bf16.gmra.mxu0 %v1155
    %v1245 = vpop.f32.mrf.mxu0
    %v1246 = vadd.f32 0.0, %v1245
    %v1247 = vpop.f32.mrf.mxu0
    %v1248 = vadd.f32 0.0, %v1247
    %v1249 = vpop.f32.mrf.mxu0
    %v1250 = vpop.f32.mrf.mxu0
    %1251 = vdwg.mxu0
    %v1253 = vsel %vm1153, %v957, 0
    %v1256 = vsel %vm1157, %v1097, 0
    %v1259 = vsel %vm1157, %v1098, 0
    %v1262 = vsel %vm1157, %v1099, 0
    %v1265 = vsel %vm1157, %v1100, 0
    %1267 = vmatprep.subr.bf16.mxu0 0
    %1268 = vmatpush1.bf16.msra.mxu0 0
    %1269 = vmatprep.subr.bf16.mxu0 0
    %1270 = vmatpush1.bf16.msra.mxu0 0
    %1271 = vmatprep.subr.bf16.mxu0 0
    %1272 = vmatpush1.bf16.msra.mxu0 0
    %1273 = vmatprep.subr.bf16.mxu0 0
    %1274 = vmatpush1.bf16.msra.mxu0 0
    %1275 = vmatprep.subr.bf16.mxu0 0
    %1276 = vmatpush1.bf16.msra.mxu0 0
    %1277 = vmatprep.subr.bf16.mxu0 0
    %1278 = vmatpush1.bf16.msra.mxu0 0
    %1279 = vmatprep.subr.bf16.mxu0 0
    %1280 = vmatpush1.bf16.msra.mxu0 0
    %1281 = vmatprep.subr.bf16.mxu0 %v1259
    %1282 = vmatpush1.bf16.msra.mxu0 %v1256
    %1283 = vmatprep.subr.bf16.mxu0 0
    %1284 = vmatpush2.bf16.msra.mxu0 0
    %1285 = vmatprep.subr.bf16.mxu0 0
    %1286 = vmatpush2.bf16.msra.mxu0 0
    %1287 = vmatprep.subr.bf16.mxu0 0
    %1288 = vmatpush2.bf16.msra.mxu0 0
    %1289 = vmatprep.subr.bf16.mxu0 0
    %1290 = vmatpush2.bf16.msra.mxu0 0
    %1291 = vmatprep.subr.bf16.mxu0 0
    %1292 = vmatpush2.bf16.msra.mxu0 0
    %1293 = vmatprep.subr.bf16.mxu0 0
    %1294 = vmatpush2.bf16.msra.mxu0 0
    %1295 = vmatprep.subr.bf16.mxu0 0
    %1296 = vmatpush2.bf16.msra.mxu0 0
    %1297 = vmatprep.subr.bf16.mxu0 0
    %1298 = vmatpush2.bf16.msra.mxu0 0
    %1299 = vmatprep.mubr.bf16.mxu0 0
    %1300 = vmatmul.mubr.bf16.gmra.mxu0 %v1253
    %v1301 = vpop.f32.mrf.mxu0
    %v1302 = vadd.f32 %v1205, %v1301
    %v1303 = vpop.f32.mrf.mxu0
    %v1304 = vadd.f32 %v1207, %v1303
    %v1305 = vpop.f32.mrf.mxu0
    %v1306 = vpop.f32.mrf.mxu0
    %1307 = vdwg.mxu0
    %1308 = vmatprep.subr.bf16.mxu0 0
    %1309 = vmatpush1.bf16.msra.mxu0 0
    %1310 = vmatprep.subr.bf16.mxu0 0
    %1311 = vmatpush1.bf16.msra.mxu0 0
    %1312 = vmatprep.subr.bf16.mxu0 0
    %1313 = vmatpush1.bf16.msra.mxu0 0
    %1314 = vmatprep.subr.bf16.mxu0 0
    %1315 = vmatpush1.bf16.msra.mxu0 0
    %1316 = vmatprep.subr.bf16.mxu0 0
    %1317 = vmatpush1.bf16.msra.mxu0 0
    %1318 = vmatprep.subr.bf16.mxu0 0
    %1319 = vmatpush1.bf16.msra.mxu0 0
    %1320 = vmatprep.subr.bf16.mxu0 0
    %1321 = vmatpush1.bf16.msra.mxu0 0
    %1322 = vmatprep.subr.bf16.mxu0 %v1265
    %1323 = vmatpush1.bf16.msra.mxu0 %v1262
    %1324 = vmatprep.subr.bf16.mxu0 0
    %1325 = vmatpush2.bf16.msra.mxu0 0
    %1326 = vmatprep.subr.bf16.mxu0 0
    %1327 = vmatpush2.bf16.msra.mxu0 0
    %1328 = vmatprep.subr.bf16.mxu0 0
    %1329 = vmatpush2.bf16.msra.mxu0 0
    %1330 = vmatprep.subr.bf16.mxu0 0
    %1331 = vmatpush2.bf16.msra.mxu0 0
    %1332 = vmatprep.subr.bf16.mxu0 0
    %1333 = vmatpush2.bf16.msra.mxu0 0
    %1334 = vmatprep.subr.bf16.mxu0 0
    %1335 = vmatpush2.bf16.msra.mxu0 0
    %1336 = vmatprep.subr.bf16.mxu0 0
    %1337 = vmatpush2.bf16.msra.mxu0 0
    %1338 = vmatprep.subr.bf16.mxu0 0
    %1339 = vmatpush2.bf16.msra.mxu0 0
    %1340 = vmatprep.mubr.bf16.mxu0 0
    %1341 = vmatmul.mubr.bf16.gmra.mxu0 %v1253
    %v1342 = vpop.f32.mrf.mxu0
    %v1343 = vadd.f32 %v1246, %v1342
    %v1344 = vpop.f32.mrf.mxu0
    %v1345 = vadd.f32 %v1248, %v1344
    %v1346 = vpop.f32.mrf.mxu0
    %v1347 = vpop.f32.mrf.mxu0
    %1348 = vdwg.mxu0
    %1349 = vrot.lane.b32.xlu0 %v1049, 15
    %v1350 = vpop.permute.xlu0 %1349
    %1351 = vrot.lane.b32.xlu0 %v1053, 15
    %v1352 = vpop.permute.xlu0 %1351
    %1353 = vrot.lane.b32.xlu0 %v1050, 15
    %v1354 = vpop.permute.xlu0 %1353
    %1355 = vrot.lane.b32.xlu0 %v1054, 15
    %v1356 = vpop.permute.xlu0 %1355
    %vm1357 = vcmp.lt.s32.totalorder %v1066, 15
    %v1358 = vsel %vm1357, %v1354, %v1356
    %v1359 = vsel %vm1357, %v1352, %v1354
    %v1360 = vsel %vm1357, %v1350, %v1352
    %v1361 = vsel %vm1357, %v1356, %v1350
    %v1363 = vlaneseq
    %v1364 = vshrl.u32 %v1363, 7
    %v1365 = vsub.s32 0, %v1364
    %v1366 = vrot.slane %v943, %v1365
    %v1367 = vlaneseq
    %v1368 = vshrl.u32 %v1367, 7
    %v1369 = vsub.s32 1, %v1368
    %v1370 = vrot.slane %v943, %v1369
    %v1371 = vlaneseq
    %v1372 = vshrl.u32 %v1371, 7
    %v1373 = vsub.s32 2, %v1372
    %v1374 = vrot.slane %v943, %v1373
    %v1375 = vlaneseq
    %v1376 = vshrl.u32 %v1375, 7
    %v1377 = vsub.s32 3, %v1376
    %v1378 = vrot.slane %v943, %v1377
    %v1383 = vmul.f32 %v1361, %v1366
    %v1384 = vmul.f32 %v1360, %v1370
    %v1385 = vmul.f32 %v1359, %v1374
    %v1386 = vmul.f32 %v1358, %v1378
    %v1387 = vpack.c.bf16 %v1383, %v1383
    %v1388 = vpack.c.bf16 %v1384, %v1384
    %v1389 = vpack.c.bf16 %v1385, %v1385
    %v1390 = vpack.c.bf16 %v1386, %v1386
    %1391 = vrot.lane.b32.xlu0 %v1150, 120
    %v1392 = vpop.permute.xlu0 %1391
    %v1394 = vsel %vm1153, %v1392, 0
    %v1397 = vsel %vm1157, %v1387, 0
    %v1400 = vsel %vm1157, %v1388, 0
    %v1403 = vsel %vm1157, %v1389, 0
    %v1406 = vsel %vm1157, %v1390, 0
    %1408 = vmatprep.subr.bf16.mxu0 0
    %1409 = vmatpush1.bf16.msra.mxu0 0
    %1410 = vmatprep.subr.bf16.mxu0 0
    %1411 = vmatpush1.bf16.msra.mxu0 0
    %1412 = vmatprep.subr.bf16.mxu0 0
    %1413 = vmatpush1.bf16.msra.mxu0 0
    %1414 = vmatprep.subr.bf16.mxu0 0
    %1415 = vmatpush1.bf16.msra.mxu0 0
    %1416 = vmatprep.subr.bf16.mxu0 0
    %1417 = vmatpush1.bf16.msra.mxu0 0
    %1418 = vmatprep.subr.bf16.mxu0 0
    %1419 = vmatpush1.bf16.msra.mxu0 0
    %1420 = vmatprep.subr.bf16.mxu0 0
    %1421 = vmatpush1.bf16.msra.mxu0 0
    %1422 = vmatprep.subr.bf16.mxu0 %v1400
    %1423 = vmatpush1.bf16.msra.mxu0 %v1397
    %1424 = vmatprep.subr.bf16.mxu0 0
    %1425 = vmatpush2.bf16.msra.mxu0 0
    %1426 = vmatprep.subr.bf16.mxu0 0
    %1427 = vmatpush2.bf16.msra.mxu0 0
    %1428 = vmatprep.subr.bf16.mxu0 0
    %1429 = vmatpush2.bf16.msra.mxu0 0
    %1430 = vmatprep.subr.bf16.mxu0 0
    %1431 = vmatpush2.bf16.msra.mxu0 0
    %1432 = vmatprep.subr.bf16.mxu0 0
    %1433 = vmatpush2.bf16.msra.mxu0 0
    %1434 = vmatprep.subr.bf16.mxu0 0
    %1435 = vmatpush2.bf16.msra.mxu0 0
    %1436 = vmatprep.subr.bf16.mxu0 0
    %1437 = vmatpush2.bf16.msra.mxu0 0
    %1438 = vmatprep.subr.bf16.mxu0 0
    %1439 = vmatpush2.bf16.msra.mxu0 0
    %1440 = vmatprep.mubr.bf16.mxu0 0
    %1441 = vmatmul.mubr.bf16.gmra.mxu0 %v1394
    %v1442 = vpop.f32.mrf.mxu0
    %v1443 = vadd.f32 0.0, %v1442
    %v1444 = vpop.f32.mrf.mxu0
    %v1445 = vadd.f32 0.0, %v1444
    %v1446 = vpop.f32.mrf.mxu0
    %v1447 = vpop.f32.mrf.mxu0
    %1448 = vdwg.mxu0
    %1449 = vmatprep.subr.bf16.mxu0 0
    %1450 = vmatpush1.bf16.msra.mxu0 0
    %1451 = vmatprep.subr.bf16.mxu0 0
    %1452 = vmatpush1.bf16.msra.mxu0 0
    %1453 = vmatprep.subr.bf16.mxu0 0
    %1454 = vmatpush1.bf16.msra.mxu0 0
    %1455 = vmatprep.subr.bf16.mxu0 0
    %1456 = vmatpush1.bf16.msra.mxu0 0
    %1457 = vmatprep.subr.bf16.mxu0 0
    %1458 = vmatpush1.bf16.msra.mxu0 0
    %1459 = vmatprep.subr.bf16.mxu0 0
    %1460 = vmatpush1.bf16.msra.mxu0 0
    %1461 = vmatprep.subr.bf16.mxu0 0
    %1462 = vmatpush1.bf16.msra.mxu0 0
    %1463 = vmatprep.subr.bf16.mxu0 %v1406
    %1464 = vmatpush1.bf16.msra.mxu0 %v1403
    %1465 = vmatprep.subr.bf16.mxu0 0
    %1466 = vmatpush2.bf16.msra.mxu0 0
    %1467 = vmatprep.subr.bf16.mxu0 0
    %1468 = vmatpush2.bf16.msra.mxu0 0
    %1469 = vmatprep.subr.bf16.mxu0 0
    %1470 = vmatpush2.bf16.msra.mxu0 0
    %1471 = vmatprep.subr.bf16.mxu0 0
    %1472 = vmatpush2.bf16.msra.mxu0 0
    %1473 = vmatprep.subr.bf16.mxu0 0
    %1474 = vmatpush2.bf16.msra.mxu0 0
    %1475 = vmatprep.subr.bf16.mxu0 0
    %1476 = vmatpush2.bf16.msra.mxu0 0
    %1477 = vmatprep.subr.bf16.mxu0 0
    %1478 = vmatpush2.bf16.msra.mxu0 0
    %1479 = vmatprep.subr.bf16.mxu0 0
    %1480 = vmatpush2.bf16.msra.mxu0 0
    %1481 = vmatprep.mubr.bf16.mxu0 0
    %1482 = vmatmul.mubr.bf16.gmra.mxu0 %v1394
    %v1483 = vpop.f32.mrf.mxu0
    %v1484 = vadd.f32 0.0, %v1483
    %v1485 = vpop.f32.mrf.mxu0
    %v1486 = vadd.f32 0.0, %v1485
    %v1487 = vpop.f32.mrf.mxu0
    %v1488 = vpop.f32.mrf.mxu0
    %1489 = vdwg.mxu0
    %v1490 = vadd.f32 %v1302, %v1443
    %v1491 = vadd.f32 %v1304, %v1445
    %v1492 = vadd.f32 %v1343, %v1484
    %v1493 = vadd.f32 %v1345, %v1486
    %1494 = vrot.lane.b32.xlu0 %v1049, 1
    %v1495 = vpop.permute.xlu0 %1494
    %1496 = vrot.lane.b32.xlu0 %v1053, 1
    %v1497 = vpop.permute.xlu0 %1496
    %1498 = vrot.lane.b32.xlu0 %v1050, 1
    %v1499 = vpop.permute.xlu0 %1498
    %1500 = vrot.lane.b32.xlu0 %v1054, 1
    %v1501 = vpop.permute.xlu0 %1500
    %vm1502 = vcmp.lt.s32.totalorder %v1066, 1
    %v1503 = vsel %vm1502, %v1499, %v1501
    %v1504 = vsel %vm1502, %v1497, %v1499
    %v1505 = vsel %vm1502, %v1495, %v1497
    %v1506 = vsel %vm1502, %v1501, %v1495
    %v1508 = vlaneseq
    %v1509 = vshrl.u32 %v1508, 7
    %v1510 = vsub.s32 0, %v1509
    %v1511 = vrot.slane %v945, %v1510
    %v1512 = vlaneseq
    %v1513 = vshrl.u32 %v1512, 7
    %v1514 = vsub.s32 1, %v1513
    %v1515 = vrot.slane %v945, %v1514
    %v1516 = vlaneseq
    %v1517 = vshrl.u32 %v1516, 7
    %v1518 = vsub.s32 2, %v1517
    %v1519 = vrot.slane %v945, %v1518
    %v1520 = vlaneseq
    %v1521 = vshrl.u32 %v1520, 7
    %v1522 = vsub.s32 3, %v1521
    %v1523 = vrot.slane %v945, %v1522
    %v1528 = vmul.f32 %v1506, %v1511
    %v1529 = vmul.f32 %v1505, %v1515
    %v1530 = vmul.f32 %v1504, %v1519
    %v1531 = vmul.f32 %v1503, %v1523
    %v1532 = vpack.c.bf16 %v1528, %v1528
    %v1533 = vpack.c.bf16 %v1529, %v1529
    %v1534 = vpack.c.bf16 %v1530, %v1530
    %v1535 = vpack.c.bf16 %v1531, %v1531
    %1536 = vrot.lane.b32.xlu0 %v1150, 116
    %v1537 = vpop.permute.xlu0 %1536
    %v1539 = vsel %vm1153, %v1537, 0
    %v1542 = vsel %vm1157, %v1532, 0
    %v1545 = vsel %vm1157, %v1533, 0
    %v1548 = vsel %vm1157, %v1534, 0
    %v1551 = vsel %vm1157, %v1535, 0
    %1553 = vmatprep.subr.bf16.mxu0 0
    %1554 = vmatpush1.bf16.msra.mxu0 0
    %1555 = vmatprep.subr.bf16.mxu0 0
    %1556 = vmatpush1.bf16.msra.mxu0 0
    %1557 = vmatprep.subr.bf16.mxu0 0
    %1558 = vmatpush1.bf16.msra.mxu0 0
    %1559 = vmatprep.subr.bf16.mxu0 0
    %1560 = vmatpush1.bf16.msra.mxu0 0
    %1561 = vmatprep.subr.bf16.mxu0 0
    %1562 = vmatpush1.bf16.msra.mxu0 0
    %1563 = vmatprep.subr.bf16.mxu0 0
    %1564 = vmatpush1.bf16.msra.mxu0 0
    %1565 = vmatprep.subr.bf16.mxu0 0
    %1566 = vmatpush1.bf16.msra.mxu0 0
    %1567 = vmatprep.subr.bf16.mxu0 %v1545
    %1568 = vmatpush1.bf16.msra.mxu0 %v1542
    %1569 = vmatprep.subr.bf16.mxu0 0
    %1570 = vmatpush2.bf16.msra.mxu0 0
    %1571 = vmatprep.subr.bf16.mxu0 0
    %1572 = vmatpush2.bf16.msra.mxu0 0
    %1573 = vmatprep.subr.bf16.mxu0 0
    %1574 = vmatpush2.bf16.msra.mxu0 0
    %1575 = vmatprep.subr.bf16.mxu0 0
    %1576 = vmatpush2.bf16.msra.mxu0 0
    %1577 = vmatprep.subr.bf16.mxu0 0
    %1578 = vmatpush2.bf16.msra.mxu0 0
    %1579 = vmatprep.subr.bf16.mxu0 0
    %1580 = vmatpush2.bf16.msra.mxu0 0
    %1581 = vmatprep.subr.bf16.mxu0 0
    %1582 = vmatpush2.bf16.msra.mxu0 0
    %1583 = vmatprep.subr.bf16.mxu0 0
    %1584 = vmatpush2.bf16.msra.mxu0 0
    %1585 = vmatprep.mubr.bf16.mxu0 0
    %1586 = vmatmul.mubr.bf16.gmra.mxu0 %v1539
    %v1587 = vpop.f32.mrf.mxu0
    %v1588 = vadd.f32 0.0, %v1587
    %v1589 = vpop.f32.mrf.mxu0
    %v1590 = vadd.f32 0.0, %v1589
    %v1591 = vpop.f32.mrf.mxu0
    %v1592 = vpop.f32.mrf.mxu0
    %1593 = vdwg.mxu0
    %1594 = vmatprep.subr.bf16.mxu0 0
    %1595 = vmatpush1.bf16.msra.mxu0 0
    %1596 = vmatprep.subr.bf16.mxu0 0
    %1597 = vmatpush1.bf16.msra.mxu0 0
    %1598 = vmatprep.subr.bf16.mxu0 0
    %1599 = vmatpush1.bf16.msra.mxu0 0
    %1600 = vmatprep.subr.bf16.mxu0 0
    %1601 = vmatpush1.bf16.msra.mxu0 0
    %1602 = vmatprep.subr.bf16.mxu0 0
    %1603 = vmatpush1.bf16.msra.mxu0 0
    %1604 = vmatprep.subr.bf16.mxu0 0
    %1605 = vmatpush1.bf16.msra.mxu0 0
    %1606 = vmatprep.subr.bf16.mxu0 0
    %1607 = vmatpush1.bf16.msra.mxu0 0
    %1608 = vmatprep.subr.bf16.mxu0 %v1551
    %1609 = vmatpush1.bf16.msra.mxu0 %v1548
    %1610 = vmatprep.subr.bf16.mxu0 0
    %1611 = vmatpush2.bf16.msra.mxu0 0
    %1612 = vmatprep.subr.bf16.mxu0 0
    %1613 = vmatpush2.bf16.msra.mxu0 0
    %1614 = vmatprep.subr.bf16.mxu0 0
    %1615 = vmatpush2.bf16.msra.mxu0 0
    %1616 = vmatprep.subr.bf16.mxu0 0
    %1617 = vmatpush2.bf16.msra.mxu0 0
    %1618 = vmatprep.subr.bf16.mxu0 0
    %1619 = vmatpush2.bf16.msra.mxu0 0
    %1620 = vmatprep.subr.bf16.mxu0 0
    %1621 = vmatpush2.bf16.msra.mxu0 0
    %1622 = vmatprep.subr.bf16.mxu0 0
    %1623 = vmatpush2.bf16.msra.mxu0 0
    %1624 = vmatprep.subr.bf16.mxu0 0
    %1625 = vmatpush2.bf16.msra.mxu0 0
    %1626 = vmatprep.mubr.bf16.mxu0 0
    %1627 = vmatmul.mubr.bf16.gmra.mxu0 %v1539
    %v1628 = vpop.f32.mrf.mxu0
    %v1629 = vadd.f32 0.0, %v1628
    %v1630 = vpop.f32.mrf.mxu0
    %v1631 = vadd.f32 0.0, %v1630
    %v1632 = vpop.f32.mrf.mxu0
    %v1633 = vpop.f32.mrf.mxu0
    %1634 = vdwg.mxu0
    %v1635 = vadd.f32 %v1490, %v1588
    %v1636 = vadd.f32 %v1491, %v1590
    %v1637 = vadd.f32 %v1492, %v1629
    %v1638 = vadd.f32 %v1493, %v1631
    %v1639 = vpack.c.bf16 %v1049, %v1049
    %v1640 = vpack.c.bf16 %v1053, %v1053
    %v1641 = vpack.c.bf16 %v1050, %v1050
    %v1642 = vpack.c.bf16 %v1054, %v1054
    %1643 = vrot.lane.b32.xlu0 %v1150, 112
    %v1644 = vpop.permute.xlu0 %1643
    %v1646 = vsel %vm1153, %v1644, 0
    %v1649 = vsel %vm1157, %v1639, 0
    %v1652 = vsel %vm1157, %v1640, 0
    %v1655 = vsel %vm1157, %v1641, 0
    %v1658 = vsel %vm1157, %v1642, 0
    %1660 = vmatprep.subr.bf16.mxu0 0
    %1661 = vmatpush1.bf16.msra.mxu0 0
    %1662 = vmatprep.subr.bf16.mxu0 0
    %1663 = vmatpush1.bf16.msra.mxu0 0
    %1664 = vmatprep.subr.bf16.mxu0 0
    %1665 = vmatpush1.bf16.msra.mxu0 0
    %1666 = vmatprep.subr.bf16.mxu0 0
    %1667 = vmatpush1.bf16.msra.mxu0 0
    %1668 = vmatprep.subr.bf16.mxu0 0
    %1669 = vmatpush1.bf16.msra.mxu0 0
    %1670 = vmatprep.subr.bf16.mxu0 0
    %1671 = vmatpush1.bf16.msra.mxu0 0
    %1672 = vmatprep.subr.bf16.mxu0 0
    %1673 = vmatpush1.bf16.msra.mxu0 0
    %1674 = vmatprep.subr.bf16.mxu0 %v1652
    %1675 = vmatpush1.bf16.msra.mxu0 %v1649
    %1676 = vmatprep.subr.bf16.mxu0 0
    %1677 = vmatpush2.bf16.msra.mxu0 0
    %1678 = vmatprep.subr.bf16.mxu0 0
    %1679 = vmatpush2.bf16.msra.mxu0 0
    %1680 = vmatprep.subr.bf16.mxu0 0
    %1681 = vmatpush2.bf16.msra.mxu0 0
    %1682 = vmatprep.subr.bf16.mxu0 0
    %1683 = vmatpush2.bf16.msra.mxu0 0
    %1684 = vmatprep.subr.bf16.mxu0 0
    %1685 = vmatpush2.bf16.msra.mxu0 0
    %1686 = vmatprep.subr.bf16.mxu0 0
    %1687 = vmatpush2.bf16.msra.mxu0 0
    %1688 = vmatprep.subr.bf16.mxu0 0
    %1689 = vmatpush2.bf16.msra.mxu0 0
    %1690 = vmatprep.subr.bf16.mxu0 0
    %1691 = vmatpush2.bf16.msra.mxu0 0
    %1692 = vmatprep.mubr.bf16.mxu0 0
    %1693 = vmatmul.mubr.bf16.gmra.mxu0 %v1646
    %v1694 = vpop.f32.mrf.mxu0
    %v1695 = vadd.f32 0.0, %v1694
    %v1696 = vpop.f32.mrf.mxu0
    %v1697 = vadd.f32 0.0, %v1696
    %v1698 = vpop.f32.mrf.mxu0
    %v1699 = vpop.f32.mrf.mxu0
    %1700 = vdwg.mxu0
    %1701 = vmatprep.subr.bf16.mxu0 0
    %1702 = vmatpush1.bf16.msra.mxu0 0
    %1703 = vmatprep.subr.bf16.mxu0 0
    %1704 = vmatpush1.bf16.msra.mxu0 0
    %1705 = vmatprep.subr.bf16.mxu0 0
    %1706 = vmatpush1.bf16.msra.mxu0 0
    %1707 = vmatprep.subr.bf16.mxu0 0
    %1708 = vmatpush1.bf16.msra.mxu0 0
    %1709 = vmatprep.subr.bf16.mxu0 0
    %1710 = vmatpush1.bf16.msra.mxu0 0
    %1711 = vmatprep.subr.bf16.mxu0 0
    %1712 = vmatpush1.bf16.msra.mxu0 0
    %1713 = vmatprep.subr.bf16.mxu0 0
    %1714 = vmatpush1.bf16.msra.mxu0 0
    %1715 = vmatprep.subr.bf16.mxu0 %v1658
    %1716 = vmatpush1.bf16.msra.mxu0 %v1655
    %1717 = vmatprep.subr.bf16.mxu0 0
    %1718 = vmatpush2.bf16.msra.mxu0 0
    %1719 = vmatprep.subr.bf16.mxu0 0
    %1720 = vmatpush2.bf16.msra.mxu0 0
    %1721 = vmatprep.subr.bf16.mxu0 0
    %1722 = vmatpush2.bf16.msra.mxu0 0
    %1723 = vmatprep.subr.bf16.mxu0 0
    %1724 = vmatpush2.bf16.msra.mxu0 0
    %1725 = vmatprep.subr.bf16.mxu0 0
    %1726 = vmatpush2.bf16.msra.mxu0 0
    %1727 = vmatprep.subr.bf16.mxu0 0
    %1728 = vmatpush2.bf16.msra.mxu0 0
    %1729 = vmatprep.subr.bf16.mxu0 0
    %1730 = vmatpush2.bf16.msra.mxu0 0
    %1731 = vmatprep.subr.bf16.mxu0 0
    %1732 = vmatpush2.bf16.msra.mxu0 0
    %1733 = vmatprep.mubr.bf16.mxu0 0
    %1734 = vmatmul.mubr.bf16.gmra.mxu0 %v1646
    %v1735 = vpop.f32.mrf.mxu0
    %v1736 = vadd.f32 0.0, %v1735
    %v1737 = vpop.f32.mrf.mxu0
    %v1738 = vadd.f32 0.0, %v1737
    %v1739 = vpop.f32.mrf.mxu0
    %v1740 = vpop.f32.mrf.mxu0
    %1741 = vdwg.mxu0
    %v1742 = vadd.f32 %v1635, %v1695
    %v1743 = vadd.f32 %v1636, %v1697
    %v1744 = vadd.f32 %v1637, %v1736
    %v1745 = vadd.f32 %v1638, %v1738
    %1746 = vrot.lane.b32.xlu0 %v1049, 127
    %v1747 = vpop.permute.xlu0 %1746
    %1748 = vrot.lane.b32.xlu0 %v1053, 127
    %v1749 = vpop.permute.xlu0 %1748
    %1750 = vrot.lane.b32.xlu0 %v1050, 127
    %v1751 = vpop.permute.xlu0 %1750
    %1752 = vrot.lane.b32.xlu0 %v1054, 127
    %v1753 = vpop.permute.xlu0 %1752
    %vm1754 = vcmp.lt.s32.totalorder %v1066, 127
    %v1755 = vsel %vm1754, %v1751, %v1753
    %v1756 = vsel %vm1754, %v1749, %v1751
    %v1757 = vsel %vm1754, %v1747, %v1749
    %v1758 = vsel %vm1754, %v1753, %v1747
    %v1760 = vlaneseq
    %v1761 = vshrl.u32 %v1760, 7
    %v1762 = vsub.s32 0, %v1761
    %v1763 = vrot.slane %v947, %v1762
    %v1764 = vlaneseq
    %v1765 = vshrl.u32 %v1764, 7
    %v1766 = vsub.s32 1, %v1765
    %v1767 = vrot.slane %v947, %v1766
    %v1768 = vlaneseq
    %v1769 = vshrl.u32 %v1768, 7
    %v1770 = vsub.s32 2, %v1769
    %v1771 = vrot.slane %v947, %v1770
    %v1772 = vlaneseq
    %v1773 = vshrl.u32 %v1772, 7
    %v1774 = vsub.s32 3, %v1773
    %v1775 = vrot.slane %v947, %v1774
    %v1780 = vmul.f32 %v1757, %v1763
    %v1781 = vmul.f32 %v1756, %v1767
    %v1782 = vmul.f32 %v1755, %v1771
    %v1783 = vmul.f32 %v1758, %v1775
    %v1784 = vpack.c.bf16 %v1780, %v1780
    %v1785 = vpack.c.bf16 %v1781, %v1781
    %v1786 = vpack.c.bf16 %v1782, %v1782
    %v1787 = vpack.c.bf16 %v1783, %v1783
    %1788 = vrot.lane.b32.xlu0 %v1150, 108
    %v1789 = vpop.permute.xlu0 %1788
    %v1791 = vsel %vm1153, %v1789, 0
    %v1794 = vsel %vm1157, %v1784, 0
    %v1797 = vsel %vm1157, %v1785, 0
    %v1800 = vsel %vm1157, %v1786, 0
    %v1803 = vsel %vm1157, %v1787, 0
    %1805 = vmatprep.subr.bf16.mxu0 0
    %1806 = vmatpush1.bf16.msra.mxu0 0
    %1807 = vmatprep.subr.bf16.mxu0 0
    %1808 = vmatpush1.bf16.msra.mxu0 0
    %1809 = vmatprep.subr.bf16.mxu0 0
    %1810 = vmatpush1.bf16.msra.mxu0 0
    %1811 = vmatprep.subr.bf16.mxu0 0
    %1812 = vmatpush1.bf16.msra.mxu0 0
    %1813 = vmatprep.subr.bf16.mxu0 0
    %1814 = vmatpush1.bf16.msra.mxu0 0
    %1815 = vmatprep.subr.bf16.mxu0 0
    %1816 = vmatpush1.bf16.msra.mxu0 0
    %1817 = vmatprep.subr.bf16.mxu0 0
    %1818 = vmatpush1.bf16.msra.mxu0 0
    %1819 = vmatprep.subr.bf16.mxu0 %v1797
    %1820 = vmatpush1.bf16.msra.mxu0 %v1794
    %1821 = vmatprep.subr.bf16.mxu0 0
    %1822 = vmatpush2.bf16.msra.mxu0 0
    %1823 = vmatprep.subr.bf16.mxu0 0
    %1824 = vmatpush2.bf16.msra.mxu0 0
    %1825 = vmatprep.subr.bf16.mxu0 0
    %1826 = vmatpush2.bf16.msra.mxu0 0
    %1827 = vmatprep.subr.bf16.mxu0 0
    %1828 = vmatpush2.bf16.msra.mxu0 0
    %1829 = vmatprep.subr.bf16.mxu0 0
    %1830 = vmatpush2.bf16.msra.mxu0 0
    %1831 = vmatprep.subr.bf16.mxu0 0
    %1832 = vmatpush2.bf16.msra.mxu0 0
    %1833 = vmatprep.subr.bf16.mxu0 0
    %1834 = vmatpush2.bf16.msra.mxu0 0
    %1835 = vmatprep.subr.bf16.mxu0 0
    %1836 = vmatpush2.bf16.msra.mxu0 0
    %1837 = vmatprep.mubr.bf16.mxu0 0
    %1838 = vmatmul.mubr.bf16.gmra.mxu0 %v1791
    %v1839 = vpop.f32.mrf.mxu0
    %v1840 = vadd.f32 0.0, %v1839
    %v1841 = vpop.f32.mrf.mxu0
    %v1842 = vadd.f32 0.0, %v1841
    %v1843 = vpop.f32.mrf.mxu0
    %v1844 = vpop.f32.mrf.mxu0
    %1845 = vdwg.mxu0
    %1846 = vmatprep.subr.bf16.mxu0 0
    %1847 = vmatpush1.bf16.msra.mxu0 0
    %1848 = vmatprep.subr.bf16.mxu0 0
    %1849 = vmatpush1.bf16.msra.mxu0 0
    %1850 = vmatprep.subr.bf16.mxu0 0
    %1851 = vmatpush1.bf16.msra.mxu0 0
    %1852 = vmatprep.subr.bf16.mxu0 0
    %1853 = vmatpush1.bf16.msra.mxu0 0
    %1854 = vmatprep.subr.bf16.mxu0 0
    %1855 = vmatpush1.bf16.msra.mxu0 0
    %1856 = vmatprep.subr.bf16.mxu0 0
    %1857 = vmatpush1.bf16.msra.mxu0 0
    %1858 = vmatprep.subr.bf16.mxu0 0
    %1859 = vmatpush1.bf16.msra.mxu0 0
    %1860 = vmatprep.subr.bf16.mxu0 %v1803
    %1861 = vmatpush1.bf16.msra.mxu0 %v1800
    %1862 = vmatprep.subr.bf16.mxu0 0
    %1863 = vmatpush2.bf16.msra.mxu0 0
    %1864 = vmatprep.subr.bf16.mxu0 0
    %1865 = vmatpush2.bf16.msra.mxu0 0
    %1866 = vmatprep.subr.bf16.mxu0 0
    %1867 = vmatpush2.bf16.msra.mxu0 0
    %1868 = vmatprep.subr.bf16.mxu0 0
    %1869 = vmatpush2.bf16.msra.mxu0 0
    %1870 = vmatprep.subr.bf16.mxu0 0
    %1871 = vmatpush2.bf16.msra.mxu0 0
    %1872 = vmatprep.subr.bf16.mxu0 0
    %1873 = vmatpush2.bf16.msra.mxu0 0
    %1874 = vmatprep.subr.bf16.mxu0 0
    %1875 = vmatpush2.bf16.msra.mxu0 0
    %1876 = vmatprep.subr.bf16.mxu0 0
    %1877 = vmatpush2.bf16.msra.mxu0 0
    %1878 = vmatprep.mubr.bf16.mxu0 0
    %1879 = vmatmul.mubr.bf16.gmra.mxu0 %v1791
    %v1880 = vpop.f32.mrf.mxu0
    %v1881 = vadd.f32 0.0, %v1880
    %v1882 = vpop.f32.mrf.mxu0
    %v1883 = vadd.f32 0.0, %v1882
    %v1884 = vpop.f32.mrf.mxu0
    %v1885 = vpop.f32.mrf.mxu0
    %1886 = vdwg.mxu0
    %v1887 = vadd.f32 %v1742, %v1840
    %v1888 = vadd.f32 %v1743, %v1842
    %v1889 = vadd.f32 %v1744, %v1881
    %v1890 = vadd.f32 %v1745, %v1883
    %1891 = vrot.lane.b32.xlu0 %v1049, 113
    %v1892 = vpop.permute.xlu0 %1891
    %1893 = vrot.lane.b32.xlu0 %v1053, 113
    %v1894 = vpop.permute.xlu0 %1893
    %1895 = vrot.lane.b32.xlu0 %v1050, 113
    %v1896 = vpop.permute.xlu0 %1895
    %1897 = vrot.lane.b32.xlu0 %v1054, 113
    %v1898 = vpop.permute.xlu0 %1897
    %vm1899 = vcmp.lt.s32.totalorder %v1066, 113
    %v1900 = vsel %vm1899, %v1896, %v1898
    %v1901 = vsel %vm1899, %v1894, %v1896
    %v1902 = vsel %vm1899, %v1892, %v1894
    %v1903 = vsel %vm1899, %v1898, %v1892
    %v1905 = vlaneseq
    %v1906 = vshrl.u32 %v1905, 7
    %v1907 = vsub.s32 0, %v1906
    %v1908 = vrot.slane %v951, %v1907
    %v1909 = vlaneseq
    %v1910 = vshrl.u32 %v1909, 7
    %v1911 = vsub.s32 1, %v1910
    %v1912 = vrot.slane %v951, %v1911
    %v1913 = vlaneseq
    %v1914 = vshrl.u32 %v1913, 7
    %v1915 = vsub.s32 2, %v1914
    %v1916 = vrot.slane %v951, %v1915
    %v1917 = vlaneseq
    %v1918 = vshrl.u32 %v1917, 7
    %v1919 = vsub.s32 3, %v1918
    %v1920 = vrot.slane %v951, %v1919
    %v1925 = vmul.f32 %v1902, %v1908
    %v1926 = vmul.f32 %v1901, %v1912
    %v1927 = vmul.f32 %v1900, %v1916
    %v1928 = vmul.f32 %v1903, %v1920
    %v1929 = vpack.c.bf16 %v1925, %v1925
    %v1930 = vpack.c.bf16 %v1926, %v1926
    %v1931 = vpack.c.bf16 %v1927, %v1927
    %v1932 = vpack.c.bf16 %v1928, %v1928
    %1933 = vrot.lane.b32.xlu0 %v1150, 104
    %v1934 = vpop.permute.xlu0 %1933
    %v1936 = vsel %vm1153, %v1934, 0
    %v1939 = vsel %vm1157, %v1929, 0
    %v1942 = vsel %vm1157, %v1930, 0
    %v1945 = vsel %vm1157, %v1931, 0
    %v1948 = vsel %vm1157, %v1932, 0
    %1950 = vmatprep.subr.bf16.mxu0 0
    %1951 = vmatpush1.bf16.msra.mxu0 0
    %1952 = vmatprep.subr.bf16.mxu0 0
    %1953 = vmatpush1.bf16.msra.mxu0 0
    %1954 = vmatprep.subr.bf16.mxu0 0
    %1955 = vmatpush1.bf16.msra.mxu0 0
    %1956 = vmatprep.subr.bf16.mxu0 0
    %1957 = vmatpush1.bf16.msra.mxu0 0
    %1958 = vmatprep.subr.bf16.mxu0 0
    %1959 = vmatpush1.bf16.msra.mxu0 0
    %1960 = vmatprep.subr.bf16.mxu0 0
    %1961 = vmatpush1.bf16.msra.mxu0 0
    %1962 = vmatprep.subr.bf16.mxu0 0
    %1963 = vmatpush1.bf16.msra.mxu0 0
    %1964 = vmatprep.subr.bf16.mxu0 %v1942
    %1965 = vmatpush1.bf16.msra.mxu0 %v1939
    %1966 = vmatprep.subr.bf16.mxu0 0
    %1967 = vmatpush2.bf16.msra.mxu0 0
    %1968 = vmatprep.subr.bf16.mxu0 0
    %1969 = vmatpush2.bf16.msra.mxu0 0
    %1970 = vmatprep.subr.bf16.mxu0 0
    %1971 = vmatpush2.bf16.msra.mxu0 0
    %1972 = vmatprep.subr.bf16.mxu0 0
    %1973 = vmatpush2.bf16.msra.mxu0 0
    %1974 = vmatprep.subr.bf16.mxu0 0
    %1975 = vmatpush2.bf16.msra.mxu0 0
    %1976 = vmatprep.subr.bf16.mxu0 0
    %1977 = vmatpush2.bf16.msra.mxu0 0
    %1978 = vmatprep.subr.bf16.mxu0 0
    %1979 = vmatpush2.bf16.msra.mxu0 0
    %1980 = vmatprep.subr.bf16.mxu0 0
    %1981 = vmatpush2.bf16.msra.mxu0 0
    %1982 = vmatprep.mubr.bf16.mxu0 0
    %1983 = vmatmul.mubr.bf16.gmra.mxu0 %v1936
    %v1984 = vpop.f32.mrf.mxu0
    %v1985 = vadd.f32 0.0, %v1984
    %v1986 = vpop.f32.mrf.mxu0
    %v1987 = vadd.f32 0.0, %v1986
    %v1988 = vpop.f32.mrf.mxu0
    %v1989 = vpop.f32.mrf.mxu0
    %1990 = vdwg.mxu0
    %1991 = vmatprep.subr.bf16.mxu0 0
    %1992 = vmatpush1.bf16.msra.mxu0 0
    %1993 = vmatprep.subr.bf16.mxu0 0
    %1994 = vmatpush1.bf16.msra.mxu0 0
    %1995 = vmatprep.subr.bf16.mxu0 0
    %1996 = vmatpush1.bf16.msra.mxu0 0
    %1997 = vmatprep.subr.bf16.mxu0 0
    %1998 = vmatpush1.bf16.msra.mxu0 0
    %1999 = vmatprep.subr.bf16.mxu0 0
    %2000 = vmatpush1.bf16.msra.mxu0 0
    %2001 = vmatprep.subr.bf16.mxu0 0
    %2002 = vmatpush1.bf16.msra.mxu0 0
    %2003 = vmatprep.subr.bf16.mxu0 0
    %2004 = vmatpush1.bf16.msra.mxu0 0
    %2005 = vmatprep.subr.bf16.mxu0 %v1948
    %2006 = vmatpush1.bf16.msra.mxu0 %v1945
    %2007 = vmatprep.subr.bf16.mxu0 0
    %2008 = vmatpush2.bf16.msra.mxu0 0
    %2009 = vmatprep.subr.bf16.mxu0 0
    %2010 = vmatpush2.bf16.msra.mxu0 0
    %2011 = vmatprep.subr.bf16.mxu0 0
    %2012 = vmatpush2.bf16.msra.mxu0 0
    %2013 = vmatprep.subr.bf16.mxu0 0
    %2014 = vmatpush2.bf16.msra.mxu0 0
    %2015 = vmatprep.subr.bf16.mxu0 0
    %2016 = vmatpush2.bf16.msra.mxu0 0
    %2017 = vmatprep.subr.bf16.mxu0 0
    %2018 = vmatpush2.bf16.msra.mxu0 0
    %2019 = vmatprep.subr.bf16.mxu0 0
    %2020 = vmatpush2.bf16.msra.mxu0 0
    %2021 = vmatprep.subr.bf16.mxu0 0
    %2022 = vmatpush2.bf16.msra.mxu0 0
    %2023 = vmatprep.mubr.bf16.mxu0 0
    %2024 = vmatmul.mubr.bf16.gmra.mxu0 %v1936
    %v2025 = vpop.f32.mrf.mxu0
    %v2026 = vadd.f32 0.0, %v2025
    %v2027 = vpop.f32.mrf.mxu0
    %v2028 = vadd.f32 0.0, %v2027
    %v2029 = vpop.f32.mrf.mxu0
    %v2030 = vpop.f32.mrf.mxu0
    %2031 = vdwg.mxu0
    %v2032 = vadd.f32 %v1887, %v1985
    %v2033 = vadd.f32 %v1888, %v1987
    %v2034 = vadd.f32 %v1889, %v2026
    %v2035 = vadd.f32 %v1890, %v2028
    %2036 = vrot.lane.b32.xlu0 %v1049, 112
    %v2037 = vpop.permute.xlu0 %2036
    %2038 = vrot.lane.b32.xlu0 %v1053, 112
    %v2039 = vpop.permute.xlu0 %2038
    %2040 = vrot.lane.b32.xlu0 %v1050, 112
    %v2041 = vpop.permute.xlu0 %2040
    %2042 = vrot.lane.b32.xlu0 %v1054, 112
    %v2043 = vpop.permute.xlu0 %2042
    %vm2044 = vcmp.lt.s32.totalorder %v1066, 112
    %v2045 = vsel %vm2044, %v2041, %v2043
    %v2046 = vsel %vm2044, %v2039, %v2041
    %v2047 = vsel %vm2044, %v2037, %v2039
    %v2048 = vsel %vm2044, %v2043, %v2037
    %v2050 = vlaneseq
    %v2051 = vshrl.u32 %v2050, 7
    %v2052 = vsub.s32 0, %v2051
    %v2053 = vrot.slane %v953, %v2052
    %v2054 = vlaneseq
    %v2055 = vshrl.u32 %v2054, 7
    %v2056 = vsub.s32 1, %v2055
    %v2057 = vrot.slane %v953, %v2056
    %v2058 = vlaneseq
    %v2059 = vshrl.u32 %v2058, 7
    %v2060 = vsub.s32 2, %v2059
    %v2061 = vrot.slane %v953, %v2060
    %v2062 = vlaneseq
    %v2063 = vshrl.u32 %v2062, 7
    %v2064 = vsub.s32 3, %v2063
    %v2065 = vrot.slane %v953, %v2064
    %v2070 = vmul.f32 %v2047, %v2053
    %v2071 = vmul.f32 %v2046, %v2057
    %v2072 = vmul.f32 %v2045, %v2061
    %v2073 = vmul.f32 %v2048, %v2065
    %v2074 = vpack.c.bf16 %v2070, %v2070
    %v2075 = vpack.c.bf16 %v2071, %v2071
    %v2076 = vpack.c.bf16 %v2072, %v2072
    %v2077 = vpack.c.bf16 %v2073, %v2073
    %2078 = vrot.lane.b32.xlu0 %v1150, 100
    %v2079 = vpop.permute.xlu0 %2078
    %v2081 = vsel %vm1153, %v2079, 0
    %v2084 = vsel %vm1157, %v2074, 0
    %v2087 = vsel %vm1157, %v2075, 0
    %v2090 = vsel %vm1157, %v2076, 0
    %v2093 = vsel %vm1157, %v2077, 0
    %2095 = vmatprep.subr.bf16.mxu0 0
    %2096 = vmatpush1.bf16.msra.mxu0 0
    %2097 = vmatprep.subr.bf16.mxu0 0
    %2098 = vmatpush1.bf16.msra.mxu0 0
    %2099 = vmatprep.subr.bf16.mxu0 0
    %2100 = vmatpush1.bf16.msra.mxu0 0
    %2101 = vmatprep.subr.bf16.mxu0 0
    %2102 = vmatpush1.bf16.msra.mxu0 0
    %2103 = vmatprep.subr.bf16.mxu0 0
    %2104 = vmatpush1.bf16.msra.mxu0 0
    %2105 = vmatprep.subr.bf16.mxu0 0
    %2106 = vmatpush1.bf16.msra.mxu0 0
    %2107 = vmatprep.subr.bf16.mxu0 0
    %2108 = vmatpush1.bf16.msra.mxu0 0
    %2109 = vmatprep.subr.bf16.mxu0 %v2087
    %2110 = vmatpush1.bf16.msra.mxu0 %v2084
    %2111 = vmatprep.subr.bf16.mxu0 0
    %2112 = vmatpush2.bf16.msra.mxu0 0
    %2113 = vmatprep.subr.bf16.mxu0 0
    %2114 = vmatpush2.bf16.msra.mxu0 0
    %2115 = vmatprep.subr.bf16.mxu0 0
    %2116 = vmatpush2.bf16.msra.mxu0 0
    %2117 = vmatprep.subr.bf16.mxu0 0
    %2118 = vmatpush2.bf16.msra.mxu0 0
    %2119 = vmatprep.subr.bf16.mxu0 0
    %2120 = vmatpush2.bf16.msra.mxu0 0
    %2121 = vmatprep.subr.bf16.mxu0 0
    %2122 = vmatpush2.bf16.msra.mxu0 0
    %2123 = vmatprep.subr.bf16.mxu0 0
    %2124 = vmatpush2.bf16.msra.mxu0 0
    %2125 = vmatprep.subr.bf16.mxu0 0
    %2126 = vmatpush2.bf16.msra.mxu0 0
    %2127 = vmatprep.mubr.bf16.mxu0 0
    %2128 = vmatmul.mubr.bf16.gmra.mxu0 %v2081
    %v2129 = vpop.f32.mrf.mxu0
    %v2130 = vadd.f32 0.0, %v2129
    %v2131 = vpop.f32.mrf.mxu0
    %v2132 = vadd.f32 0.0, %v2131
    %v2133 = vpop.f32.mrf.mxu0
    %v2134 = vpop.f32.mrf.mxu0
    %2135 = vdwg.mxu0
    %2136 = vmatprep.subr.bf16.mxu0 0
    %2137 = vmatpush1.bf16.msra.mxu0 0
    %2138 = vmatprep.subr.bf16.mxu0 0
    %2139 = vmatpush1.bf16.msra.mxu0 0
    %2140 = vmatprep.subr.bf16.mxu0 0
    %2141 = vmatpush1.bf16.msra.mxu0 0
    %2142 = vmatprep.subr.bf16.mxu0 0
    %2143 = vmatpush1.bf16.msra.mxu0 0
    %2144 = vmatprep.subr.bf16.mxu0 0
    %2145 = vmatpush1.bf16.msra.mxu0 0
    %2146 = vmatprep.subr.bf16.mxu0 0
    %2147 = vmatpush1.bf16.msra.mxu0 0
    %2148 = vmatprep.subr.bf16.mxu0 0
    %2149 = vmatpush1.bf16.msra.mxu0 0
    %2150 = vmatprep.subr.bf16.mxu0 %v2093
    %2151 = vmatpush1.bf16.msra.mxu0 %v2090
    %2152 = vmatprep.subr.bf16.mxu0 0
    %2153 = vmatpush2.bf16.msra.mxu0 0
    %2154 = vmatprep.subr.bf16.mxu0 0
    %2155 = vmatpush2.bf16.msra.mxu0 0
    %2156 = vmatprep.subr.bf16.mxu0 0
    %2157 = vmatpush2.bf16.msra.mxu0 0
    %2158 = vmatprep.subr.bf16.mxu0 0
    %2159 = vmatpush2.bf16.msra.mxu0 0
    %2160 = vmatprep.subr.bf16.mxu0 0
    %2161 = vmatpush2.bf16.msra.mxu0 0
    %2162 = vmatprep.subr.bf16.mxu0 0
    %2163 = vmatpush2.bf16.msra.mxu0 0
    %2164 = vmatprep.subr.bf16.mxu0 0
    %2165 = vmatpush2.bf16.msra.mxu0 0
    %2166 = vmatprep.subr.bf16.mxu0 0
    %2167 = vmatpush2.bf16.msra.mxu0 0
    %2168 = vmatprep.mubr.bf16.mxu0 0
    %2169 = vmatmul.mubr.bf16.gmra.mxu0 %v2081
    %v2170 = vpop.f32.mrf.mxu0
    %v2171 = vadd.f32 0.0, %v2170
    %v2172 = vpop.f32.mrf.mxu0
    %v2173 = vadd.f32 0.0, %v2172
    %v2174 = vpop.f32.mrf.mxu0
    %v2175 = vpop.f32.mrf.mxu0
    %2176 = vdwg.mxu0
    %v2177 = vadd.f32 %v2032, %v2130
    %v2178 = vadd.f32 %v2033, %v2132
    %v2179 = vadd.f32 %v2034, %v2171
    %v2180 = vadd.f32 %v2035, %v2173
    %2181 = vrot.lane.b32.xlu0 %v1049, 111
    %v2182 = vpop.permute.xlu0 %2181
    %2183 = vrot.lane.b32.xlu0 %v1053, 111
    %v2184 = vpop.permute.xlu0 %2183
    %2185 = vrot.lane.b32.xlu0 %v1050, 111
    %v2186 = vpop.permute.xlu0 %2185
    %2187 = vrot.lane.b32.xlu0 %v1054, 111
    %v2188 = vpop.permute.xlu0 %2187
    %vm2189 = vcmp.lt.s32.totalorder %v1066, 111
    %v2190 = vsel %vm2189, %v2186, %v2188
    %v2191 = vsel %vm2189, %v2184, %v2186
    %v2192 = vsel %vm2189, %v2182, %v2184
    %v2193 = vsel %vm2189, %v2188, %v2182
    %v2195 = vlaneseq
    %v2196 = vshrl.u32 %v2195, 7
    %v2197 = vsub.s32 0, %v2196
    %v2198 = vrot.slane %v956, %v2197
    %v2199 = vlaneseq
    %v2200 = vshrl.u32 %v2199, 7
    %v2201 = vsub.s32 1, %v2200
    %v2202 = vrot.slane %v956, %v2201
    %v2203 = vlaneseq
    %v2204 = vshrl.u32 %v2203, 7
    %v2205 = vsub.s32 2, %v2204
    %v2206 = vrot.slane %v956, %v2205
    %v2207 = vlaneseq
    %v2208 = vshrl.u32 %v2207, 7
    %v2209 = vsub.s32 3, %v2208
    %v2210 = vrot.slane %v956, %v2209
    %v2215 = vmul.f32 %v2192, %v2198
    %v2216 = vmul.f32 %v2191, %v2202
    %v2217 = vmul.f32 %v2190, %v2206
    %v2218 = vmul.f32 %v2193, %v2210
    %v2219 = vpack.c.bf16 %v2215, %v2215
    %v2220 = vpack.c.bf16 %v2216, %v2216
    %v2221 = vpack.c.bf16 %v2217, %v2217
    %v2222 = vpack.c.bf16 %v2218, %v2218
    %2223 = vrot.lane.b32.xlu0 %v1150, 96
    %v2224 = vpop.permute.xlu0 %2223
    %v2226 = vsel %vm1153, %v2224, 0
    %v2229 = vsel %vm1157, %v2219, 0
    %v2232 = vsel %vm1157, %v2220, 0
    %v2235 = vsel %vm1157, %v2221, 0
    %v2238 = vsel %vm1157, %v2222, 0
    %2240 = vmatprep.subr.bf16.mxu0 0
    %2241 = vmatpush1.bf16.msra.mxu0 0
    %2242 = vmatprep.subr.bf16.mxu0 0
    %2243 = vmatpush1.bf16.msra.mxu0 0
    %2244 = vmatprep.subr.bf16.mxu0 0
    %2245 = vmatpush1.bf16.msra.mxu0 0
    %2246 = vmatprep.subr.bf16.mxu0 0
    %2247 = vmatpush1.bf16.msra.mxu0 0
    %2248 = vmatprep.subr.bf16.mxu0 0
    %2249 = vmatpush1.bf16.msra.mxu0 0
    %2250 = vmatprep.subr.bf16.mxu0 0
    %2251 = vmatpush1.bf16.msra.mxu0 0
    %2252 = vmatprep.subr.bf16.mxu0 0
    %2253 = vmatpush1.bf16.msra.mxu0 0
    %2254 = vmatprep.subr.bf16.mxu0 %v2232
    %2255 = vmatpush1.bf16.msra.mxu0 %v2229
    %2256 = vmatprep.subr.bf16.mxu0 0
    %2257 = vmatpush2.bf16.msra.mxu0 0
    %2258 = vmatprep.subr.bf16.mxu0 0
    %2259 = vmatpush2.bf16.msra.mxu0 0
    %2260 = vmatprep.subr.bf16.mxu0 0
    %2261 = vmatpush2.bf16.msra.mxu0 0
    %2262 = vmatprep.subr.bf16.mxu0 0
    %2263 = vmatpush2.bf16.msra.mxu0 0
    %2264 = vmatprep.subr.bf16.mxu0 0
    %2265 = vmatpush2.bf16.msra.mxu0 0
    %2266 = vmatprep.subr.bf16.mxu0 0
    %2267 = vmatpush2.bf16.msra.mxu0 0
    %2268 = vmatprep.subr.bf16.mxu0 0
    %2269 = vmatpush2.bf16.msra.mxu0 0
    %2270 = vmatprep.subr.bf16.mxu0 0
    %2271 = vmatpush2.bf16.msra.mxu0 0
    %2272 = vmatprep.mubr.bf16.mxu0 0
    %2273 = vmatmul.mubr.bf16.gmra.mxu0 %v2226
    %v2274 = vpop.f32.mrf.mxu0
    %v2275 = vadd.f32 0.0, %v2274
    %v2276 = vpop.f32.mrf.mxu0
    %v2277 = vadd.f32 0.0, %v2276
    %v2278 = vpop.f32.mrf.mxu0
    %v2279 = vpop.f32.mrf.mxu0
    %2280 = vdwg.mxu0
    %2281 = vmatprep.subr.bf16.mxu0 0
    %2282 = vmatpush1.bf16.msra.mxu0 0
    %2283 = vmatprep.subr.bf16.mxu0 0
    %2284 = vmatpush1.bf16.msra.mxu0 0
    %2285 = vmatprep.subr.bf16.mxu0 0
    %2286 = vmatpush1.bf16.msra.mxu0 0
    %2287 = vmatprep.subr.bf16.mxu0 0
    %2288 = vmatpush1.bf16.msra.mxu0 0
    %2289 = vmatprep.subr.bf16.mxu0 0
    %2290 = vmatpush1.bf16.msra.mxu0 0
    %2291 = vmatprep.subr.bf16.mxu0 0
    %2292 = vmatpush1.bf16.msra.mxu0 0
    %2293 = vmatprep.subr.bf16.mxu0 0
    %2294 = vmatpush1.bf16.msra.mxu0 0
    %2295 = vmatprep.subr.bf16.mxu0 %v2238
    %2296 = vmatpush1.bf16.msra.mxu0 %v2235
    %2297 = vmatprep.subr.bf16.mxu0 0
    %2298 = vmatpush2.bf16.msra.mxu0 0
    %2299 = vmatprep.subr.bf16.mxu0 0
    %2300 = vmatpush2.bf16.msra.mxu0 0
    %2301 = vmatprep.subr.bf16.mxu0 0
    %2302 = vmatpush2.bf16.msra.mxu0 0
    %2303 = vmatprep.subr.bf16.mxu0 0
    %2304 = vmatpush2.bf16.msra.mxu0 0
    %2305 = vmatprep.subr.bf16.mxu0 0
    %2306 = vmatpush2.bf16.msra.mxu0 0
    %2307 = vmatprep.subr.bf16.mxu0 0
    %2308 = vmatpush2.bf16.msra.mxu0 0
    %2309 = vmatprep.subr.bf16.mxu0 0
    %2310 = vmatpush2.bf16.msra.mxu0 0
    %2311 = vmatprep.subr.bf16.mxu0 0
    %2312 = vmatpush2.bf16.msra.mxu0 0
    %2313 = vmatprep.mubr.bf16.mxu0 0
    %2314 = vmatmul.mubr.bf16.gmra.mxu0 %v2226
    %v2315 = vpop.f32.mrf.mxu0
    %v2316 = vadd.f32 0.0, %v2315
    %v2317 = vpop.f32.mrf.mxu0
    %v2318 = vadd.f32 0.0, %v2317
    %v2319 = vpop.f32.mrf.mxu0
    %v2320 = vpop.f32.mrf.mxu0
    %2321 = vdwg.mxu0
    %v2322 = vadd.f32 %v2177, %v2275
    %v2323 = vadd.f32 %v2178, %v2277
    %v2324 = vadd.f32 %v2179, %v2316
    %v2325 = vadd.f32 %v2180, %v2318
    %2326 = vset.pattern.permute.xlu0 2
    %2327 = vperm.xlu0 %2326, %v959
    %v2328 = vpop.permute.xlu0 %2327
    %v2330 = vadd.f32 %v2322, %v2328
    %v2331 = vadd.f32 %v2323, %v2328
    %v2332 = vadd.f32 %v2324, %v2328
    %v2333 = vadd.f32 %v2325, %v2328
    %v2334 = vsel %vm971, %v2330, 0.0
    %v2335 = vsel %vm971, %v2331, 0.0
    %v2336 = vadd.f32 %v2334, %v2335
    %v2337 = vsel %vm971, %v2332, 0.0
    %v2338 = vadd.f32 %v2336, %v2337
    %v2339 = vsel %vm971, %v2333, 0.0
    %v2340 = vadd.f32 %v2338, %v2339
    %2341 = vadd.xlane.f32.xlu0 %v2340
    %v2342 = vpop.xlane.xlu0 %2341
    %v2343 = vmul.f32 %v2342, 0.001953125
    %v2344 = vsub.f32 %v2330, %v2343
    %v2345 = vsub.f32 %v2331, %v2343
    %v2346 = vsub.f32 %v2332, %v2343
    %v2347 = vsub.f32 %v2333, %v2343
    %v2348 = vmul.f32 %v2344, %v2344
    %v2349 = vmul.f32 %v2345, %v2345
    %v2350 = vmul.f32 %v2346, %v2346
    %v2351 = vmul.f32 %v2347, %v2347
    %v2352 = vsel %vm971, %v2348, 0.0
    %v2353 = vsel %vm971, %v2349, 0.0
    %v2354 = vadd.f32 %v2352, %v2353
    %v2355 = vsel %vm971, %v2350, 0.0
    %v2356 = vadd.f32 %v2354, %v2355
    %v2357 = vsel %vm971, %v2351, 0.0
    %v2358 = vadd.f32 %v2356, %v2357
    %2359 = vadd.xlane.f32.xlu0 %v2358
    %v2360 = vpop.xlane.xlu0 %2359
    %v2361 = vmul.f32 %v2360, 0.001953125
    %v2362 = vadd.f32 %v2361, 1e-05
    %v2363 = vrsqrt.pop %v2362
    %v2364 = vmul.f32 %v2344, %v2363
    %v2365 = vmul.f32 %v2345, %v2363
    %v2366 = vmul.f32 %v2346, %v2363
    %v2367 = vmul.f32 %v2347, %v2363
    %2368 = vset.pattern.permute.xlu0 3
    %2369 = vperm.xlu0 %2368, %v959
    %v2370 = vpop.permute.xlu0 %2369
    %v2372 = vmul.f32 %v2364, %v2370
    %v2373 = vmul.f32 %v2365, %v2370
    %v2374 = vmul.f32 %v2366, %v2370
    %v2375 = vmul.f32 %v2367, %v2370
    %2376 = vset.pattern.permute.xlu0 4
    %2377 = vperm.xlu0 %2376, %v959
    %v2378 = vpop.permute.xlu0 %2377
    %v2380 = vadd.f32 %v2372, %v2378
    %v2381 = vadd.f32 %v2373, %v2378
    %v2382 = vadd.f32 %v2374, %v2378
    %v2383 = vadd.f32 %v2375, %v2378
    %v2384 = vmax.f32 %v2380, 0.0
    %v2385 = vmax.f32 %v2381, 0.0
    %v2386 = vmax.f32 %v2382, 0.0
    %v2387 = vmax.f32 %v2383, 0.0
    %2388 = vrot.lane.b32.xlu0 %v2384, 17
    %v2389 = vpop.permute.xlu0 %2388
    %2390 = vrot.lane.b32.xlu0 %v2385, 17
    %v2391 = vpop.permute.xlu0 %2390
    %2392 = vrot.lane.b32.xlu0 %v2386, 17
    %v2393 = vpop.permute.xlu0 %2392
    %2394 = vrot.lane.b32.xlu0 %v2387, 17
    %v2395 = vpop.permute.xlu0 %2394
    %v2396 = vsel %vm1067, %v2393, %v2395
    %v2397 = vsel %vm1067, %v2391, %v2393
    %v2398 = vsel %vm1067, %v2389, %v2391
    %v2399 = vsel %vm1067, %v2395, %v2389
    %v2400 = vmul.f32 %v2399, %v1076
    %v2401 = vmul.f32 %v2398, %v1080
    %v2402 = vmul.f32 %v2397, %v1084
    %v2403 = vmul.f32 %v2396, %v1088
    %v2404 = vpack.c.bf16 %v2400, %v2400
    %v2405 = vpack.c.bf16 %v2401, %v2401
    %v2406 = vpack.c.bf16 %v2402, %v2402
    %v2407 = vpack.c.bf16 %v2403, %v2403
    %2408 = vrot.lane.b32.xlu0 %v2384, 16
    %v2409 = vpop.permute.xlu0 %2408
    %2410 = vrot.lane.b32.xlu0 %v2385, 16
    %v2411 = vpop.permute.xlu0 %2410
    %2412 = vrot.lane.b32.xlu0 %v2386, 16
    %v2413 = vpop.permute.xlu0 %2412
    %2414 = vrot.lane.b32.xlu0 %v2387, 16
    %v2415 = vpop.permute.xlu0 %2414
    %v2416 = vsel %vm1109, %v2413, %v2415
    %v2417 = vsel %vm1109, %v2411, %v2413
    %v2418 = vsel %vm1109, %v2409, %v2411
    %v2419 = vsel %vm1109, %v2415, %v2409
    %v2420 = vmul.f32 %v2419, %v1118
    %v2421 = vmul.f32 %v2418, %v1122
    %v2422 = vmul.f32 %v2417, %v1126
    %v2423 = vmul.f32 %v2416, %v1130
    %v2424 = vpack.c.bf16 %v2420, %v2420
    %v2425 = vpack.c.bf16 %v2421, %v2421
    %v2426 = vpack.c.bf16 %v2422, %v2422
    %v2427 = vpack.c.bf16 %v2423, %v2423
    %v2429 = vunpack.c.l.b16 %v958
    %v2430 = vpack.c.b16 %v2429, %v2429
    %2431 = vrot.lane.b32.xlu0 %v2430, 124
    %v2432 = vpop.permute.xlu0 %2431
    %v2434 = vsel %vm1153, %v2432, 0
    %v2437 = vsel %vm1157, %v2424, 0
    %v2440 = vsel %vm1157, %v2425, 0
    %v2443 = vsel %vm1157, %v2426, 0
    %v2446 = vsel %vm1157, %v2427, 0
    %2448 = vmatprep.subr.bf16.mxu0 0
    %2449 = vmatpush1.bf16.msra.mxu0 0
    %2450 = vmatprep.subr.bf16.mxu0 0
    %2451 = vmatpush1.bf16.msra.mxu0 0
    %2452 = vmatprep.subr.bf16.mxu0 0
    %2453 = vmatpush1.bf16.msra.mxu0 0
    %2454 = vmatprep.subr.bf16.mxu0 0
    %2455 = vmatpush1.bf16.msra.mxu0 0
    %2456 = vmatprep.subr.bf16.mxu0 0
    %2457 = vmatpush1.bf16.msra.mxu0 0
    %2458 = vmatprep.subr.bf16.mxu0 0
    %2459 = vmatpush1.bf16.msra.mxu0 0
    %2460 = vmatprep.subr.bf16.mxu0 0
    %2461 = vmatpush1.bf16.msra.mxu0 0
    %2462 = vmatprep.subr.bf16.mxu0 %v2440
    %2463 = vmatpush1.bf16.msra.mxu0 %v2437
    %2464 = vmatprep.subr.bf16.mxu0 0
    %2465 = vmatpush2.bf16.msra.mxu0 0
    %2466 = vmatprep.subr.bf16.mxu0 0
    %2467 = vmatpush2.bf16.msra.mxu0 0
    %2468 = vmatprep.subr.bf16.mxu0 0
    %2469 = vmatpush2.bf16.msra.mxu0 0
    %2470 = vmatprep.subr.bf16.mxu0 0
    %2471 = vmatpush2.bf16.msra.mxu0 0
    %2472 = vmatprep.subr.bf16.mxu0 0
    %2473 = vmatpush2.bf16.msra.mxu0 0
    %2474 = vmatprep.subr.bf16.mxu0 0
    %2475 = vmatpush2.bf16.msra.mxu0 0
    %2476 = vmatprep.subr.bf16.mxu0 0
    %2477 = vmatpush2.bf16.msra.mxu0 0
    %2478 = vmatprep.subr.bf16.mxu0 0
    %2479 = vmatpush2.bf16.msra.mxu0 0
    %2480 = vmatprep.mubr.bf16.mxu0 0
    %2481 = vmatmul.mubr.bf16.gmra.mxu0 %v2434
    %v2482 = vpop.f32.mrf.mxu0
    %v2483 = vadd.f32 0.0, %v2482
    %v2484 = vpop.f32.mrf.mxu0
    %v2485 = vadd.f32 0.0, %v2484
    %v2486 = vpop.f32.mrf.mxu0
    %v2487 = vpop.f32.mrf.mxu0
    %2488 = vdwg.mxu0
    %2489 = vmatprep.subr.bf16.mxu0 0
    %2490 = vmatpush1.bf16.msra.mxu0 0
    %2491 = vmatprep.subr.bf16.mxu0 0
    %2492 = vmatpush1.bf16.msra.mxu0 0
    %2493 = vmatprep.subr.bf16.mxu0 0
    %2494 = vmatpush1.bf16.msra.mxu0 0
    %2495 = vmatprep.subr.bf16.mxu0 0
    %2496 = vmatpush1.bf16.msra.mxu0 0
    %2497 = vmatprep.subr.bf16.mxu0 0
    %2498 = vmatpush1.bf16.msra.mxu0 0
    %2499 = vmatprep.subr.bf16.mxu0 0
    %2500 = vmatpush1.bf16.msra.mxu0 0
    %2501 = vmatprep.subr.bf16.mxu0 0
    %2502 = vmatpush1.bf16.msra.mxu0 0
    %2503 = vmatprep.subr.bf16.mxu0 %v2446
    %2504 = vmatpush1.bf16.msra.mxu0 %v2443
    %2505 = vmatprep.subr.bf16.mxu0 0
    %2506 = vmatpush2.bf16.msra.mxu0 0
    %2507 = vmatprep.subr.bf16.mxu0 0
    %2508 = vmatpush2.bf16.msra.mxu0 0
    %2509 = vmatprep.subr.bf16.mxu0 0
    %2510 = vmatpush2.bf16.msra.mxu0 0
    %2511 = vmatprep.subr.bf16.mxu0 0
    %2512 = vmatpush2.bf16.msra.mxu0 0
    %2513 = vmatprep.subr.bf16.mxu0 0
    %2514 = vmatpush2.bf16.msra.mxu0 0
    %2515 = vmatprep.subr.bf16.mxu0 0
    %2516 = vmatpush2.bf16.msra.mxu0 0
    %2517 = vmatprep.subr.bf16.mxu0 0
    %2518 = vmatpush2.bf16.msra.mxu0 0
    %2519 = vmatprep.subr.bf16.mxu0 0
    %2520 = vmatpush2.bf16.msra.mxu0 0
    %2521 = vmatprep.mubr.bf16.mxu0 0
    %2522 = vmatmul.mubr.bf16.gmra.mxu0 %v2434
    %v2523 = vpop.f32.mrf.mxu0
    %v2524 = vadd.f32 0.0, %v2523
    %v2525 = vpop.f32.mrf.mxu0
    %v2526 = vadd.f32 0.0, %v2525
    %v2527 = vpop.f32.mrf.mxu0
    %v2528 = vpop.f32.mrf.mxu0
    %2529 = vdwg.mxu0
    %v2531 = vsel %vm1153, %v958, 0
    %v2534 = vsel %vm1157, %v2404, 0
    %v2537 = vsel %vm1157, %v2405, 0
    %v2540 = vsel %vm1157, %v2406, 0
    %v2543 = vsel %vm1157, %v2407, 0
    %2545 = vmatprep.subr.bf16.mxu0 0
    %2546 = vmatpush1.bf16.msra.mxu0 0
    %2547 = vmatprep.subr.bf16.mxu0 0
    %2548 = vmatpush1.bf16.msra.mxu0 0
    %2549 = vmatprep.subr.bf16.mxu0 0
    %2550 = vmatpush1.bf16.msra.mxu0 0
    %2551 = vmatprep.subr.bf16.mxu0 0
    %2552 = vmatpush1.bf16.msra.mxu0 0
    %2553 = vmatprep.subr.bf16.mxu0 0
    %2554 = vmatpush1.bf16.msra.mxu0 0
    %2555 = vmatprep.subr.bf16.mxu0 0
    %2556 = vmatpush1.bf16.msra.mxu0 0
    %2557 = vmatprep.subr.bf16.mxu0 0
    %2558 = vmatpush1.bf16.msra.mxu0 0
    %2559 = vmatprep.subr.bf16.mxu0 %v2537
    %2560 = vmatpush1.bf16.msra.mxu0 %v2534
    %2561 = vmatprep.subr.bf16.mxu0 0
    %2562 = vmatpush2.bf16.msra.mxu0 0
    %2563 = vmatprep.subr.bf16.mxu0 0
    %2564 = vmatpush2.bf16.msra.mxu0 0
    %2565 = vmatprep.subr.bf16.mxu0 0
    %2566 = vmatpush2.bf16.msra.mxu0 0
    %2567 = vmatprep.subr.bf16.mxu0 0
    %2568 = vmatpush2.bf16.msra.mxu0 0
    %2569 = vmatprep.subr.bf16.mxu0 0
    %2570 = vmatpush2.bf16.msra.mxu0 0
    %2571 = vmatprep.subr.bf16.mxu0 0
    %2572 = vmatpush2.bf16.msra.mxu0 0
    %2573 = vmatprep.subr.bf16.mxu0 0
    %2574 = vmatpush2.bf16.msra.mxu0 0
    %2575 = vmatprep.subr.bf16.mxu0 0
    %2576 = vmatpush2.bf16.msra.mxu0 0
    %2577 = vmatprep.mubr.bf16.mxu0 0
    %2578 = vmatmul.mubr.bf16.gmra.mxu0 %v2531
    %v2579 = vpop.f32.mrf.mxu0
    %v2580 = vadd.f32 %v2483, %v2579
    %v2581 = vpop.f32.mrf.mxu0
    %v2582 = vadd.f32 %v2485, %v2581
    %v2583 = vpop.f32.mrf.mxu0
    %v2584 = vpop.f32.mrf.mxu0
    %2585 = vdwg.mxu0
    %2586 = vmatprep.subr.bf16.mxu0 0
    %2587 = vmatpush1.bf16.msra.mxu0 0
    %2588 = vmatprep.subr.bf16.mxu0 0
    %2589 = vmatpush1.bf16.msra.mxu0 0
    %2590 = vmatprep.subr.bf16.mxu0 0
    %2591 = vmatpush1.bf16.msra.mxu0 0
    %2592 = vmatprep.subr.bf16.mxu0 0
    %2593 = vmatpush1.bf16.msra.mxu0 0
    %2594 = vmatprep.subr.bf16.mxu0 0
    %2595 = vmatpush1.bf16.msra.mxu0 0
    %2596 = vmatprep.subr.bf16.mxu0 0
    %2597 = vmatpush1.bf16.msra.mxu0 0
    %2598 = vmatprep.subr.bf16.mxu0 0
    %2599 = vmatpush1.bf16.msra.mxu0 0
    %2600 = vmatprep.subr.bf16.mxu0 %v2543
    %2601 = vmatpush1.bf16.msra.mxu0 %v2540
    %2602 = vmatprep.subr.bf16.mxu0 0
    %2603 = vmatpush2.bf16.msra.mxu0 0
    %2604 = vmatprep.subr.bf16.mxu0 0
    %2605 = vmatpush2.bf16.msra.mxu0 0
    %2606 = vmatprep.subr.bf16.mxu0 0
    %2607 = vmatpush2.bf16.msra.mxu0 0
    %2608 = vmatprep.subr.bf16.mxu0 0
    %2609 = vmatpush2.bf16.msra.mxu0 0
    %2610 = vmatprep.subr.bf16.mxu0 0
    %2611 = vmatpush2.bf16.msra.mxu0 0
    %2612 = vmatprep.subr.bf16.mxu0 0
    %2613 = vmatpush2.bf16.msra.mxu0 0
    %2614 = vmatprep.subr.bf16.mxu0 0
    %2615 = vmatpush2.bf16.msra.mxu0 0
    %2616 = vmatprep.subr.bf16.mxu0 0
    %2617 = vmatpush2.bf16.msra.mxu0 0
    %2618 = vmatprep.mubr.bf16.mxu0 0
    %2619 = vmatmul.mubr.bf16.gmra.mxu0 %v2531
    %v2620 = vpop.f32.mrf.mxu0
    %v2621 = vadd.f32 %v2524, %v2620
    %v2622 = vpop.f32.mrf.mxu0
    %v2623 = vadd.f32 %v2526, %v2622
    %v2624 = vpop.f32.mrf.mxu0
    %v2625 = vpop.f32.mrf.mxu0
    %2626 = vdwg.mxu0
    %2627 = vrot.lane.b32.xlu0 %v2384, 15
    %v2628 = vpop.permute.xlu0 %2627
    %2629 = vrot.lane.b32.xlu0 %v2385, 15
    %v2630 = vpop.permute.xlu0 %2629
    %2631 = vrot.lane.b32.xlu0 %v2386, 15
    %v2632 = vpop.permute.xlu0 %2631
    %2633 = vrot.lane.b32.xlu0 %v2387, 15
    %v2634 = vpop.permute.xlu0 %2633
    %v2635 = vsel %vm1357, %v2632, %v2634
    %v2636 = vsel %vm1357, %v2630, %v2632
    %v2637 = vsel %vm1357, %v2628, %v2630
    %v2638 = vsel %vm1357, %v2634, %v2628
    %v2639 = vmul.f32 %v2638, %v1366
    %v2640 = vmul.f32 %v2637, %v1370
    %v2641 = vmul.f32 %v2636, %v1374
    %v2642 = vmul.f32 %v2635, %v1378
    %v2643 = vpack.c.bf16 %v2639, %v2639
    %v2644 = vpack.c.bf16 %v2640, %v2640
    %v2645 = vpack.c.bf16 %v2641, %v2641
    %v2646 = vpack.c.bf16 %v2642, %v2642
    %2647 = vrot.lane.b32.xlu0 %v2430, 120
    %v2648 = vpop.permute.xlu0 %2647
    %v2650 = vsel %vm1153, %v2648, 0
    %v2653 = vsel %vm1157, %v2643, 0
    %v2656 = vsel %vm1157, %v2644, 0
    %v2659 = vsel %vm1157, %v2645, 0
    %v2662 = vsel %vm1157, %v2646, 0
    %2664 = vmatprep.subr.bf16.mxu0 0
    %2665 = vmatpush1.bf16.msra.mxu0 0
    %2666 = vmatprep.subr.bf16.mxu0 0
    %2667 = vmatpush1.bf16.msra.mxu0 0
    %2668 = vmatprep.subr.bf16.mxu0 0
    %2669 = vmatpush1.bf16.msra.mxu0 0
    %2670 = vmatprep.subr.bf16.mxu0 0
    %2671 = vmatpush1.bf16.msra.mxu0 0
    %2672 = vmatprep.subr.bf16.mxu0 0
    %2673 = vmatpush1.bf16.msra.mxu0 0
    %2674 = vmatprep.subr.bf16.mxu0 0
    %2675 = vmatpush1.bf16.msra.mxu0 0
    %2676 = vmatprep.subr.bf16.mxu0 0
    %2677 = vmatpush1.bf16.msra.mxu0 0
    %2678 = vmatprep.subr.bf16.mxu0 %v2656
    %2679 = vmatpush1.bf16.msra.mxu0 %v2653
    %2680 = vmatprep.subr.bf16.mxu0 0
    %2681 = vmatpush2.bf16.msra.mxu0 0
    %2682 = vmatprep.subr.bf16.mxu0 0
    %2683 = vmatpush2.bf16.msra.mxu0 0
    %2684 = vmatprep.subr.bf16.mxu0 0
    %2685 = vmatpush2.bf16.msra.mxu0 0
    %2686 = vmatprep.subr.bf16.mxu0 0
    %2687 = vmatpush2.bf16.msra.mxu0 0
    %2688 = vmatprep.subr.bf16.mxu0 0
    %2689 = vmatpush2.bf16.msra.mxu0 0
    %2690 = vmatprep.subr.bf16.mxu0 0
    %2691 = vmatpush2.bf16.msra.mxu0 0
    %2692 = vmatprep.subr.bf16.mxu0 0
    %2693 = vmatpush2.bf16.msra.mxu0 0
    %2694 = vmatprep.subr.bf16.mxu0 0
    %2695 = vmatpush2.bf16.msra.mxu0 0
    %2696 = vmatprep.mubr.bf16.mxu0 0
    %2697 = vmatmul.mubr.bf16.gmra.mxu0 %v2650
    %v2698 = vpop.f32.mrf.mxu0
    %v2699 = vadd.f32 0.0, %v2698
    %v2700 = vpop.f32.mrf.mxu0
    %v2701 = vadd.f32 0.0, %v2700
    %v2702 = vpop.f32.mrf.mxu0
    %v2703 = vpop.f32.mrf.mxu0
    %2704 = vdwg.mxu0
    %2705 = vmatprep.subr.bf16.mxu0 0
    %2706 = vmatpush1.bf16.msra.mxu0 0
    %2707 = vmatprep.subr.bf16.mxu0 0
    %2708 = vmatpush1.bf16.msra.mxu0 0
    %2709 = vmatprep.subr.bf16.mxu0 0
    %2710 = vmatpush1.bf16.msra.mxu0 0
    %2711 = vmatprep.subr.bf16.mxu0 0
    %2712 = vmatpush1.bf16.msra.mxu0 0
    %2713 = vmatprep.subr.bf16.mxu0 0
    %2714 = vmatpush1.bf16.msra.mxu0 0
    %2715 = vmatprep.subr.bf16.mxu0 0
    %2716 = vmatpush1.bf16.msra.mxu0 0
    %2717 = vmatprep.subr.bf16.mxu0 0
    %2718 = vmatpush1.bf16.msra.mxu0 0
    %2719 = vmatprep.subr.bf16.mxu0 %v2662
    %2720 = vmatpush1.bf16.msra.mxu0 %v2659
    %2721 = vmatprep.subr.bf16.mxu0 0
    %2722 = vmatpush2.bf16.msra.mxu0 0
    %2723 = vmatprep.subr.bf16.mxu0 0
    %2724 = vmatpush2.bf16.msra.mxu0 0
    %2725 = vmatprep.subr.bf16.mxu0 0
    %2726 = vmatpush2.bf16.msra.mxu0 0
    %2727 = vmatprep.subr.bf16.mxu0 0
    %2728 = vmatpush2.bf16.msra.mxu0 0
    %2729 = vmatprep.subr.bf16.mxu0 0
    %2730 = vmatpush2.bf16.msra.mxu0 0
    %2731 = vmatprep.subr.bf16.mxu0 0
    %2732 = vmatpush2.bf16.msra.mxu0 0
    %2733 = vmatprep.subr.bf16.mxu0 0
    %2734 = vmatpush2.bf16.msra.mxu0 0
    %2735 = vmatprep.subr.bf16.mxu0 0
    %2736 = vmatpush2.bf16.msra.mxu0 0
    %2737 = vmatprep.mubr.bf16.mxu0 0
    %2738 = vmatmul.mubr.bf16.gmra.mxu0 %v2650
    %v2739 = vpop.f32.mrf.mxu0
    %v2740 = vadd.f32 0.0, %v2739
    %v2741 = vpop.f32.mrf.mxu0
    %v2742 = vadd.f32 0.0, %v2741
    %v2743 = vpop.f32.mrf.mxu0
    %v2744 = vpop.f32.mrf.mxu0
    %2745 = vdwg.mxu0
    %v2746 = vadd.f32 %v2580, %v2699
    %v2747 = vadd.f32 %v2582, %v2701
    %v2748 = vadd.f32 %v2621, %v2740
    %v2749 = vadd.f32 %v2623, %v2742
    %2750 = vrot.lane.b32.xlu0 %v2384, 1
    %v2751 = vpop.permute.xlu0 %2750
    %2752 = vrot.lane.b32.xlu0 %v2385, 1
    %v2753 = vpop.permute.xlu0 %2752
    %2754 = vrot.lane.b32.xlu0 %v2386, 1
    %v2755 = vpop.permute.xlu0 %2754
    %2756 = vrot.lane.b32.xlu0 %v2387, 1
    %v2757 = vpop.permute.xlu0 %2756
    %v2758 = vsel %vm1502, %v2755, %v2757
    %v2759 = vsel %vm1502, %v2753, %v2755
    %v2760 = vsel %vm1502, %v2751, %v2753
    %v2761 = vsel %vm1502, %v2757, %v2751
    %v2762 = vmul.f32 %v2761, %v1511
    %v2763 = vmul.f32 %v2760, %v1515
    %v2764 = vmul.f32 %v2759, %v1519
    %v2765 = vmul.f32 %v2758, %v1523
    %v2766 = vpack.c.bf16 %v2762, %v2762
    %v2767 = vpack.c.bf16 %v2763, %v2763
    %v2768 = vpack.c.bf16 %v2764, %v2764
    %v2769 = vpack.c.bf16 %v2765, %v2765
    %2770 = vrot.lane.b32.xlu0 %v2430, 116
    %v2771 = vpop.permute.xlu0 %2770
    %v2773 = vsel %vm1153, %v2771, 0
    %v2776 = vsel %vm1157, %v2766, 0
    %v2779 = vsel %vm1157, %v2767, 0
    %v2782 = vsel %vm1157, %v2768, 0
    %v2785 = vsel %vm1157, %v2769, 0
    %2787 = vmatprep.subr.bf16.mxu0 0
    %2788 = vmatpush1.bf16.msra.mxu0 0
    %2789 = vmatprep.subr.bf16.mxu0 0
    %2790 = vmatpush1.bf16.msra.mxu0 0
    %2791 = vmatprep.subr.bf16.mxu0 0
    %2792 = vmatpush1.bf16.msra.mxu0 0
    %2793 = vmatprep.subr.bf16.mxu0 0
    %2794 = vmatpush1.bf16.msra.mxu0 0
    %2795 = vmatprep.subr.bf16.mxu0 0
    %2796 = vmatpush1.bf16.msra.mxu0 0
    %2797 = vmatprep.subr.bf16.mxu0 0
    %2798 = vmatpush1.bf16.msra.mxu0 0
    %2799 = vmatprep.subr.bf16.mxu0 0
    %2800 = vmatpush1.bf16.msra.mxu0 0
    %2801 = vmatprep.subr.bf16.mxu0 %v2779
    %2802 = vmatpush1.bf16.msra.mxu0 %v2776
    %2803 = vmatprep.subr.bf16.mxu0 0
    %2804 = vmatpush2.bf16.msra.mxu0 0
    %2805 = vmatprep.subr.bf16.mxu0 0
    %2806 = vmatpush2.bf16.msra.mxu0 0
    %2807 = vmatprep.subr.bf16.mxu0 0
    %2808 = vmatpush2.bf16.msra.mxu0 0
    %2809 = vmatprep.subr.bf16.mxu0 0
    %2810 = vmatpush2.bf16.msra.mxu0 0
    %2811 = vmatprep.subr.bf16.mxu0 0
    %2812 = vmatpush2.bf16.msra.mxu0 0
    %2813 = vmatprep.subr.bf16.mxu0 0
    %2814 = vmatpush2.bf16.msra.mxu0 0
    %2815 = vmatprep.subr.bf16.mxu0 0
    %2816 = vmatpush2.bf16.msra.mxu0 0
    %2817 = vmatprep.subr.bf16.mxu0 0
    %2818 = vmatpush2.bf16.msra.mxu0 0
    %2819 = vmatprep.mubr.bf16.mxu0 0
    %2820 = vmatmul.mubr.bf16.gmra.mxu0 %v2773
    %v2821 = vpop.f32.mrf.mxu0
    %v2822 = vadd.f32 0.0, %v2821
    %v2823 = vpop.f32.mrf.mxu0
    %v2824 = vadd.f32 0.0, %v2823
    %v2825 = vpop.f32.mrf.mxu0
    %v2826 = vpop.f32.mrf.mxu0
    %2827 = vdwg.mxu0
    %2828 = vmatprep.subr.bf16.mxu0 0
    %2829 = vmatpush1.bf16.msra.mxu0 0
    %2830 = vmatprep.subr.bf16.mxu0 0
    %2831 = vmatpush1.bf16.msra.mxu0 0
    %2832 = vmatprep.subr.bf16.mxu0 0
    %2833 = vmatpush1.bf16.msra.mxu0 0
    %2834 = vmatprep.subr.bf16.mxu0 0
    %2835 = vmatpush1.bf16.msra.mxu0 0
    %2836 = vmatprep.subr.bf16.mxu0 0
    %2837 = vmatpush1.bf16.msra.mxu0 0
    %2838 = vmatprep.subr.bf16.mxu0 0
    %2839 = vmatpush1.bf16.msra.mxu0 0
    %2840 = vmatprep.subr.bf16.mxu0 0
    %2841 = vmatpush1.bf16.msra.mxu0 0
    %2842 = vmatprep.subr.bf16.mxu0 %v2785
    %2843 = vmatpush1.bf16.msra.mxu0 %v2782
    %2844 = vmatprep.subr.bf16.mxu0 0
    %2845 = vmatpush2.bf16.msra.mxu0 0
    %2846 = vmatprep.subr.bf16.mxu0 0
    %2847 = vmatpush2.bf16.msra.mxu0 0
    %2848 = vmatprep.subr.bf16.mxu0 0
    %2849 = vmatpush2.bf16.msra.mxu0 0
    %2850 = vmatprep.subr.bf16.mxu0 0
    %2851 = vmatpush2.bf16.msra.mxu0 0
    %2852 = vmatprep.subr.bf16.mxu0 0
    %2853 = vmatpush2.bf16.msra.mxu0 0
    %2854 = vmatprep.subr.bf16.mxu0 0
    %2855 = vmatpush2.bf16.msra.mxu0 0
    %2856 = vmatprep.subr.bf16.mxu0 0
    %2857 = vmatpush2.bf16.msra.mxu0 0
    %2858 = vmatprep.subr.bf16.mxu0 0
    %2859 = vmatpush2.bf16.msra.mxu0 0
    %2860 = vmatprep.mubr.bf16.mxu0 0
    %2861 = vmatmul.mubr.bf16.gmra.mxu0 %v2773
    %v2862 = vpop.f32.mrf.mxu0
    %v2863 = vadd.f32 0.0, %v2862
    %v2864 = vpop.f32.mrf.mxu0
    %v2865 = vadd.f32 0.0, %v2864
    %v2866 = vpop.f32.mrf.mxu0
    %v2867 = vpop.f32.mrf.mxu0
    %2868 = vdwg.mxu0
    %v2869 = vadd.f32 %v2746, %v2822
    %v2870 = vadd.f32 %v2747, %v2824
    %v2871 = vadd.f32 %v2748, %v2863
    %v2872 = vadd.f32 %v2749, %v2865
    %v2873 = vpack.c.bf16 %v2384, %v2384
    %v2874 = vpack.c.bf16 %v2385, %v2385
    %v2875 = vpack.c.bf16 %v2386, %v2386
    %v2876 = vpack.c.bf16 %v2387, %v2387
    %2877 = vrot.lane.b32.xlu0 %v2430, 112
    %v2878 = vpop.permute.xlu0 %2877
    %v2880 = vsel %vm1153, %v2878, 0
    %v2883 = vsel %vm1157, %v2873, 0
    %v2886 = vsel %vm1157, %v2874, 0
    %v2889 = vsel %vm1157, %v2875, 0
    %v2892 = vsel %vm1157, %v2876, 0
    %2894 = vmatprep.subr.bf16.mxu0 0
    %2895 = vmatpush1.bf16.msra.mxu0 0
    %2896 = vmatprep.subr.bf16.mxu0 0
    %2897 = vmatpush1.bf16.msra.mxu0 0
    %2898 = vmatprep.subr.bf16.mxu0 0
    %2899 = vmatpush1.bf16.msra.mxu0 0
    %2900 = vmatprep.subr.bf16.mxu0 0
    %2901 = vmatpush1.bf16.msra.mxu0 0
    %2902 = vmatprep.subr.bf16.mxu0 0
    %2903 = vmatpush1.bf16.msra.mxu0 0
    %2904 = vmatprep.subr.bf16.mxu0 0
    %2905 = vmatpush1.bf16.msra.mxu0 0
    %2906 = vmatprep.subr.bf16.mxu0 0
    %2907 = vmatpush1.bf16.msra.mxu0 0
    %2908 = vmatprep.subr.bf16.mxu0 %v2886
    %2909 = vmatpush1.bf16.msra.mxu0 %v2883
    %2910 = vmatprep.subr.bf16.mxu0 0
    %2911 = vmatpush2.bf16.msra.mxu0 0
    %2912 = vmatprep.subr.bf16.mxu0 0
    %2913 = vmatpush2.bf16.msra.mxu0 0
    %2914 = vmatprep.subr.bf16.mxu0 0
    %2915 = vmatpush2.bf16.msra.mxu0 0
    %2916 = vmatprep.subr.bf16.mxu0 0
    %2917 = vmatpush2.bf16.msra.mxu0 0
    %2918 = vmatprep.subr.bf16.mxu0 0
    %2919 = vmatpush2.bf16.msra.mxu0 0
    %2920 = vmatprep.subr.bf16.mxu0 0
    %2921 = vmatpush2.bf16.msra.mxu0 0
    %2922 = vmatprep.subr.bf16.mxu0 0
    %2923 = vmatpush2.bf16.msra.mxu0 0
    %2924 = vmatprep.subr.bf16.mxu0 0
    %2925 = vmatpush2.bf16.msra.mxu0 0
    %2926 = vmatprep.mubr.bf16.mxu0 0
    %2927 = vmatmul.mubr.bf16.gmra.mxu0 %v2880
    %v2928 = vpop.f32.mrf.mxu0
    %v2929 = vadd.f32 0.0, %v2928
    %v2930 = vpop.f32.mrf.mxu0
    %v2931 = vadd.f32 0.0, %v2930
    %v2932 = vpop.f32.mrf.mxu0
    %v2933 = vpop.f32.mrf.mxu0
    %2934 = vdwg.mxu0
    %2935 = vmatprep.subr.bf16.mxu0 0
    %2936 = vmatpush1.bf16.msra.mxu0 0
    %2937 = vmatprep.subr.bf16.mxu0 0
    %2938 = vmatpush1.bf16.msra.mxu0 0
    %2939 = vmatprep.subr.bf16.mxu0 0
    %2940 = vmatpush1.bf16.msra.mxu0 0
    %2941 = vmatprep.subr.bf16.mxu0 0
    %2942 = vmatpush1.bf16.msra.mxu0 0
    %2943 = vmatprep.subr.bf16.mxu0 0
    %2944 = vmatpush1.bf16.msra.mxu0 0
    %2945 = vmatprep.subr.bf16.mxu0 0
    %2946 = vmatpush1.bf16.msra.mxu0 0
    %2947 = vmatprep.subr.bf16.mxu0 0
    %2948 = vmatpush1.bf16.msra.mxu0 0
    %2949 = vmatprep.subr.bf16.mxu0 %v2892
    %2950 = vmatpush1.bf16.msra.mxu0 %v2889
    %2951 = vmatprep.subr.bf16.mxu0 0
    %2952 = vmatpush2.bf16.msra.mxu0 0
    %2953 = vmatprep.subr.bf16.mxu0 0
    %2954 = vmatpush2.bf16.msra.mxu0 0
    %2955 = vmatprep.subr.bf16.mxu0 0
    %2956 = vmatpush2.bf16.msra.mxu0 0
    %2957 = vmatprep.subr.bf16.mxu0 0
    %2958 = vmatpush2.bf16.msra.mxu0 0
    %2959 = vmatprep.subr.bf16.mxu0 0
    %2960 = vmatpush2.bf16.msra.mxu0 0
    %2961 = vmatprep.subr.bf16.mxu0 0
    %2962 = vmatpush2.bf16.msra.mxu0 0
    %2963 = vmatprep.subr.bf16.mxu0 0
    %2964 = vmatpush2.bf16.msra.mxu0 0
    %2965 = vmatprep.subr.bf16.mxu0 0
    %2966 = vmatpush2.bf16.msra.mxu0 0
    %2967 = vmatprep.mubr.bf16.mxu0 0
    %2968 = vmatmul.mubr.bf16.gmra.mxu0 %v2880
    %v2969 = vpop.f32.mrf.mxu0
    %v2970 = vadd.f32 0.0, %v2969
    %v2971 = vpop.f32.mrf.mxu0
    %v2972 = vadd.f32 0.0, %v2971
    %v2973 = vpop.f32.mrf.mxu0
    %v2974 = vpop.f32.mrf.mxu0
    %2975 = vdwg.mxu0
    %v2976 = vadd.f32 %v2869, %v2929
    %v2977 = vadd.f32 %v2870, %v2931
    %v2978 = vadd.f32 %v2871, %v2970
    %v2979 = vadd.f32 %v2872, %v2972
    %2980 = vrot.lane.b32.xlu0 %v2384, 127
    %v2981 = vpop.permute.xlu0 %2980
    %2982 = vrot.lane.b32.xlu0 %v2385, 127
    %v2983 = vpop.permute.xlu0 %2982
    %2984 = vrot.lane.b32.xlu0 %v2386, 127
    %v2985 = vpop.permute.xlu0 %2984
    %2986 = vrot.lane.b32.xlu0 %v2387, 127
    %v2987 = vpop.permute.xlu0 %2986
    %v2988 = vsel %vm1754, %v2985, %v2987
    %v2989 = vsel %vm1754, %v2983, %v2985
    %v2990 = vsel %vm1754, %v2981, %v2983
    %v2991 = vsel %vm1754, %v2987, %v2981
    %v2992 = vmul.f32 %v2990, %v1763
    %v2993 = vmul.f32 %v2989, %v1767
    %v2994 = vmul.f32 %v2988, %v1771
    %v2995 = vmul.f32 %v2991, %v1775
    %v2996 = vpack.c.bf16 %v2992, %v2992
    %v2997 = vpack.c.bf16 %v2993, %v2993
    %v2998 = vpack.c.bf16 %v2994, %v2994
    %v2999 = vpack.c.bf16 %v2995, %v2995
    %3000 = vrot.lane.b32.xlu0 %v2430, 108
    %v3001 = vpop.permute.xlu0 %3000
    %v3003 = vsel %vm1153, %v3001, 0
    %v3006 = vsel %vm1157, %v2996, 0
    %v3009 = vsel %vm1157, %v2997, 0
    %v3012 = vsel %vm1157, %v2998, 0
    %v3015 = vsel %vm1157, %v2999, 0
    %3017 = vmatprep.subr.bf16.mxu0 0
    %3018 = vmatpush1.bf16.msra.mxu0 0
    %3019 = vmatprep.subr.bf16.mxu0 0
    %3020 = vmatpush1.bf16.msra.mxu0 0
    %3021 = vmatprep.subr.bf16.mxu0 0
    %3022 = vmatpush1.bf16.msra.mxu0 0
    %3023 = vmatprep.subr.bf16.mxu0 0
    %3024 = vmatpush1.bf16.msra.mxu0 0
    %3025 = vmatprep.subr.bf16.mxu0 0
    %3026 = vmatpush1.bf16.msra.mxu0 0
    %3027 = vmatprep.subr.bf16.mxu0 0
    %3028 = vmatpush1.bf16.msra.mxu0 0
    %3029 = vmatprep.subr.bf16.mxu0 0
    %3030 = vmatpush1.bf16.msra.mxu0 0
    %3031 = vmatprep.subr.bf16.mxu0 %v3009
    %3032 = vmatpush1.bf16.msra.mxu0 %v3006
    %3033 = vmatprep.subr.bf16.mxu0 0
    %3034 = vmatpush2.bf16.msra.mxu0 0
    %3035 = vmatprep.subr.bf16.mxu0 0
    %3036 = vmatpush2.bf16.msra.mxu0 0
    %3037 = vmatprep.subr.bf16.mxu0 0
    %3038 = vmatpush2.bf16.msra.mxu0 0
    %3039 = vmatprep.subr.bf16.mxu0 0
    %3040 = vmatpush2.bf16.msra.mxu0 0
    %3041 = vmatprep.subr.bf16.mxu0 0
    %3042 = vmatpush2.bf16.msra.mxu0 0
    %3043 = vmatprep.subr.bf16.mxu0 0
    %3044 = vmatpush2.bf16.msra.mxu0 0
    %3045 = vmatprep.subr.bf16.mxu0 0
    %3046 = vmatpush2.bf16.msra.mxu0 0
    %3047 = vmatprep.subr.bf16.mxu0 0
    %3048 = vmatpush2.bf16.msra.mxu0 0
    %3049 = vmatprep.mubr.bf16.mxu0 0
    %3050 = vmatmul.mubr.bf16.gmra.mxu0 %v3003
    %v3051 = vpop.f32.mrf.mxu0
    %v3052 = vadd.f32 0.0, %v3051
    %v3053 = vpop.f32.mrf.mxu0
    %v3054 = vadd.f32 0.0, %v3053
    %v3055 = vpop.f32.mrf.mxu0
    %v3056 = vpop.f32.mrf.mxu0
    %3057 = vdwg.mxu0
    %3058 = vmatprep.subr.bf16.mxu0 0
    %3059 = vmatpush1.bf16.msra.mxu0 0
    %3060 = vmatprep.subr.bf16.mxu0 0
    %3061 = vmatpush1.bf16.msra.mxu0 0
    %3062 = vmatprep.subr.bf16.mxu0 0
    %3063 = vmatpush1.bf16.msra.mxu0 0
    %3064 = vmatprep.subr.bf16.mxu0 0
    %3065 = vmatpush1.bf16.msra.mxu0 0
    %3066 = vmatprep.subr.bf16.mxu0 0
    %3067 = vmatpush1.bf16.msra.mxu0 0
    %3068 = vmatprep.subr.bf16.mxu0 0
    %3069 = vmatpush1.bf16.msra.mxu0 0
    %3070 = vmatprep.subr.bf16.mxu0 0
    %3071 = vmatpush1.bf16.msra.mxu0 0
    %3072 = vmatprep.subr.bf16.mxu0 %v3015
    %3073 = vmatpush1.bf16.msra.mxu0 %v3012
    %3074 = vmatprep.subr.bf16.mxu0 0
    %3075 = vmatpush2.bf16.msra.mxu0 0
    %3076 = vmatprep.subr.bf16.mxu0 0
    %3077 = vmatpush2.bf16.msra.mxu0 0
    %3078 = vmatprep.subr.bf16.mxu0 0
    %3079 = vmatpush2.bf16.msra.mxu0 0
    %3080 = vmatprep.subr.bf16.mxu0 0
    %3081 = vmatpush2.bf16.msra.mxu0 0
    %3082 = vmatprep.subr.bf16.mxu0 0
    %3083 = vmatpush2.bf16.msra.mxu0 0
    %3084 = vmatprep.subr.bf16.mxu0 0
    %3085 = vmatpush2.bf16.msra.mxu0 0
    %3086 = vmatprep.subr.bf16.mxu0 0
    %3087 = vmatpush2.bf16.msra.mxu0 0
    %3088 = vmatprep.subr.bf16.mxu0 0
    %3089 = vmatpush2.bf16.msra.mxu0 0
    %3090 = vmatprep.mubr.bf16.mxu0 0
    %3091 = vmatmul.mubr.bf16.gmra.mxu0 %v3003
    %v3092 = vpop.f32.mrf.mxu0
    %v3093 = vadd.f32 0.0, %v3092
    %v3094 = vpop.f32.mrf.mxu0
    %v3095 = vadd.f32 0.0, %v3094
    %v3096 = vpop.f32.mrf.mxu0
    %v3097 = vpop.f32.mrf.mxu0
    %3098 = vdwg.mxu0
    %v3099 = vadd.f32 %v2976, %v3052
    %v3100 = vadd.f32 %v2977, %v3054
    %v3101 = vadd.f32 %v2978, %v3093
    %v3102 = vadd.f32 %v2979, %v3095
    %3103 = vrot.lane.b32.xlu0 %v2384, 113
    %v3104 = vpop.permute.xlu0 %3103
    %3105 = vrot.lane.b32.xlu0 %v2385, 113
    %v3106 = vpop.permute.xlu0 %3105
    %3107 = vrot.lane.b32.xlu0 %v2386, 113
    %v3108 = vpop.permute.xlu0 %3107
    %3109 = vrot.lane.b32.xlu0 %v2387, 113
    %v3110 = vpop.permute.xlu0 %3109
    %v3111 = vsel %vm1899, %v3108, %v3110
    %v3112 = vsel %vm1899, %v3106, %v3108
    %v3113 = vsel %vm1899, %v3104, %v3106
    %v3114 = vsel %vm1899, %v3110, %v3104
    %v3115 = vmul.f32 %v3113, %v1908
    %v3116 = vmul.f32 %v3112, %v1912
    %v3117 = vmul.f32 %v3111, %v1916
    %v3118 = vmul.f32 %v3114, %v1920
    %v3119 = vpack.c.bf16 %v3115, %v3115
    %v3120 = vpack.c.bf16 %v3116, %v3116
    %v3121 = vpack.c.bf16 %v3117, %v3117
    %v3122 = vpack.c.bf16 %v3118, %v3118
    %3123 = vrot.lane.b32.xlu0 %v2430, 104
    %v3124 = vpop.permute.xlu0 %3123
    %v3126 = vsel %vm1153, %v3124, 0
    %v3129 = vsel %vm1157, %v3119, 0
    %v3132 = vsel %vm1157, %v3120, 0
    %v3135 = vsel %vm1157, %v3121, 0
    %v3138 = vsel %vm1157, %v3122, 0
    %3140 = vmatprep.subr.bf16.mxu0 0
    %3141 = vmatpush1.bf16.msra.mxu0 0
    %3142 = vmatprep.subr.bf16.mxu0 0
    %3143 = vmatpush1.bf16.msra.mxu0 0
    %3144 = vmatprep.subr.bf16.mxu0 0
    %3145 = vmatpush1.bf16.msra.mxu0 0
    %3146 = vmatprep.subr.bf16.mxu0 0
    %3147 = vmatpush1.bf16.msra.mxu0 0
    %3148 = vmatprep.subr.bf16.mxu0 0
    %3149 = vmatpush1.bf16.msra.mxu0 0
    %3150 = vmatprep.subr.bf16.mxu0 0
    %3151 = vmatpush1.bf16.msra.mxu0 0
    %3152 = vmatprep.subr.bf16.mxu0 0
    %3153 = vmatpush1.bf16.msra.mxu0 0
    %3154 = vmatprep.subr.bf16.mxu0 %v3132
    %3155 = vmatpush1.bf16.msra.mxu0 %v3129
    %3156 = vmatprep.subr.bf16.mxu0 0
    %3157 = vmatpush2.bf16.msra.mxu0 0
    %3158 = vmatprep.subr.bf16.mxu0 0
    %3159 = vmatpush2.bf16.msra.mxu0 0
    %3160 = vmatprep.subr.bf16.mxu0 0
    %3161 = vmatpush2.bf16.msra.mxu0 0
    %3162 = vmatprep.subr.bf16.mxu0 0
    %3163 = vmatpush2.bf16.msra.mxu0 0
    %3164 = vmatprep.subr.bf16.mxu0 0
    %3165 = vmatpush2.bf16.msra.mxu0 0
    %3166 = vmatprep.subr.bf16.mxu0 0
    %3167 = vmatpush2.bf16.msra.mxu0 0
    %3168 = vmatprep.subr.bf16.mxu0 0
    %3169 = vmatpush2.bf16.msra.mxu0 0
    %3170 = vmatprep.subr.bf16.mxu0 0
    %3171 = vmatpush2.bf16.msra.mxu0 0
    %3172 = vmatprep.mubr.bf16.mxu0 0
    %3173 = vmatmul.mubr.bf16.gmra.mxu0 %v3126
    %v3174 = vpop.f32.mrf.mxu0
    %v3175 = vadd.f32 0.0, %v3174
    %v3176 = vpop.f32.mrf.mxu0
    %v3177 = vadd.f32 0.0, %v3176
    %v3178 = vpop.f32.mrf.mxu0
    %v3179 = vpop.f32.mrf.mxu0
    %3180 = vdwg.mxu0
    %3181 = vmatprep.subr.bf16.mxu0 0
    %3182 = vmatpush1.bf16.msra.mxu0 0
    %3183 = vmatprep.subr.bf16.mxu0 0
    %3184 = vmatpush1.bf16.msra.mxu0 0
    %3185 = vmatprep.subr.bf16.mxu0 0
    %3186 = vmatpush1.bf16.msra.mxu0 0
    %3187 = vmatprep.subr.bf16.mxu0 0
    %3188 = vmatpush1.bf16.msra.mxu0 0
    %3189 = vmatprep.subr.bf16.mxu0 0
    %3190 = vmatpush1.bf16.msra.mxu0 0
    %3191 = vmatprep.subr.bf16.mxu0 0
    %3192 = vmatpush1.bf16.msra.mxu0 0
    %3193 = vmatprep.subr.bf16.mxu0 0
    %3194 = vmatpush1.bf16.msra.mxu0 0
    %3195 = vmatprep.subr.bf16.mxu0 %v3138
    %3196 = vmatpush1.bf16.msra.mxu0 %v3135
    %3197 = vmatprep.subr.bf16.mxu0 0
    %3198 = vmatpush2.bf16.msra.mxu0 0
    %3199 = vmatprep.subr.bf16.mxu0 0
    %3200 = vmatpush2.bf16.msra.mxu0 0
    %3201 = vmatprep.subr.bf16.mxu0 0
    %3202 = vmatpush2.bf16.msra.mxu0 0
    %3203 = vmatprep.subr.bf16.mxu0 0
    %3204 = vmatpush2.bf16.msra.mxu0 0
    %3205 = vmatprep.subr.bf16.mxu0 0
    %3206 = vmatpush2.bf16.msra.mxu0 0
    %3207 = vmatprep.subr.bf16.mxu0 0
    %3208 = vmatpush2.bf16.msra.mxu0 0
    %3209 = vmatprep.subr.bf16.mxu0 0
    %3210 = vmatpush2.bf16.msra.mxu0 0
    %3211 = vmatprep.subr.bf16.mxu0 0
    %3212 = vmatpush2.bf16.msra.mxu0 0
    %3213 = vmatprep.mubr.bf16.mxu0 0
    %3214 = vmatmul.mubr.bf16.gmra.mxu0 %v3126
    %v3215 = vpop.f32.mrf.mxu0
    %v3216 = vadd.f32 0.0, %v3215
    %v3217 = vpop.f32.mrf.mxu0
    %v3218 = vadd.f32 0.0, %v3217
    %v3219 = vpop.f32.mrf.mxu0
    %v3220 = vpop.f32.mrf.mxu0
    %3221 = vdwg.mxu0
    %v3222 = vadd.f32 %v3099, %v3175
    %v3223 = vadd.f32 %v3100, %v3177
    %v3224 = vadd.f32 %v3101, %v3216
    %v3225 = vadd.f32 %v3102, %v3218
    %3226 = vrot.lane.b32.xlu0 %v2384, 112
    %v3227 = vpop.permute.xlu0 %3226
    %3228 = vrot.lane.b32.xlu0 %v2385, 112
    %v3229 = vpop.permute.xlu0 %3228
    %3230 = vrot.lane.b32.xlu0 %v2386, 112
    %v3231 = vpop.permute.xlu0 %3230
    %3232 = vrot.lane.b32.xlu0 %v2387, 112
    %v3233 = vpop.permute.xlu0 %3232
    %v3234 = vsel %vm2044, %v3231, %v3233
    %v3235 = vsel %vm2044, %v3229, %v3231
    %v3236 = vsel %vm2044, %v3227, %v3229
    %v3237 = vsel %vm2044, %v3233, %v3227
    %v3238 = vmul.f32 %v3236, %v2053
    %v3239 = vmul.f32 %v3235, %v2057
    %v3240 = vmul.f32 %v3234, %v2061
    %v3241 = vmul.f32 %v3237, %v2065
    %v3242 = vpack.c.bf16 %v3238, %v3238
    %v3243 = vpack.c.bf16 %v3239, %v3239
    %v3244 = vpack.c.bf16 %v3240, %v3240
    %v3245 = vpack.c.bf16 %v3241, %v3241
    %3246 = vrot.lane.b32.xlu0 %v2430, 100
    %v3247 = vpop.permute.xlu0 %3246
    %v3249 = vsel %vm1153, %v3247, 0
    %v3252 = vsel %vm1157, %v3242, 0
    %v3255 = vsel %vm1157, %v3243, 0
    %v3258 = vsel %vm1157, %v3244, 0
    %v3261 = vsel %vm1157, %v3245, 0
    %3263 = vmatprep.subr.bf16.mxu0 0
    %3264 = vmatpush1.bf16.msra.mxu0 0
    %3265 = vmatprep.subr.bf16.mxu0 0
    %3266 = vmatpush1.bf16.msra.mxu0 0
    %3267 = vmatprep.subr.bf16.mxu0 0
    %3268 = vmatpush1.bf16.msra.mxu0 0
    %3269 = vmatprep.subr.bf16.mxu0 0
    %3270 = vmatpush1.bf16.msra.mxu0 0
    %3271 = vmatprep.subr.bf16.mxu0 0
    %3272 = vmatpush1.bf16.msra.mxu0 0
    %3273 = vmatprep.subr.bf16.mxu0 0
    %3274 = vmatpush1.bf16.msra.mxu0 0
    %3275 = vmatprep.subr.bf16.mxu0 0
    %3276 = vmatpush1.bf16.msra.mxu0 0
    %3277 = vmatprep.subr.bf16.mxu0 %v3255
    %3278 = vmatpush1.bf16.msra.mxu0 %v3252
    %3279 = vmatprep.subr.bf16.mxu0 0
    %3280 = vmatpush2.bf16.msra.mxu0 0
    %3281 = vmatprep.subr.bf16.mxu0 0
    %3282 = vmatpush2.bf16.msra.mxu0 0
    %3283 = vmatprep.subr.bf16.mxu0 0
    %3284 = vmatpush2.bf16.msra.mxu0 0
    %3285 = vmatprep.subr.bf16.mxu0 0
    %3286 = vmatpush2.bf16.msra.mxu0 0
    %3287 = vmatprep.subr.bf16.mxu0 0
    %3288 = vmatpush2.bf16.msra.mxu0 0
    %3289 = vmatprep.subr.bf16.mxu0 0
    %3290 = vmatpush2.bf16.msra.mxu0 0
    %3291 = vmatprep.subr.bf16.mxu0 0
    %3292 = vmatpush2.bf16.msra.mxu0 0
    %3293 = vmatprep.subr.bf16.mxu0 0
    %3294 = vmatpush2.bf16.msra.mxu0 0
    %3295 = vmatprep.mubr.bf16.mxu0 0
    %3296 = vmatmul.mubr.bf16.gmra.mxu0 %v3249
    %v3297 = vpop.f32.mrf.mxu0
    %v3298 = vadd.f32 0.0, %v3297
    %v3299 = vpop.f32.mrf.mxu0
    %v3300 = vadd.f32 0.0, %v3299
    %v3301 = vpop.f32.mrf.mxu0
    %v3302 = vpop.f32.mrf.mxu0
    %3303 = vdwg.mxu0
    %3304 = vmatprep.subr.bf16.mxu0 0
    %3305 = vmatpush1.bf16.msra.mxu0 0
    %3306 = vmatprep.subr.bf16.mxu0 0
    %3307 = vmatpush1.bf16.msra.mxu0 0
    %3308 = vmatprep.subr.bf16.mxu0 0
    %3309 = vmatpush1.bf16.msra.mxu0 0
    %3310 = vmatprep.subr.bf16.mxu0 0
    %3311 = vmatpush1.bf16.msra.mxu0 0
    %3312 = vmatprep.subr.bf16.mxu0 0
    %3313 = vmatpush1.bf16.msra.mxu0 0
    %3314 = vmatprep.subr.bf16.mxu0 0
    %3315 = vmatpush1.bf16.msra.mxu0 0
    %3316 = vmatprep.subr.bf16.mxu0 0
    %3317 = vmatpush1.bf16.msra.mxu0 0
    %3318 = vmatprep.subr.bf16.mxu0 %v3261
    %3319 = vmatpush1.bf16.msra.mxu0 %v3258
    %3320 = vmatprep.subr.bf16.mxu0 0
    %3321 = vmatpush2.bf16.msra.mxu0 0
    %3322 = vmatprep.subr.bf16.mxu0 0
    %3323 = vmatpush2.bf16.msra.mxu0 0
    %3324 = vmatprep.subr.bf16.mxu0 0
    %3325 = vmatpush2.bf16.msra.mxu0 0
    %3326 = vmatprep.subr.bf16.mxu0 0
    %3327 = vmatpush2.bf16.msra.mxu0 0
    %3328 = vmatprep.subr.bf16.mxu0 0
    %3329 = vmatpush2.bf16.msra.mxu0 0
    %3330 = vmatprep.subr.bf16.mxu0 0
    %3331 = vmatpush2.bf16.msra.mxu0 0
    %3332 = vmatprep.subr.bf16.mxu0 0
    %3333 = vmatpush2.bf16.msra.mxu0 0
    %3334 = vmatprep.subr.bf16.mxu0 0
    %3335 = vmatpush2.bf16.msra.mxu0 0
    %3336 = vmatprep.mubr.bf16.mxu0 0
    %3337 = vmatmul.mubr.bf16.gmra.mxu0 %v3249
    %v3338 = vpop.f32.mrf.mxu0
    %v3339 = vadd.f32 0.0, %v3338
    %v3340 = vpop.f32.mrf.mxu0
    %v3341 = vadd.f32 0.0, %v3340
    %v3342 = vpop.f32.mrf.mxu0
    %v3343 = vpop.f32.mrf.mxu0
    %3344 = vdwg.mxu0
    %v3345 = vadd.f32 %v3222, %v3298
    %v3346 = vadd.f32 %v3223, %v3300
    %v3347 = vadd.f32 %v3224, %v3339
    %v3348 = vadd.f32 %v3225, %v3341
    %3349 = vrot.lane.b32.xlu0 %v2384, 111
    %v3350 = vpop.permute.xlu0 %3349
    %3351 = vrot.lane.b32.xlu0 %v2385, 111
    %v3352 = vpop.permute.xlu0 %3351
    %3353 = vrot.lane.b32.xlu0 %v2386, 111
    %v3354 = vpop.permute.xlu0 %3353
    %3355 = vrot.lane.b32.xlu0 %v2387, 111
    %v3356 = vpop.permute.xlu0 %3355
    %v3357 = vsel %vm2189, %v3354, %v3356
    %v3358 = vsel %vm2189, %v3352, %v3354
    %v3359 = vsel %vm2189, %v3350, %v3352
    %v3360 = vsel %vm2189, %v3356, %v3350
    %v3361 = vmul.f32 %v3359, %v2198
    %v3362 = vmul.f32 %v3358, %v2202
    %v3363 = vmul.f32 %v3357, %v2206
    %v3364 = vmul.f32 %v3360, %v2210
    %v3365 = vpack.c.bf16 %v3361, %v3361
    %v3366 = vpack.c.bf16 %v3362, %v3362
    %v3367 = vpack.c.bf16 %v3363, %v3363
    %v3368 = vpack.c.bf16 %v3364, %v3364
    %3369 = vrot.lane.b32.xlu0 %v2430, 96
    %v3370 = vpop.permute.xlu0 %3369
    %v3372 = vsel %vm1153, %v3370, 0
    %v3375 = vsel %vm1157, %v3365, 0
    %v3378 = vsel %vm1157, %v3366, 0
    %v3381 = vsel %vm1157, %v3367, 0
    %v3384 = vsel %vm1157, %v3368, 0
    %3386 = vmatprep.subr.bf16.mxu0 0
    %3387 = vmatpush1.bf16.msra.mxu0 0
    %3388 = vmatprep.subr.bf16.mxu0 0
    %3389 = vmatpush1.bf16.msra.mxu0 0
    %3390 = vmatprep.subr.bf16.mxu0 0
    %3391 = vmatpush1.bf16.msra.mxu0 0
    %3392 = vmatprep.subr.bf16.mxu0 0
    %3393 = vmatpush1.bf16.msra.mxu0 0
    %3394 = vmatprep.subr.bf16.mxu0 0
    %3395 = vmatpush1.bf16.msra.mxu0 0
    %3396 = vmatprep.subr.bf16.mxu0 0
    %3397 = vmatpush1.bf16.msra.mxu0 0
    %3398 = vmatprep.subr.bf16.mxu0 0
    %3399 = vmatpush1.bf16.msra.mxu0 0
    %3400 = vmatprep.subr.bf16.mxu0 %v3378
    %3401 = vmatpush1.bf16.msra.mxu0 %v3375
    %3402 = vmatprep.subr.bf16.mxu0 0
    %3403 = vmatpush2.bf16.msra.mxu0 0
    %3404 = vmatprep.subr.bf16.mxu0 0
    %3405 = vmatpush2.bf16.msra.mxu0 0
    %3406 = vmatprep.subr.bf16.mxu0 0
    %3407 = vmatpush2.bf16.msra.mxu0 0
    %3408 = vmatprep.subr.bf16.mxu0 0
    %3409 = vmatpush2.bf16.msra.mxu0 0
    %3410 = vmatprep.subr.bf16.mxu0 0
    %3411 = vmatpush2.bf16.msra.mxu0 0
    %3412 = vmatprep.subr.bf16.mxu0 0
    %3413 = vmatpush2.bf16.msra.mxu0 0
    %3414 = vmatprep.subr.bf16.mxu0 0
    %3415 = vmatpush2.bf16.msra.mxu0 0
    %3416 = vmatprep.subr.bf16.mxu0 0
    %3417 = vmatpush2.bf16.msra.mxu0 0
    %3418 = vmatprep.mubr.bf16.mxu0 0
    %3419 = vmatmul.mubr.bf16.gmra.mxu0 %v3372
    %v3420 = vpop.f32.mrf.mxu0
    %v3421 = vadd.f32 0.0, %v3420
    %v3422 = vpop.f32.mrf.mxu0
    %v3423 = vadd.f32 0.0, %v3422
    %v3424 = vpop.f32.mrf.mxu0
    %v3425 = vpop.f32.mrf.mxu0
    %3426 = vdwg.mxu0
    %3427 = vmatprep.subr.bf16.mxu0 0
    %3428 = vmatpush1.bf16.msra.mxu0 0
    %3429 = vmatprep.subr.bf16.mxu0 0
    %3430 = vmatpush1.bf16.msra.mxu0 0
    %3431 = vmatprep.subr.bf16.mxu0 0
    %3432 = vmatpush1.bf16.msra.mxu0 0
    %3433 = vmatprep.subr.bf16.mxu0 0
    %3434 = vmatpush1.bf16.msra.mxu0 0
    %3435 = vmatprep.subr.bf16.mxu0 0
    %3436 = vmatpush1.bf16.msra.mxu0 0
    %3437 = vmatprep.subr.bf16.mxu0 0
    %3438 = vmatpush1.bf16.msra.mxu0 0
    %3439 = vmatprep.subr.bf16.mxu0 0
    %3440 = vmatpush1.bf16.msra.mxu0 0
    %3441 = vmatprep.subr.bf16.mxu0 %v3384
    %3442 = vmatpush1.bf16.msra.mxu0 %v3381
    %3443 = vmatprep.subr.bf16.mxu0 0
    %3444 = vmatpush2.bf16.msra.mxu0 0
    %3445 = vmatprep.subr.bf16.mxu0 0
    %3446 = vmatpush2.bf16.msra.mxu0 0
    %3447 = vmatprep.subr.bf16.mxu0 0
    %3448 = vmatpush2.bf16.msra.mxu0 0
    %3449 = vmatprep.subr.bf16.mxu0 0
    %3450 = vmatpush2.bf16.msra.mxu0 0
    %3451 = vmatprep.subr.bf16.mxu0 0
    %3452 = vmatpush2.bf16.msra.mxu0 0
    %3453 = vmatprep.subr.bf16.mxu0 0
    %3454 = vmatpush2.bf16.msra.mxu0 0
    %3455 = vmatprep.subr.bf16.mxu0 0
    %3456 = vmatpush2.bf16.msra.mxu0 0
    %3457 = vmatprep.subr.bf16.mxu0 0
    %3458 = vmatpush2.bf16.msra.mxu0 0
    %3459 = vmatprep.mubr.bf16.mxu0 0
    %3460 = vmatmul.mubr.bf16.gmra.mxu0 %v3372
    %v3461 = vpop.f32.mrf.mxu0
    %v3462 = vadd.f32 0.0, %v3461
    %v3463 = vpop.f32.mrf.mxu0
    %v3464 = vadd.f32 0.0, %v3463
    %v3465 = vpop.f32.mrf.mxu0
    %v3466 = vpop.f32.mrf.mxu0
    %3467 = vdwg.mxu0
    %v3468 = vadd.f32 %v3345, %v3421
    %v3469 = vadd.f32 %v3346, %v3423
    %v3470 = vadd.f32 %v3347, %v3462
    %v3471 = vadd.f32 %v3348, %v3464
    %3473 = vset.pattern.permute.xlu0 0
    %3474 = vperm.xlu0 %3473, %v960
    %v3475 = vpop.permute.xlu0 %3474
    %v3477 = vadd.f32 %v3468, %v3475
    %v3478 = vadd.f32 %v3469, %v3475
    %v3479 = vadd.f32 %v3470, %v3475
    %v3480 = vadd.f32 %v3471, %v3475
    %vm3481 = vcmask 1045504
    %v3482 = vsel %vm3481, %v3477, 0.0
    %v3483 = vsel %vm3481, %v3478, 0.0
    %v3484 = vadd.f32 %v3482, %v3483
    %v3485 = vsel %vm3481, %v3479, 0.0
    %v3486 = vadd.f32 %v3484, %v3485
    %v3487 = vsel %vm3481, %v3480, 0.0
    %v3488 = vadd.f32 %v3486, %v3487
    %3489 = vadd.xlane.f32.xlu0 %v3488
    %v3490 = vpop.xlane.xlu0 %3489
    %v3491 = vmul.f32 %v3490, 0.001953125
    %v3492 = vsub.f32 %v3477, %v3491
    %v3493 = vsub.f32 %v3478, %v3491
    %v3494 = vsub.f32 %v3479, %v3491
    %v3495 = vsub.f32 %v3480, %v3491
    %v3496 = vmul.f32 %v3492, %v3492
    %v3497 = vmul.f32 %v3493, %v3493
    %v3498 = vmul.f32 %v3494, %v3494
    %v3499 = vmul.f32 %v3495, %v3495
    %v3500 = vsel %vm3481, %v3496, 0.0
    %v3501 = vsel %vm3481, %v3497, 0.0
    %v3502 = vadd.f32 %v3500, %v3501
    %v3503 = vsel %vm3481, %v3498, 0.0
    %v3504 = vadd.f32 %v3502, %v3503
    %v3505 = vsel %vm3481, %v3499, 0.0
    %v3506 = vadd.f32 %v3504, %v3505
    %3507 = vadd.xlane.f32.xlu0 %v3506
    %v3508 = vpop.xlane.xlu0 %3507
    %v3509 = vmul.f32 %v3508, 0.001953125
    %v3510 = vadd.f32 %v3509, 1e-05
    %v3511 = vrsqrt.pop %v3510
    %v3512 = vmul.f32 %v3492, %v3511
    %v3513 = vmul.f32 %v3493, %v3511
    %v3514 = vmul.f32 %v3494, %v3511
    %v3515 = vmul.f32 %v3495, %v3511
    %3516 = vset.pattern.permute.xlu0 1
    %3517 = vperm.xlu0 %3516, %v960
    %v3518 = vpop.permute.xlu0 %3517
    %v3520 = vmul.f32 %v3512, %v3518
    %v3521 = vmul.f32 %v3513, %v3518
    %v3522 = vmul.f32 %v3514, %v3518
    %v3523 = vmul.f32 %v3515, %v3518
    %3524 = vset.pattern.permute.xlu0 2
    %3525 = vperm.xlu0 %3524, %v960
    %v3526 = vpop.permute.xlu0 %3525
    %v3528 = vadd.f32 %v3520, %v3526
    %v3529 = vadd.f32 %v3521, %v3526
    %v3530 = vadd.f32 %v3522, %v3526
    %v3531 = vadd.f32 %v3523, %v3526
    %v3532 = vmax.f32 %v3528, 0.0
    %v3533 = vmax.f32 %v3529, 0.0
    %v3534 = vmax.f32 %v3530, 0.0
    %v3535 = vmax.f32 %v3531, 0.0
    %3536 = vst [vmem:[#allocation3] sm:$0x3f] %v3532
    %3537 = vst [vmem:[#allocation3 + $0x8] sm:$0x3f] %v3533
    %3538 = vst [vmem:[#allocation3 + $0x10] sm:$0x3f] %v3534
    %3539 = vst [vmem:[#allocation3 + $0x18] sm:$0x3f] %v3535
    // Predicated region
    $region46: #{tpu_custom_call.1} parent=1 // pred_check
      _
    $region47: #{tpu_custom_call.1} parent=1 // pred_check_branch
      %3541 = sbr.rel (0) target = $region49
    $region48: #{tpu_custom_call.1} parent=1 // pred_region
      %s3543 = ssub.s32 512, 512
      %3544 = vsyncadd [#allocation4], %s3543
      %s3546 = sshll.u32 [#allocation3], 4
      %s3547 = int_to_ptr.vmem [resolvable:$true] %s3546
      %3549 = dma.vmem_to_hbm [thread:$0]  %s3547, 512, %s11, [#allocation4]
    $region49: #{tpu_custom_call.1} parent=1 // pred_fallthru
      _
    // Predicated region
    $region50: #{tpu_custom_call.1} parent=1 // pred_check
      _
    $region51: #{tpu_custom_call.1} parent=1 // pred_check_branch
      %3551 = sbr.rel (0) target = $region53
    $region52: #{tpu_custom_call.1} parent=1 // pred_region
      %3552 = dma.done [#allocation4], 512
    $region53: #{tpu_custom_call.1} parent=1 // pred_fallthru
      _
    %3553 = vsyncpa [#allocation4], 1

</llo_original>
